<compile_context>
chip_gen: v5e
topology: v5e:2x2
jax: 0.10.0
libtpu: 0.0.40
codegen_flags: <defaults>
</compile_context>

<pallas_src>
import functools
import math

import jax
import jax.numpy as jnp
from jax.experimental import pallas as pl
from jax.experimental.pallas import tpu as pltpu

_LANE = 128  # lane width: slab lane padding & lane-dense classifier output

CFG = dict(
    vocab=50,
    max_pos=32,
    hidden=32,      # opt['emb_dim']
    heads=2,
    ffn=64,
    layers=2,
    num_labels=4,   # len(label2id)
    seq=8,
    batch=2,
)


# ----------------------------- shared helpers -------------------------------

def _layernorm(x, g, b, eps=1e-12):
    mu = jnp.mean(x, axis=-1, keepdims=True)
    var = jnp.mean((x - mu) ** 2, axis=-1, keepdims=True)
    return (x - mu) * jax.lax.rsqrt(var + eps) * g + b


def _gelu(x):
    # TODO(synk): HF BERT/ERNIE default is exact erf GELU; tanh approx differs ~1e-3.
    return 0.5 * x * (
        1.0 + jnp.tanh(math.sqrt(2.0 / math.pi) * (x + 0.044715 * x * x * x)))


# ------------------------------- fused kernel -------------------------------

def _ernie_fused_kernel(
    tokens_ref, mask_ref,        # scalar-prefetch (SMEM): (B, S) int32 each
    slab_ref,                    # (R, 128) f32 weight slab, fully VMEM-resident
    o_ref,                       # (B, 128) lane-dense logits
    *, offsets, batch, seq, hidden, heads, ffn, layers, head_dim,
):
    """Single grid step: full embeddings + encoder + pooler + classifier."""
    S, H, nH, dh, F = seq, hidden, heads, head_dim, ffn
    scale = 1.0 / math.sqrt(dh)
    neg_inf = jnp.float32(-10000.0)

    def load(name, rows=None, cols=None):
        off, r, c = offsets[name]
        rr = r if rows is None else rows
        cc = c if cols is None else cols
        # full-lane-width load, then (cheap, tiny) value slice to real width
        return slab_ref[off:off + rr, :][:, :cc]

    emb_g = load("emb_ln_g")
    emb_b = load("emb_ln_b")
    pos = load("pos_emb", rows=S)            # (S, H)
    type0 = load("type_emb0")                # (1, H) -- token_type_ids == 0
    we_off = offsets["word_emb"][0]

    lane = jax.lax.broadcasted_iota(jnp.int32, (1, S), 1)

    for b in range(batch):
        # ---- embedding gather: token ids from SMEM, table rows from VMEM ----
        emb_rows = []
        for s in range(S):
            tid = tokens_ref[b, s]
            emb_rows.append(slab_ref[pl.ds(we_off + tid, 1), :])   # (1, 128)
        h = jnp.concatenate(emb_rows, axis=0)[:, :H] + pos + type0
        h = _layernorm(h, emb_g, emb_b)

        # ---- additive attention mask built in-kernel from the int mask ----
        m = jnp.zeros((1, S), jnp.float32)
        for s in range(S):
            is_pad = mask_ref[b, s] == 0
            m = jnp.where(jnp.logical_and(lane == s, is_pad), neg_inf, m)

        for l in range(layers):
            # Dense fused QKV: (S, H) @ (H, 3H); q/k/v per head are 16-lane slices.
            qkv = (jnp.dot(h, load(f"wqkv{l}"),
                           preferred_element_type=jnp.float32)
                   + load(f"bqkv{l}"))                             # (S, 3H)

            ctxs = []
            for hh in range(nH):
                q = qkv[:, hh * dh:(hh + 1) * dh]                  # (S, dh)
                k = qkv[:, H + hh * dh:H + (hh + 1) * dh]
                v = qkv[:, 2 * H + hh * dh:2 * H + (hh + 1) * dh]
                s_ = jax.lax.dot_general(q, k, (((1,), (1,)), ((), ())),
                                         preferred_element_type=jnp.float32)
                s_ = s_ * scale + m
                s_ = s_ - jnp.max(s_, axis=-1, keepdims=True)
                p = jnp.exp(s_)
                # softmax normalize on the EUP (approx reciprocal), not the VPU
                p = p * pl.reciprocal(jnp.sum(p, axis=-1, keepdims=True),
                                      approx=True)
                ctxs.append(jnp.dot(p, v, preferred_element_type=jnp.float32))
            ctx = jnp.concatenate(ctxs, axis=-1)                   # (S, H)

            # single combined output projection with the original (H, H) wo
            attn = (jnp.dot(ctx, load(f"wo{l}"),
                            preferred_element_type=jnp.float32)
                    + load(f"bo{l}"))
            h = _layernorm(h + attn, load(f"ln1g{l}"), load(f"ln1b{l}"))

            # FFN with fused GELU
            ff = _gelu(jnp.dot(h, load(f"w1_{l}"),
                               preferred_element_type=jnp.float32)
                       + load(f"b1_{l}"))
            ff = (jnp.dot(ff, load(f"w2_{l}"),
                          preferred_element_type=jnp.float32)
                  + load(f"b2_{l}"))
            h = _layernorm(h + ff, load(f"ln2g{l}"), load(f"ln2b{l}"))

        # ---- pooler on [CLS] row + classifier (lane-dense 128-wide output) ----
        cls = h[0:1, :]
        pooled = jnp.tanh(
            jnp.dot(cls, load("pool_w"), preferred_element_type=jnp.float32)
            + load("pool_b"))
        # self.input_dropout(pooled): identity at inference time.
        # TODO(synk): training-mode dropout (pltpu.prng_* Bernoulli mask) not applied.
        logits = (jnp.dot(pooled, load("cls_w", cols=_LANE),
                          preferred_element_type=jnp.float32)
                  + load("cls_b", cols=_LANE))                     # (1, 128)
        o_ref[b:b + 1, :] = logits


# ---------------------------- parameters & packing ---------------------------

def init_params(key, cfg):
    """Checkpoint-layout (unpacked) weights, synthetic init."""
    H, F, V, P = cfg["hidden"], cfg["ffn"], cfg["vocab"], cfg["max_pos"]
    L, Lbl = cfg["layers"], cfg["num_labels"]

    ks = jax.random.split(key, 24)

    def nrm(k, shape, scale=0.02):
        return scale * jax.random.normal(k, shape, dtype=jnp.float32)

    return dict(
        word_emb=nrm(ks[0], (V, H)),
        pos_emb=nrm(ks[1], (P, H)),
        type_emb=nrm(ks[2], (2, H)),
        emb_ln_g=1.0 + 0.05 * jax.random.normal(ks[3], (1, H), jnp.float32),
        emb_ln_b=nrm(ks[4], (1, H), 0.05),
        wq=nrm(ks[5], (L, H, H)), wk=nrm(ks[6], (L, H, H)), wv=nrm(ks[7], (L, H, H)),
        bq=nrm(ks[8], (L, 1, H)), bk=nrm(ks[9], (L, 1, H)), bv=nrm(ks[10], (L, 1, H)),
        wo=nrm(ks[11], (L, H, H)), bo=nrm(ks[12], (L, 1, H)),
        ln1_g=1.0 + 0.05 * jax.random.normal(ks[13], (L, 1, H), jnp.float32),
        ln1_b=nrm(ks[14], (L, 1, H), 0.05),
        w1=nrm(ks[15], (L, H, F)), b1=nrm(ks[16], (L, 1, F)),
        w2=nrm(ks[17], (L, F, H)), b2=nrm(ks[18], (L, 1, H)),
        ln2_g=1.0 + 0.05 * jax.random.normal(ks[19], (L, 1, H), jnp.float32),
        ln2_b=nrm(ks[20], (L, 1, H), 0.05),
        pool_w=nrm(ks[21], (H, H)), pool_b=nrm(ks[22], (1, H)),
        cls_w=nrm(ks[23], (H, Lbl)), cls_b=jnp.zeros((1, Lbl), jnp.float32),
    )


def pack_slab(raw, cfg):
    """Concatenate all weights into one (R, 128) f32 slab; return slab + offsets."""
    L = cfg["layers"]

    entries = [
        ("word_emb", raw["word_emb"]),
        ("pos_emb", raw["pos_emb"]),
        ("type_emb0", raw["type_emb"][0:1]),
        ("emb_ln_g", raw["emb_ln_g"]),
        ("emb_ln_b", raw["emb_ln_b"]),
    ]
    for l in range(L):
        wqkv = jnp.concatenate([raw["wq"][l], raw["wk"][l], raw["wv"][l]], axis=1)
        bqkv = jnp.concatenate([raw["bq"][l], raw["bk"][l], raw["bv"][l]], axis=1)
        entries += [
            (f"wqkv{l}", wqkv), (f"bqkv{l}", bqkv),
            (f"wo{l}", raw["wo"][l]), (f"bo{l}", raw["bo"][l]),
            (f"ln1g{l}", raw["ln1_g"][l]), (f"ln1b{l}", raw["ln1_b"][l]),
            (f"w1_{l}", raw["w1"][l]), (f"b1_{l}", raw["b1"][l]),
            (f"w2_{l}", raw["w2"][l]), (f"b2_{l}", raw["b2"][l]),
            (f"ln2g{l}", raw["ln2_g"][l]), (f"ln2b{l}", raw["ln2_b"][l]),
        ]
    entries += [
        ("pool_w", raw["pool_w"]), ("pool_b", raw["pool_b"]),
        ("cls_w", raw["cls_w"]), ("cls_b", raw["cls_b"]),
    ]

    offsets, blocks, off = {}, [], 0
    for name, arr in entries:
        arr = jnp.asarray(arr, jnp.float32)
        r, c = arr.shape
        assert c <= _LANE
        blocks.append(jnp.pad(arr, ((0, 0), (0, _LANE - c))))
        offsets[name] = (off, r, c)
        off += r
    pad_rows = (-off) % 8
    if pad_rows:
        blocks.append(jnp.zeros((pad_rows, _LANE), jnp.float32))
    slab = jnp.concatenate(blocks, axis=0)
    return slab, offsets


# ------------------------------- host wrapper --------------------------------

def _cost_estimate(cfg, slab):
    """True (unpadded) dimension counts."""
    B, S, H, F = cfg["batch"], cfg["seq"], cfg["hidden"], cfg["ffn"]
    nH, L, Lbl = cfg["heads"], cfg["layers"], cfg["num_labels"]
    dh = H // nH
    per_layer = (2 * S * H * 3 * H                 # dense fused QKV
                 + nH * 4 * S * S * dh             # scores + ctx
                 + 2 * S * H * H                   # combined output proj
                 + 2 * S * H * F + 2 * S * F * H)  # FFN
    flops = B * (L * per_layer + 2 * H * H + 2 * H * Lbl)
    transcendentals = B * (L * (nH * S * S + S * F) + H)
    bytes_accessed = (int(slab.size) * 4            # weight slab
                      + 2 * B * S * 4               # tokens + mask
                      + B * _LANE * 4)              # logits
    return flops, transcendentals, bytes_accessed


def basic_classifier_forward(slab, offsets, tokens, mask_s, cfg):
    """Mirrors BasicClassifier.forward: ERNIE -> pooled -> dropout -> Linear."""
    B, S = tokens.shape
    H, nH, L, F = cfg["hidden"], cfg["heads"], cfg["layers"], cfg["ffn"]
    R = slab.shape[0]

    kernel = functools.partial(
        _ernie_fused_kernel, offsets=offsets, batch=B, seq=S, hidden=H,
        heads=nH, ffn=F, layers=L, head_dim=H // nH)

    flops, transcendentals, bytes_accessed = _cost_estimate(cfg, slab)

    fused = pl.pallas_call(
        kernel,
        out_shape=jax.ShapeDtypeStruct((B, _LANE), jnp.float32),
        grid_spec=pltpu.PrefetchScalarGridSpec(
            num_scalar_prefetch=2,                      # tokens, mask -> SMEM
            grid=(1,),                                  # single step: batch unrolled in-kernel
            in_specs=[pl.BlockSpec((R, _LANE), lambda i, tok, msk: (0, 0))],
            out_specs=pl.BlockSpec((B, _LANE), lambda i, tok, msk: (0, 0)),
        ),
        compiler_params=pltpu.CompilerParams(
            dimension_semantics=("arbitrary",),
        ),
        cost_estimate=pl.CostEstimate(
            flops=flops, transcendentals=transcendentals,
            bytes_accessed=bytes_accessed),
    )(tokens.astype(jnp.int32), mask_s.astype(jnp.int32), slab)

    return fused[:, :cfg["num_labels"]]


# --------------------------- pure-JAX reference -------------------------------

def _reference_forward(raw, tokens, mask_s, cfg):
    B, S = tokens.shape
    H, nH, L = cfg["hidden"], cfg["heads"], cfg["layers"]
    dh = H // nH
    scale = 1.0 / math.sqrt(dh)
    pos = raw["pos_emb"][:S]
    outs = []
    for b in range(B):
        h = raw["word_emb"][tokens[b]] + pos + raw["type_emb"][0][None, :]
        h = _layernorm(h, raw["emb_ln_g"], raw["emb_ln_b"])
        m = ((1.0 - mask_s[b].astype(jnp.float32)) * -10000.0)[None, :]
        for l in range(L):
            q = h @ raw["wq"][l] + raw["bq"][l]
            k = h @ raw["wk"][l] + raw["bk"][l]
            v = h @ raw["wv"][l] + raw["bv"][l]
            ctxs = []
            for hh in range(nH):
                qs = q[:, hh * dh:(hh + 1) * dh]
                ks = k[:, hh * dh:(hh + 1) * dh]
                vs = v[:, hh * dh:(hh + 1) * dh]
                s_ = qs @ ks.T * scale + m
                ctxs.append(jax.nn.softmax(s_, axis=-1) @ vs)
            attn = jnp.concatenate(ctxs, axis=-1) @ raw["wo"][l] + raw["bo"][l]
            h = _layernorm(h + attn, raw["ln1_g"][l], raw["ln1_b"][l])
            ff = _gelu(h @ raw["w1"][l] + raw["b1"][l])
            ff = ff @ raw["w2"][l] + raw["b2"][l]
            h = _layernorm(h + ff, raw["ln2_g"][l], raw["ln2_b"][l])
        pooled = jnp.tanh(h[0:1] @ raw["pool_w"] + raw["pool_b"])
        outs.append(pooled @ raw["cls_w"] + raw["cls_b"])
    return jnp.concatenate(outs, axis=0)


# ----------------------------------- main ------------------------------------

if __name__ == "__main__":
    cfg = CFG
    key = jax.random.PRNGKey(0)
    k_param, k_tok = jax.random.split(key)

    raw = init_params(k_param, cfg)
    slab, offsets = pack_slab(raw, cfg)

    B, S = cfg["batch"], cfg["seq"]
    tokens = jax.random.randint(k_tok, (B, S), 0, cfg["vocab"], dtype=jnp.int32)
    # attention mask: second example has two padding positions at the end
    mask_s = jnp.ones((B, S), dtype=jnp.int32)
    mask_s = mask_s.at[1, S - 2:].set(0)

    fwd = jax.jit(lambda sl, tok, msk: basic_classifier_forward(sl, offsets, tok, msk, cfg))
    logits = jax.block_until_ready(fwd(slab, tokens, mask_s))

    ref = _reference_forward(raw, tokens, mask_s, cfg)

    assert logits.shape == (B, cfg["num_labels"])
    assert bool(jnp.all(jnp.isfinite(logits)))
    assert bool(jnp.allclose(logits, ref, atol=2e-3, rtol=2e-2)), (
        f"max|diff|={float(jnp.max(jnp.abs(logits - ref)))}")
    print("KERNEL_OK")
</pallas_src>

<mosaic_0001>
module attributes {stable_mosaic.version = 11 : i64} {
  func.func @_ernie_fused_kernel(%arg0: i32, %arg1: memref<2x8xi32, #tpu.memory_space<smem>>, %arg2: memref<2x8xi32, #tpu.memory_space<smem>>, %arg3: memref<488x128xf32, #tpu.memory_space<vmem>>, %arg4: memref<2x128xf32, #tpu.memory_space<vmem>>) attributes {dimension_semantics = [#tpu.dimension_semantics<arbitrary>], iteration_bounds = array<i64: 1>, scalar_prefetch = 2 : i64, scratch_operands = 0 : i64, tpu.core_type = #tpu.core_type<tc>, window_params = [{pipeline_mode = #tpu.pipeline_mode<synchronous>, transform_indices = @transform_0, window_bounds = array<i64: 488, 128>}, {pipeline_mode = #tpu.pipeline_mode<synchronous>, transform_indices = @transform_1, window_bounds = array<i64: 2, 128>}]} {
    %c83 = arith.constant 83 : index
    %c0 = arith.constant 0 : index
    %0 = vector.load %arg3[%c83, %c0] : memref<488x128xf32, #tpu.memory_space<vmem>>, vector<1x128xf32>
    %1 = vector.extract_strided_slice %0 {offsets = [0, 0], sizes = [1, 32], strides = [1, 1]} : vector<1x128xf32> to vector<1x32xf32>
    %c84 = arith.constant 84 : index
    %c0_0 = arith.constant 0 : index
    %2 = vector.load %arg3[%c84, %c0_0] : memref<488x128xf32, #tpu.memory_space<vmem>>, vector<1x128xf32>
    %3 = vector.extract_strided_slice %2 {offsets = [0, 0], sizes = [1, 32], strides = [1, 1]} : vector<1x128xf32> to vector<1x32xf32>
    %c50 = arith.constant 50 : index
    %c0_1 = arith.constant 0 : index
    %4 = vector.load %arg3[%c50, %c0_1] : memref<488x128xf32, #tpu.memory_space<vmem>>, vector<8x128xf32>
    %5 = vector.extract_strided_slice %4 {offsets = [0, 0], sizes = [8, 32], strides = [1, 1]} : vector<8x128xf32> to vector<8x32xf32>
    %c82 = arith.constant 82 : index
    %c0_2 = arith.constant 0 : index
    %6 = vector.load %arg3[%c82, %c0_2] : memref<488x128xf32, #tpu.memory_space<vmem>>, vector<1x128xf32>
    %7 = vector.extract_strided_slice %6 {offsets = [0, 0], sizes = [1, 32], strides = [1, 1]} : vector<1x128xf32> to vector<1x32xf32>
    %8 = tpu.iota {dimensions = array<i32: 1>} : vector<1x8xi32>
    %c0_3 = arith.constant 0 : index
    %c0_4 = arith.constant 0 : index
    %9 = memref.load %arg1[%c0_3, %c0_4] : memref<2x8xi32, #tpu.memory_space<smem>>
    %c0_i32 = arith.constant 0 : i32
    %10 = arith.addi %c0_i32, %9 : i32
    %11 = arith.index_cast %10 : i32 to index
    %c0_5 = arith.constant 0 : index
    %12 = vector.load %arg3[%11, %c0_5] : memref<488x128xf32, #tpu.memory_space<vmem>>, vector<1x128xf32>
    %c0_6 = arith.constant 0 : index
    %c1 = arith.constant 1 : index
    %13 = memref.load %arg1[%c0_6, %c1] : memref<2x8xi32, #tpu.memory_space<smem>>
    %c0_i32_7 = arith.constant 0 : i32
    %14 = arith.addi %c0_i32_7, %13 : i32
    %15 = arith.index_cast %14 : i32 to index
    %c0_8 = arith.constant 0 : index
    %16 = vector.load %arg3[%15, %c0_8] : memref<488x128xf32, #tpu.memory_space<vmem>>, vector<1x128xf32>
    %c0_9 = arith.constant 0 : index
    %c2 = arith.constant 2 : index
    %17 = memref.load %arg1[%c0_9, %c2] : memref<2x8xi32, #tpu.memory_space<smem>>
    %c0_i32_10 = arith.constant 0 : i32
    %18 = arith.addi %c0_i32_10, %17 : i32
    %19 = arith.index_cast %18 : i32 to index
    %c0_11 = arith.constant 0 : index
    %20 = vector.load %arg3[%19, %c0_11] : memref<488x128xf32, #tpu.memory_space<vmem>>, vector<1x128xf32>
    %c0_12 = arith.constant 0 : index
    %c3 = arith.constant 3 : index
    %21 = memref.load %arg1[%c0_12, %c3] : memref<2x8xi32, #tpu.memory_space<smem>>
    %c0_i32_13 = arith.constant 0 : i32
    %22 = arith.addi %c0_i32_13, %21 : i32
    %23 = arith.index_cast %22 : i32 to index
    %c0_14 = arith.constant 0 : index
    %24 = vector.load %arg3[%23, %c0_14] : memref<488x128xf32, #tpu.memory_space<vmem>>, vector<1x128xf32>
    %c0_15 = arith.constant 0 : index
    %c4 = arith.constant 4 : index
    %25 = memref.load %arg1[%c0_15, %c4] : memref<2x8xi32, #tpu.memory_space<smem>>
    %c0_i32_16 = arith.constant 0 : i32
    %26 = arith.addi %c0_i32_16, %25 : i32
    %27 = arith.index_cast %26 : i32 to index
    %c0_17 = arith.constant 0 : index
    %28 = vector.load %arg3[%27, %c0_17] : memref<488x128xf32, #tpu.memory_space<vmem>>, vector<1x128xf32>
    %c0_18 = arith.constant 0 : index
    %c5 = arith.constant 5 : index
    %29 = memref.load %arg1[%c0_18, %c5] : memref<2x8xi32, #tpu.memory_space<smem>>
    %c0_i32_19 = arith.constant 0 : i32
    %30 = arith.addi %c0_i32_19, %29 : i32
    %31 = arith.index_cast %30 : i32 to index
    %c0_20 = arith.constant 0 : index
    %32 = vector.load %arg3[%31, %c0_20] : memref<488x128xf32, #tpu.memory_space<vmem>>, vector<1x128xf32>
    %c0_21 = arith.constant 0 : index
    %c6 = arith.constant 6 : index
    %33 = memref.load %arg1[%c0_21, %c6] : memref<2x8xi32, #tpu.memory_space<smem>>
    %c0_i32_22 = arith.constant 0 : i32
    %34 = arith.addi %c0_i32_22, %33 : i32
    %35 = arith.index_cast %34 : i32 to index
    %c0_23 = arith.constant 0 : index
    %36 = vector.load %arg3[%35, %c0_23] : memref<488x128xf32, #tpu.memory_space<vmem>>, vector<1x128xf32>
    %c0_24 = arith.constant 0 : index
    %c7 = arith.constant 7 : index
    %37 = memref.load %arg1[%c0_24, %c7] : memref<2x8xi32, #tpu.memory_space<smem>>
    %c0_i32_25 = arith.constant 0 : i32
    %38 = arith.addi %c0_i32_25, %37 : i32
    %39 = arith.index_cast %38 : i32 to index
    %c0_26 = arith.constant 0 : index
    %40 = vector.load %arg3[%39, %c0_26] : memref<488x128xf32, #tpu.memory_space<vmem>>, vector<1x128xf32>
    %41 = tpu.concatenate %12, %16, %20, %24, %28, %32, %36, %40 in 0 : vector<1x128xf32>, vector<1x128xf32>, vector<1x128xf32>, vector<1x128xf32>, vector<1x128xf32>, vector<1x128xf32>, vector<1x128xf32>, vector<1x128xf32> -> vector<8x128xf32>
    %42 = vector.extract_strided_slice %41 {offsets = [0, 0], sizes = [8, 32], strides = [1, 1]} : vector<8x128xf32> to vector<8x32xf32>
    %43 = arith.addf %42, %5 : vector<8x32xf32>
    %44 = vector.broadcast %7 : vector<1x32xf32> to vector<8x32xf32>
    %45 = arith.addf %43, %44 : vector<8x32xf32>
    %cst = arith.constant dense<0.000000e+00> : vector<8xf32>
    %46 = vector.multi_reduction <add>, %45, %cst [1] : vector<8x32xf32> to vector<8xf32>
    %47 = vector.shape_cast %46 : vector<8xf32> to vector<8x1xf32>
    %cst_27 = arith.constant 3.200000e+01 : f32
    %48 = vector.broadcast %cst_27 : f32 to vector<8x1xf32>
    %49 = arith.divf %47, %48 : vector<8x1xf32>
    %50 = vector.broadcast %49 : vector<8x1xf32> to vector<8x32xf32>
    %51 = arith.subf %45, %50 : vector<8x32xf32>
    %52 = arith.mulf %51, %51 : vector<8x32xf32>
    %cst_28 = arith.constant dense<0.000000e+00> : vector<8xf32>
    %53 = vector.multi_reduction <add>, %52, %cst_28 [1] : vector<8x32xf32> to vector<8xf32>
    %54 = vector.shape_cast %53 : vector<8xf32> to vector<8x1xf32>
    %cst_29 = arith.constant 3.200000e+01 : f32
    %55 = vector.broadcast %cst_29 : f32 to vector<8x1xf32>
    %56 = arith.divf %54, %55 : vector<8x1xf32>
    %57 = vector.broadcast %49 : vector<8x1xf32> to vector<8x32xf32>
    %58 = arith.subf %45, %57 : vector<8x32xf32>
    %cst_30 = arith.constant 9.99999996E-13 : f32
    %59 = vector.broadcast %cst_30 : f32 to vector<8x1xf32>
    %60 = arith.addf %56, %59 : vector<8x1xf32>
    %61 = math.rsqrt %60 : vector<8x1xf32>
    %62 = vector.broadcast %61 : vector<8x1xf32> to vector<8x32xf32>
    %63 = arith.mulf %58, %62 : vector<8x32xf32>
    %64 = vector.broadcast %1 : vector<1x32xf32> to vector<8x32xf32>
    %65 = arith.mulf %63, %64 : vector<8x32xf32>
    %66 = vector.broadcast %3 : vector<1x32xf32> to vector<8x32xf32>
    %67 = arith.addf %65, %66 : vector<8x32xf32>
    %cst_31 = arith.constant 0.000000e+00 : f32
    %68 = vector.broadcast %cst_31 : f32 to vector<1x8xf32>
    %c0_32 = arith.constant 0 : index
    %c0_33 = arith.constant 0 : index
    %69 = memref.load %arg2[%c0_32, %c0_33] : memref<2x8xi32, #tpu.memory_space<smem>>
    %c0_i32_34 = arith.constant 0 : i32
    %70 = arith.cmpi eq, %69, %c0_i32_34 : i32
    %c0_i32_35 = arith.constant 0 : i32
    %71 = vector.broadcast %c0_i32_35 : i32 to vector<1x8xi32>
    %72 = arith.cmpi eq, %8, %71 : vector<1x8xi32>
    %73 = vector.broadcast %70 : i1 to vector<1x8xi1>
    %74 = arith.andi %72, %73 : vector<1x8xi1>
    %cst_36 = arith.constant -1.000000e+04 : f32
    %75 = vector.broadcast %cst_36 : f32 to vector<1x8xf32>
    %76 = arith.select %74, %75, %68 : vector<1x8xi1>, vector<1x8xf32>
    %c0_37 = arith.constant 0 : index
    %c1_38 = arith.constant 1 : index
    %77 = memref.load %arg2[%c0_37, %c1_38] : memref<2x8xi32, #tpu.memory_space<smem>>
    %c0_i32_39 = arith.constant 0 : i32
    %78 = arith.cmpi eq, %77, %c0_i32_39 : i32
    %c1_i32 = arith.constant 1 : i32
    %79 = vector.broadcast %c1_i32 : i32 to vector<1x8xi32>
    %80 = arith.cmpi eq, %8, %79 : vector<1x8xi32>
    %81 = vector.broadcast %78 : i1 to vector<1x8xi1>
    %82 = arith.andi %80, %81 : vector<1x8xi1>
    %cst_40 = arith.constant -1.000000e+04 : f32
    %83 = vector.broadcast %cst_40 : f32 to vector<1x8xf32>
    %84 = arith.select %82, %83, %76 : vector<1x8xi1>, vector<1x8xf32>
    %c0_41 = arith.constant 0 : index
    %c2_42 = arith.constant 2 : index
    %85 = memref.load %arg2[%c0_41, %c2_42] : memref<2x8xi32, #tpu.memory_space<smem>>
    %c0_i32_43 = arith.constant 0 : i32
    %86 = arith.cmpi eq, %85, %c0_i32_43 : i32
    %c2_i32 = arith.constant 2 : i32
    %87 = vector.broadcast %c2_i32 : i32 to vector<1x8xi32>
    %88 = arith.cmpi eq, %8, %87 : vector<1x8xi32>
    %89 = vector.broadcast %86 : i1 to vector<1x8xi1>
    %90 = arith.andi %88, %89 : vector<1x8xi1>
    %cst_44 = arith.constant -1.000000e+04 : f32
    %91 = vector.broadcast %cst_44 : f32 to vector<1x8xf32>
    %92 = arith.select %90, %91, %84 : vector<1x8xi1>, vector<1x8xf32>
    %c0_45 = arith.constant 0 : index
    %c3_46 = arith.constant 3 : index
    %93 = memref.load %arg2[%c0_45, %c3_46] : memref<2x8xi32, #tpu.memory_space<smem>>
    %c0_i32_47 = arith.constant 0 : i32
    %94 = arith.cmpi eq, %93, %c0_i32_47 : i32
    %c3_i32 = arith.constant 3 : i32
    %95 = vector.broadcast %c3_i32 : i32 to vector<1x8xi32>
    %96 = arith.cmpi eq, %8, %95 : vector<1x8xi32>
    %97 = vector.broadcast %94 : i1 to vector<1x8xi1>
    %98 = arith.andi %96, %97 : vector<1x8xi1>
    %cst_48 = arith.constant -1.000000e+04 : f32
    %99 = vector.broadcast %cst_48 : f32 to vector<1x8xf32>
    %100 = arith.select %98, %99, %92 : vector<1x8xi1>, vector<1x8xf32>
    %c0_49 = arith.constant 0 : index
    %c4_50 = arith.constant 4 : index
    %101 = memref.load %arg2[%c0_49, %c4_50] : memref<2x8xi32, #tpu.memory_space<smem>>
    %c0_i32_51 = arith.constant 0 : i32
    %102 = arith.cmpi eq, %101, %c0_i32_51 : i32
    %c4_i32 = arith.constant 4 : i32
    %103 = vector.broadcast %c4_i32 : i32 to vector<1x8xi32>
    %104 = arith.cmpi eq, %8, %103 : vector<1x8xi32>
    %105 = vector.broadcast %102 : i1 to vector<1x8xi1>
    %106 = arith.andi %104, %105 : vector<1x8xi1>
    %cst_52 = arith.constant -1.000000e+04 : f32
    %107 = vector.broadcast %cst_52 : f32 to vector<1x8xf32>
    %108 = arith.select %106, %107, %100 : vector<1x8xi1>, vector<1x8xf32>
    %c0_53 = arith.constant 0 : index
    %c5_54 = arith.constant 5 : index
    %109 = memref.load %arg2[%c0_53, %c5_54] : memref<2x8xi32, #tpu.memory_space<smem>>
    %c0_i32_55 = arith.constant 0 : i32
    %110 = arith.cmpi eq, %109, %c0_i32_55 : i32
    %c5_i32 = arith.constant 5 : i32
    %111 = vector.broadcast %c5_i32 : i32 to vector<1x8xi32>
    %112 = arith.cmpi eq, %8, %111 : vector<1x8xi32>
    %113 = vector.broadcast %110 : i1 to vector<1x8xi1>
    %114 = arith.andi %112, %113 : vector<1x8xi1>
    %cst_56 = arith.constant -1.000000e+04 : f32
    %115 = vector.broadcast %cst_56 : f32 to vector<1x8xf32>
    %116 = arith.select %114, %115, %108 : vector<1x8xi1>, vector<1x8xf32>
    %c0_57 = arith.constant 0 : index
    %c6_58 = arith.constant 6 : index
    %117 = memref.load %arg2[%c0_57, %c6_58] : memref<2x8xi32, #tpu.memory_space<smem>>
    %c0_i32_59 = arith.constant 0 : i32
    %118 = arith.cmpi eq, %117, %c0_i32_59 : i32
    %c6_i32 = arith.constant 6 : i32
    %119 = vector.broadcast %c6_i32 : i32 to vector<1x8xi32>
    %120 = arith.cmpi eq, %8, %119 : vector<1x8xi32>
    %121 = vector.broadcast %118 : i1 to vector<1x8xi1>
    %122 = arith.andi %120, %121 : vector<1x8xi1>
    %cst_60 = arith.constant -1.000000e+04 : f32
    %123 = vector.broadcast %cst_60 : f32 to vector<1x8xf32>
    %124 = arith.select %122, %123, %116 : vector<1x8xi1>, vector<1x8xf32>
    %c0_61 = arith.constant 0 : index
    %c7_62 = arith.constant 7 : index
    %125 = memref.load %arg2[%c0_61, %c7_62] : memref<2x8xi32, #tpu.memory_space<smem>>
    %c0_i32_63 = arith.constant 0 : i32
    %126 = arith.cmpi eq, %125, %c0_i32_63 : i32
    %c7_i32 = arith.constant 7 : i32
    %127 = vector.broadcast %c7_i32 : i32 to vector<1x8xi32>
    %128 = arith.cmpi eq, %8, %127 : vector<1x8xi32>
    %129 = vector.broadcast %126 : i1 to vector<1x8xi1>
    %130 = arith.andi %128, %129 : vector<1x8xi1>
    %cst_64 = arith.constant -1.000000e+04 : f32
    %131 = vector.broadcast %cst_64 : f32 to vector<1x8xf32>
    %132 = arith.select %130, %131, %124 : vector<1x8xi1>, vector<1x8xf32>
    %c85 = arith.constant 85 : index
    %c0_65 = arith.constant 0 : index
    %133 = vector.load %arg3[%c85, %c0_65] : memref<488x128xf32, #tpu.memory_space<vmem>>, vector<32x128xf32>
    %134 = vector.extract_strided_slice %133 {offsets = [0, 0], sizes = [32, 96], strides = [1, 1]} : vector<32x128xf32> to vector<32x96xf32>
    %cst_66 = arith.constant dense<0.000000e+00> : vector<8x96xf32>
    %135 = tpu.matmul %67, %134, %cst_66 {dimension_numbers = #tpu.dot_dimension_numbers<[1], [0], [0], [1], [0, 0, 1, 1], [], []>} : vector<8x32xf32>, vector<32x96xf32>, vector<8x96xf32> -> vector<8x96xf32>
    %c117 = arith.constant 117 : index
    %c0_67 = arith.constant 0 : index
    %136 = vector.load %arg3[%c117, %c0_67] : memref<488x128xf32, #tpu.memory_space<vmem>>, vector<1x128xf32>
    %137 = vector.extract_strided_slice %136 {offsets = [0, 0], sizes = [1, 96], strides = [1, 1]} : vector<1x128xf32> to vector<1x96xf32>
    %138 = vector.broadcast %137 : vector<1x96xf32> to vector<8x96xf32>
    %139 = arith.addf %135, %138 : vector<8x96xf32>
    %140 = vector.extract_strided_slice %139 {offsets = [0, 0], sizes = [8, 16], strides = [1, 1]} : vector<8x96xf32> to vector<8x16xf32>
    %141 = vector.extract_strided_slice %139 {offsets = [0, 32], sizes = [8, 16], strides = [1, 1]} : vector<8x96xf32> to vector<8x16xf32>
    %142 = vector.extract_strided_slice %139 {offsets = [0, 64], sizes = [8, 16], strides = [1, 1]} : vector<8x96xf32> to vector<8x16xf32>
    %cst_68 = arith.constant dense<0.000000e+00> : vector<8x8xf32>
    %143 = tpu.matmul %140, %141, %cst_68 {dimension_numbers = #tpu.dot_dimension_numbers<[1], [1], [0], [0], [0, 0, 1, 0], [], []>} : vector<8x16xf32>, vector<8x16xf32>, vector<8x8xf32> -> vector<8x8xf32>
    %cst_69 = arith.constant 2.500000e-01 : f32
    %144 = vector.broadcast %cst_69 : f32 to vector<8x8xf32>
    %145 = arith.mulf %143, %144 : vector<8x8xf32>
    %146 = vector.broadcast %132 : vector<1x8xf32> to vector<8x8xf32>
    %147 = arith.addf %145, %146 : vector<8x8xf32>
    %cst_70 = arith.constant dense<0xFF800000> : vector<8xf32>
    %148 = vector.multi_reduction <maximumf>, %147, %cst_70 [1] : vector<8x8xf32> to vector<8xf32>
    %149 = vector.shape_cast %148 : vector<8xf32> to vector<8x1xf32>
    %150 = vector.broadcast %149 : vector<8x1xf32> to vector<8x8xf32>
    %151 = arith.subf %147, %150 : vector<8x8xf32>
    %152 = math.exp %151 : vector<8x8xf32>
    %cst_71 = arith.constant dense<0.000000e+00> : vector<8xf32>
    %153 = vector.multi_reduction <add>, %152, %cst_71 [1] : vector<8x8xf32> to vector<8xf32>
    %154 = vector.shape_cast %153 : vector<8xf32> to vector<8x1xf32>
    %155 = tpu.reciprocal %154 {approx = true} : vector<8x1xf32> -> vector<8x1xf32>
    %156 = vector.broadcast %155 : vector<8x1xf32> to vector<8x8xf32>
    %157 = arith.mulf %152, %156 : vector<8x8xf32>
    %cst_72 = arith.constant dense<0.000000e+00> : vector<8x16xf32>
    %158 = tpu.matmul %157, %142, %cst_72 {dimension_numbers = #tpu.dot_dimension_numbers<[1], [0], [0], [1], [0, 0, 1, 1], [], []>} : vector<8x8xf32>, vector<8x16xf32>, vector<8x16xf32> -> vector<8x16xf32>
    %159 = vector.extract_strided_slice %139 {offsets = [0, 16], sizes = [8, 16], strides = [1, 1]} : vector<8x96xf32> to vector<8x16xf32>
    %160 = vector.extract_strided_slice %139 {offsets = [0, 48], sizes = [8, 16], strides = [1, 1]} : vector<8x96xf32> to vector<8x16xf32>
    %161 = vector.extract_strided_slice %139 {offsets = [0, 80], sizes = [8, 16], strides = [1, 1]} : vector<8x96xf32> to vector<8x16xf32>
    %cst_73 = arith.constant dense<0.000000e+00> : vector<8x8xf32>
    %162 = tpu.matmul %159, %160, %cst_73 {dimension_numbers = #tpu.dot_dimension_numbers<[1], [1], [0], [0], [0, 0, 1, 0], [], []>} : vector<8x16xf32>, vector<8x16xf32>, vector<8x8xf32> -> vector<8x8xf32>
    %cst_74 = arith.constant 2.500000e-01 : f32
    %163 = vector.broadcast %cst_74 : f32 to vector<8x8xf32>
    %164 = arith.mulf %162, %163 : vector<8x8xf32>
    %165 = vector.broadcast %132 : vector<1x8xf32> to vector<8x8xf32>
    %166 = arith.addf %164, %165 : vector<8x8xf32>
    %cst_75 = arith.constant dense<0xFF800000> : vector<8xf32>
    %167 = vector.multi_reduction <maximumf>, %166, %cst_75 [1] : vector<8x8xf32> to vector<8xf32>
    %168 = vector.shape_cast %167 : vector<8xf32> to vector<8x1xf32>
    %169 = vector.broadcast %168 : vector<8x1xf32> to vector<8x8xf32>
    %170 = arith.subf %166, %169 : vector<8x8xf32>
    %171 = math.exp %170 : vector<8x8xf32>
    %cst_76 = arith.constant dense<0.000000e+00> : vector<8xf32>
    %172 = vector.multi_reduction <add>, %171, %cst_76 [1] : vector<8x8xf32> to vector<8xf32>
    %173 = vector.shape_cast %172 : vector<8xf32> to vector<8x1xf32>
    %174 = tpu.reciprocal %173 {approx = true} : vector<8x1xf32> -> vector<8x1xf32>
    %175 = vector.broadcast %174 : vector<8x1xf32> to vector<8x8xf32>
    %176 = arith.mulf %171, %175 : vector<8x8xf32>
    %cst_77 = arith.constant dense<0.000000e+00> : vector<8x16xf32>
    %177 = tpu.matmul %176, %161, %cst_77 {dimension_numbers = #tpu.dot_dimension_numbers<[1], [0], [0], [1], [0, 0, 1, 1], [], []>} : vector<8x8xf32>, vector<8x16xf32>, vector<8x16xf32> -> vector<8x16xf32>
    %178 = tpu.concatenate %158, %177 in 1 : vector<8x16xf32>, vector<8x16xf32> -> vector<8x32xf32>
    %c118 = arith.constant 118 : index
    %c0_78 = arith.constant 0 : index
    %179 = vector.load %arg3[%c118, %c0_78] : memref<488x128xf32, #tpu.memory_space<vmem>>, vector<32x128xf32>
    %180 = vector.extract_strided_slice %179 {offsets = [0, 0], sizes = [32, 32], strides = [1, 1]} : vector<32x128xf32> to vector<32x32xf32>
    %cst_79 = arith.constant dense<0.000000e+00> : vector<8x32xf32>
    %181 = tpu.matmul %178, %180, %cst_79 {dimension_numbers = #tpu.dot_dimension_numbers<[1], [0], [0], [1], [0, 0, 1, 1], [], []>} : vector<8x32xf32>, vector<32x32xf32>, vector<8x32xf32> -> vector<8x32xf32>
    %c150 = arith.constant 150 : index
    %c0_80 = arith.constant 0 : index
    %182 = vector.load %arg3[%c150, %c0_80] : memref<488x128xf32, #tpu.memory_space<vmem>>, vector<1x128xf32>
    %183 = vector.extract_strided_slice %182 {offsets = [0, 0], sizes = [1, 32], strides = [1, 1]} : vector<1x128xf32> to vector<1x32xf32>
    %184 = vector.broadcast %183 : vector<1x32xf32> to vector<8x32xf32>
    %185 = arith.addf %181, %184 : vector<8x32xf32>
    %186 = arith.addf %67, %185 : vector<8x32xf32>
    %c151 = arith.constant 151 : index
    %c0_81 = arith.constant 0 : index
    %187 = vector.load %arg3[%c151, %c0_81] : memref<488x128xf32, #tpu.memory_space<vmem>>, vector<1x128xf32>
    %188 = vector.extract_strided_slice %187 {offsets = [0, 0], sizes = [1, 32], strides = [1, 1]} : vector<1x128xf32> to vector<1x32xf32>
    %c152 = arith.constant 152 : index
    %c0_82 = arith.constant 0 : index
    %189 = vector.load %arg3[%c152, %c0_82] : memref<488x128xf32, #tpu.memory_space<vmem>>, vector<1x128xf32>
    %190 = vector.extract_strided_slice %189 {offsets = [0, 0], sizes = [1, 32], strides = [1, 1]} : vector<1x128xf32> to vector<1x32xf32>
    %cst_83 = arith.constant dense<0.000000e+00> : vector<8xf32>
    %191 = vector.multi_reduction <add>, %186, %cst_83 [1] : vector<8x32xf32> to vector<8xf32>
    %192 = vector.shape_cast %191 : vector<8xf32> to vector<8x1xf32>
    %cst_84 = arith.constant 3.200000e+01 : f32
    %193 = vector.broadcast %cst_84 : f32 to vector<8x1xf32>
    %194 = arith.divf %192, %193 : vector<8x1xf32>
    %195 = vector.broadcast %194 : vector<8x1xf32> to vector<8x32xf32>
    %196 = arith.subf %186, %195 : vector<8x32xf32>
    %197 = arith.mulf %196, %196 : vector<8x32xf32>
    %cst_85 = arith.constant dense<0.000000e+00> : vector<8xf32>
    %198 = vector.multi_reduction <add>, %197, %cst_85 [1] : vector<8x32xf32> to vector<8xf32>
    %199 = vector.shape_cast %198 : vector<8xf32> to vector<8x1xf32>
    %cst_86 = arith.constant 3.200000e+01 : f32
    %200 = vector.broadcast %cst_86 : f32 to vector<8x1xf32>
    %201 = arith.divf %199, %200 : vector<8x1xf32>
    %202 = vector.broadcast %194 : vector<8x1xf32> to vector<8x32xf32>
    %203 = arith.subf %186, %202 : vector<8x32xf32>
    %cst_87 = arith.constant 9.99999996E-13 : f32
    %204 = vector.broadcast %cst_87 : f32 to vector<8x1xf32>
    %205 = arith.addf %201, %204 : vector<8x1xf32>
    %206 = math.rsqrt %205 : vector<8x1xf32>
    %207 = vector.broadcast %206 : vector<8x1xf32> to vector<8x32xf32>
    %208 = arith.mulf %203, %207 : vector<8x32xf32>
    %209 = vector.broadcast %188 : vector<1x32xf32> to vector<8x32xf32>
    %210 = arith.mulf %208, %209 : vector<8x32xf32>
    %211 = vector.broadcast %190 : vector<1x32xf32> to vector<8x32xf32>
    %212 = arith.addf %210, %211 : vector<8x32xf32>
    %c153 = arith.constant 153 : index
    %c0_88 = arith.constant 0 : index
    %213 = vector.load %arg3[%c153, %c0_88] : memref<488x128xf32, #tpu.memory_space<vmem>>, vector<32x128xf32>
    %214 = vector.extract_strided_slice %213 {offsets = [0, 0], sizes = [32, 64], strides = [1, 1]} : vector<32x128xf32> to vector<32x64xf32>
    %cst_89 = arith.constant dense<0.000000e+00> : vector<8x64xf32>
    %215 = tpu.matmul %212, %214, %cst_89 {dimension_numbers = #tpu.dot_dimension_numbers<[1], [0], [0], [1], [0, 0, 1, 1], [], []>} : vector<8x32xf32>, vector<32x64xf32>, vector<8x64xf32> -> vector<8x64xf32>
    %c185 = arith.constant 185 : index
    %c0_90 = arith.constant 0 : index
    %216 = vector.load %arg3[%c185, %c0_90] : memref<488x128xf32, #tpu.memory_space<vmem>>, vector<1x128xf32>
    %217 = vector.extract_strided_slice %216 {offsets = [0, 0], sizes = [1, 64], strides = [1, 1]} : vector<1x128xf32> to vector<1x64xf32>
    %218 = vector.broadcast %217 : vector<1x64xf32> to vector<8x64xf32>
    %219 = arith.addf %215, %218 : vector<8x64xf32>
    %cst_91 = arith.constant 5.000000e-01 : f32
    %220 = vector.broadcast %cst_91 : f32 to vector<8x64xf32>
    %221 = arith.mulf %220, %219 : vector<8x64xf32>
    %cst_92 = arith.constant 4.471500e-02 : f32
    %222 = vector.broadcast %cst_92 : f32 to vector<8x64xf32>
    %223 = arith.mulf %222, %219 : vector<8x64xf32>
    %224 = arith.mulf %223, %219 : vector<8x64xf32>
    %225 = arith.mulf %224, %219 : vector<8x64xf32>
    %226 = arith.addf %219, %225 : vector<8x64xf32>
    %cst_93 = arith.constant 0.797884583 : f32
    %227 = vector.broadcast %cst_93 : f32 to vector<8x64xf32>
    %228 = arith.mulf %227, %226 : vector<8x64xf32>
    %229 = math.tanh %228 : vector<8x64xf32>
    %cst_94 = arith.constant 1.000000e+00 : f32
    %230 = vector.broadcast %cst_94 : f32 to vector<8x64xf32>
    %231 = arith.addf %230, %229 : vector<8x64xf32>
    %232 = arith.mulf %221, %231 : vector<8x64xf32>
    %c186 = arith.constant 186 : index
    %c0_95 = arith.constant 0 : index
    %233 = vector.load %arg3[%c186, %c0_95] : memref<488x128xf32, #tpu.memory_space<vmem>>, vector<64x128xf32>
    %234 = vector.extract_strided_slice %233 {offsets = [0, 0], sizes = [64, 32], strides = [1, 1]} : vector<64x128xf32> to vector<64x32xf32>
    %cst_96 = arith.constant dense<0.000000e+00> : vector<8x32xf32>
    %235 = tpu.matmul %232, %234, %cst_96 {dimension_numbers = #tpu.dot_dimension_numbers<[1], [0], [0], [1], [0, 0, 1, 1], [], []>} : vector<8x64xf32>, vector<64x32xf32>, vector<8x32xf32> -> vector<8x32xf32>
    %c250 = arith.constant 250 : index
    %c0_97 = arith.constant 0 : index
    %236 = vector.load %arg3[%c250, %c0_97] : memref<488x128xf32, #tpu.memory_space<vmem>>, vector<1x128xf32>
    %237 = vector.extract_strided_slice %236 {offsets = [0, 0], sizes = [1, 32], strides = [1, 1]} : vector<1x128xf32> to vector<1x32xf32>
    %238 = vector.broadcast %237 : vector<1x32xf32> to vector<8x32xf32>
    %239 = arith.addf %235, %238 : vector<8x32xf32>
    %240 = arith.addf %212, %239 : vector<8x32xf32>
    %c251 = arith.constant 251 : index
    %c0_98 = arith.constant 0 : index
    %241 = vector.load %arg3[%c251, %c0_98] : memref<488x128xf32, #tpu.memory_space<vmem>>, vector<1x128xf32>
    %242 = vector.extract_strided_slice %241 {offsets = [0, 0], sizes = [1, 32], strides = [1, 1]} : vector<1x128xf32> to vector<1x32xf32>
    %c252 = arith.constant 252 : index
    %c0_99 = arith.constant 0 : index
    %243 = vector.load %arg3[%c252, %c0_99] : memref<488x128xf32, #tpu.memory_space<vmem>>, vector<1x128xf32>
    %244 = vector.extract_strided_slice %243 {offsets = [0, 0], sizes = [1, 32], strides = [1, 1]} : vector<1x128xf32> to vector<1x32xf32>
    %cst_100 = arith.constant dense<0.000000e+00> : vector<8xf32>
    %245 = vector.multi_reduction <add>, %240, %cst_100 [1] : vector<8x32xf32> to vector<8xf32>
    %246 = vector.shape_cast %245 : vector<8xf32> to vector<8x1xf32>
    %cst_101 = arith.constant 3.200000e+01 : f32
    %247 = vector.broadcast %cst_101 : f32 to vector<8x1xf32>
    %248 = arith.divf %246, %247 : vector<8x1xf32>
    %249 = vector.broadcast %248 : vector<8x1xf32> to vector<8x32xf32>
    %250 = arith.subf %240, %249 : vector<8x32xf32>
    %251 = arith.mulf %250, %250 : vector<8x32xf32>
    %cst_102 = arith.constant dense<0.000000e+00> : vector<8xf32>
    %252 = vector.multi_reduction <add>, %251, %cst_102 [1] : vector<8x32xf32> to vector<8xf32>
    %253 = vector.shape_cast %252 : vector<8xf32> to vector<8x1xf32>
    %cst_103 = arith.constant 3.200000e+01 : f32
    %254 = vector.broadcast %cst_103 : f32 to vector<8x1xf32>
    %255 = arith.divf %253, %254 : vector<8x1xf32>
    %256 = vector.broadcast %248 : vector<8x1xf32> to vector<8x32xf32>
    %257 = arith.subf %240, %256 : vector<8x32xf32>
    %cst_104 = arith.constant 9.99999996E-13 : f32
    %258 = vector.broadcast %cst_104 : f32 to vector<8x1xf32>
    %259 = arith.addf %255, %258 : vector<8x1xf32>
    %260 = math.rsqrt %259 : vector<8x1xf32>
    %261 = vector.broadcast %260 : vector<8x1xf32> to vector<8x32xf32>
    %262 = arith.mulf %257, %261 : vector<8x32xf32>
    %263 = vector.broadcast %242 : vector<1x32xf32> to vector<8x32xf32>
    %264 = arith.mulf %262, %263 : vector<8x32xf32>
    %265 = vector.broadcast %244 : vector<1x32xf32> to vector<8x32xf32>
    %266 = arith.addf %264, %265 : vector<8x32xf32>
    %c253 = arith.constant 253 : index
    %c0_105 = arith.constant 0 : index
    %267 = vector.load %arg3[%c253, %c0_105] : memref<488x128xf32, #tpu.memory_space<vmem>>, vector<32x128xf32>
    %268 = vector.extract_strided_slice %267 {offsets = [0, 0], sizes = [32, 96], strides = [1, 1]} : vector<32x128xf32> to vector<32x96xf32>
    %cst_106 = arith.constant dense<0.000000e+00> : vector<8x96xf32>
    %269 = tpu.matmul %266, %268, %cst_106 {dimension_numbers = #tpu.dot_dimension_numbers<[1], [0], [0], [1], [0, 0, 1, 1], [], []>} : vector<8x32xf32>, vector<32x96xf32>, vector<8x96xf32> -> vector<8x96xf32>
    %c285 = arith.constant 285 : index
    %c0_107 = arith.constant 0 : index
    %270 = vector.load %arg3[%c285, %c0_107] : memref<488x128xf32, #tpu.memory_space<vmem>>, vector<1x128xf32>
    %271 = vector.extract_strided_slice %270 {offsets = [0, 0], sizes = [1, 96], strides = [1, 1]} : vector<1x128xf32> to vector<1x96xf32>
    %272 = vector.broadcast %271 : vector<1x96xf32> to vector<8x96xf32>
    %273 = arith.addf %269, %272 : vector<8x96xf32>
    %274 = vector.extract_strided_slice %273 {offsets = [0, 0], sizes = [8, 16], strides = [1, 1]} : vector<8x96xf32> to vector<8x16xf32>
    %275 = vector.extract_strided_slice %273 {offsets = [0, 32], sizes = [8, 16], strides = [1, 1]} : vector<8x96xf32> to vector<8x16xf32>
    %276 = vector.extract_strided_slice %273 {offsets = [0, 64], sizes = [8, 16], strides = [1, 1]} : vector<8x96xf32> to vector<8x16xf32>
    %cst_108 = arith.constant dense<0.000000e+00> : vector<8x8xf32>
    %277 = tpu.matmul %274, %275, %cst_108 {dimension_numbers = #tpu.dot_dimension_numbers<[1], [1], [0], [0], [0, 0, 1, 0], [], []>} : vector<8x16xf32>, vector<8x16xf32>, vector<8x8xf32> -> vector<8x8xf32>
    %cst_109 = arith.constant 2.500000e-01 : f32
    %278 = vector.broadcast %cst_109 : f32 to vector<8x8xf32>
    %279 = arith.mulf %277, %278 : vector<8x8xf32>
    %280 = vector.broadcast %132 : vector<1x8xf32> to vector<8x8xf32>
    %281 = arith.addf %279, %280 : vector<8x8xf32>
    %cst_110 = arith.constant dense<0xFF800000> : vector<8xf32>
    %282 = vector.multi_reduction <maximumf>, %281, %cst_110 [1] : vector<8x8xf32> to vector<8xf32>
    %283 = vector.shape_cast %282 : vector<8xf32> to vector<8x1xf32>
    %284 = vector.broadcast %283 : vector<8x1xf32> to vector<8x8xf32>
    %285 = arith.subf %281, %284 : vector<8x8xf32>
    %286 = math.exp %285 : vector<8x8xf32>
    %cst_111 = arith.constant dense<0.000000e+00> : vector<8xf32>
    %287 = vector.multi_reduction <add>, %286, %cst_111 [1] : vector<8x8xf32> to vector<8xf32>
    %288 = vector.shape_cast %287 : vector<8xf32> to vector<8x1xf32>
    %289 = tpu.reciprocal %288 {approx = true} : vector<8x1xf32> -> vector<8x1xf32>
    %290 = vector.broadcast %289 : vector<8x1xf32> to vector<8x8xf32>
    %291 = arith.mulf %286, %290 : vector<8x8xf32>
    %cst_112 = arith.constant dense<0.000000e+00> : vector<8x16xf32>
    %292 = tpu.matmul %291, %276, %cst_112 {dimension_numbers = #tpu.dot_dimension_numbers<[1], [0], [0], [1], [0, 0, 1, 1], [], []>} : vector<8x8xf32>, vector<8x16xf32>, vector<8x16xf32> -> vector<8x16xf32>
    %293 = vector.extract_strided_slice %273 {offsets = [0, 16], sizes = [8, 16], strides = [1, 1]} : vector<8x96xf32> to vector<8x16xf32>
    %294 = vector.extract_strided_slice %273 {offsets = [0, 48], sizes = [8, 16], strides = [1, 1]} : vector<8x96xf32> to vector<8x16xf32>
    %295 = vector.extract_strided_slice %273 {offsets = [0, 80], sizes = [8, 16], strides = [1, 1]} : vector<8x96xf32> to vector<8x16xf32>
    %cst_113 = arith.constant dense<0.000000e+00> : vector<8x8xf32>
    %296 = tpu.matmul %293, %294, %cst_113 {dimension_numbers = #tpu.dot_dimension_numbers<[1], [1], [0], [0], [0, 0, 1, 0], [], []>} : vector<8x16xf32>, vector<8x16xf32>, vector<8x8xf32> -> vector<8x8xf32>
    %cst_114 = arith.constant 2.500000e-01 : f32
    %297 = vector.broadcast %cst_114 : f32 to vector<8x8xf32>
    %298 = arith.mulf %296, %297 : vector<8x8xf32>
    %299 = vector.broadcast %132 : vector<1x8xf32> to vector<8x8xf32>
    %300 = arith.addf %298, %299 : vector<8x8xf32>
    %cst_115 = arith.constant dense<0xFF800000> : vector<8xf32>
    %301 = vector.multi_reduction <maximumf>, %300, %cst_115 [1] : vector<8x8xf32> to vector<8xf32>
    %302 = vector.shape_cast %301 : vector<8xf32> to vector<8x1xf32>
    %303 = vector.broadcast %302 : vector<8x1xf32> to vector<8x8xf32>
    %304 = arith.subf %300, %303 : vector<8x8xf32>
    %305 = math.exp %304 : vector<8x8xf32>
    %cst_116 = arith.constant dense<0.000000e+00> : vector<8xf32>
    %306 = vector.multi_reduction <add>, %305, %cst_116 [1] : vector<8x8xf32> to vector<8xf32>
    %307 = vector.shape_cast %306 : vector<8xf32> to vector<8x1xf32>
    %308 = tpu.reciprocal %307 {approx = true} : vector<8x1xf32> -> vector<8x1xf32>
    %309 = vector.broadcast %308 : vector<8x1xf32> to vector<8x8xf32>
    %310 = arith.mulf %305, %309 : vector<8x8xf32>
    %cst_117 = arith.constant dense<0.000000e+00> : vector<8x16xf32>
    %311 = tpu.matmul %310, %295, %cst_117 {dimension_numbers = #tpu.dot_dimension_numbers<[1], [0], [0], [1], [0, 0, 1, 1], [], []>} : vector<8x8xf32>, vector<8x16xf32>, vector<8x16xf32> -> vector<8x16xf32>
    %312 = tpu.concatenate %292, %311 in 1 : vector<8x16xf32>, vector<8x16xf32> -> vector<8x32xf32>
    %c286 = arith.constant 286 : index
    %c0_118 = arith.constant 0 : index
    %313 = vector.load %arg3[%c286, %c0_118] : memref<488x128xf32, #tpu.memory_space<vmem>>, vector<32x128xf32>
    %314 = vector.extract_strided_slice %313 {offsets = [0, 0], sizes = [32, 32], strides = [1, 1]} : vector<32x128xf32> to vector<32x32xf32>
    %cst_119 = arith.constant dense<0.000000e+00> : vector<8x32xf32>
    %315 = tpu.matmul %312, %314, %cst_119 {dimension_numbers = #tpu.dot_dimension_numbers<[1], [0], [0], [1], [0, 0, 1, 1], [], []>} : vector<8x32xf32>, vector<32x32xf32>, vector<8x32xf32> -> vector<8x32xf32>
    %c318 = arith.constant 318 : index
    %c0_120 = arith.constant 0 : index
    %316 = vector.load %arg3[%c318, %c0_120] : memref<488x128xf32, #tpu.memory_space<vmem>>, vector<1x128xf32>
    %317 = vector.extract_strided_slice %316 {offsets = [0, 0], sizes = [1, 32], strides = [1, 1]} : vector<1x128xf32> to vector<1x32xf32>
    %318 = vector.broadcast %317 : vector<1x32xf32> to vector<8x32xf32>
    %319 = arith.addf %315, %318 : vector<8x32xf32>
    %320 = arith.addf %266, %319 : vector<8x32xf32>
    %c319 = arith.constant 319 : index
    %c0_121 = arith.constant 0 : index
    %321 = vector.load %arg3[%c319, %c0_121] : memref<488x128xf32, #tpu.memory_space<vmem>>, vector<1x128xf32>
    %322 = vector.extract_strided_slice %321 {offsets = [0, 0], sizes = [1, 32], strides = [1, 1]} : vector<1x128xf32> to vector<1x32xf32>
    %c320 = arith.constant 320 : index
    %c0_122 = arith.constant 0 : index
    %323 = vector.load %arg3[%c320, %c0_122] : memref<488x128xf32, #tpu.memory_space<vmem>>, vector<1x128xf32>
    %324 = vector.extract_strided_slice %323 {offsets = [0, 0], sizes = [1, 32], strides = [1, 1]} : vector<1x128xf32> to vector<1x32xf32>
    %cst_123 = arith.constant dense<0.000000e+00> : vector<8xf32>
    %325 = vector.multi_reduction <add>, %320, %cst_123 [1] : vector<8x32xf32> to vector<8xf32>
    %326 = vector.shape_cast %325 : vector<8xf32> to vector<8x1xf32>
    %cst_124 = arith.constant 3.200000e+01 : f32
    %327 = vector.broadcast %cst_124 : f32 to vector<8x1xf32>
    %328 = arith.divf %326, %327 : vector<8x1xf32>
    %329 = vector.broadcast %328 : vector<8x1xf32> to vector<8x32xf32>
    %330 = arith.subf %320, %329 : vector<8x32xf32>
    %331 = arith.mulf %330, %330 : vector<8x32xf32>
    %cst_125 = arith.constant dense<0.000000e+00> : vector<8xf32>
    %332 = vector.multi_reduction <add>, %331, %cst_125 [1] : vector<8x32xf32> to vector<8xf32>
    %333 = vector.shape_cast %332 : vector<8xf32> to vector<8x1xf32>
    %cst_126 = arith.constant 3.200000e+01 : f32
    %334 = vector.broadcast %cst_126 : f32 to vector<8x1xf32>
    %335 = arith.divf %333, %334 : vector<8x1xf32>
    %336 = vector.broadcast %328 : vector<8x1xf32> to vector<8x32xf32>
    %337 = arith.subf %320, %336 : vector<8x32xf32>
    %cst_127 = arith.constant 9.99999996E-13 : f32
    %338 = vector.broadcast %cst_127 : f32 to vector<8x1xf32>
    %339 = arith.addf %335, %338 : vector<8x1xf32>
    %340 = math.rsqrt %339 : vector<8x1xf32>
    %341 = vector.broadcast %340 : vector<8x1xf32> to vector<8x32xf32>
    %342 = arith.mulf %337, %341 : vector<8x32xf32>
    %343 = vector.broadcast %322 : vector<1x32xf32> to vector<8x32xf32>
    %344 = arith.mulf %342, %343 : vector<8x32xf32>
    %345 = vector.broadcast %324 : vector<1x32xf32> to vector<8x32xf32>
    %346 = arith.addf %344, %345 : vector<8x32xf32>
    %c321 = arith.constant 321 : index
    %c0_128 = arith.constant 0 : index
    %347 = vector.load %arg3[%c321, %c0_128] : memref<488x128xf32, #tpu.memory_space<vmem>>, vector<32x128xf32>
    %348 = vector.extract_strided_slice %347 {offsets = [0, 0], sizes = [32, 64], strides = [1, 1]} : vector<32x128xf32> to vector<32x64xf32>
    %cst_129 = arith.constant dense<0.000000e+00> : vector<8x64xf32>
    %349 = tpu.matmul %346, %348, %cst_129 {dimension_numbers = #tpu.dot_dimension_numbers<[1], [0], [0], [1], [0, 0, 1, 1], [], []>} : vector<8x32xf32>, vector<32x64xf32>, vector<8x64xf32> -> vector<8x64xf32>
    %c353 = arith.constant 353 : index
    %c0_130 = arith.constant 0 : index
    %350 = vector.load %arg3[%c353, %c0_130] : memref<488x128xf32, #tpu.memory_space<vmem>>, vector<1x128xf32>
    %351 = vector.extract_strided_slice %350 {offsets = [0, 0], sizes = [1, 64], strides = [1, 1]} : vector<1x128xf32> to vector<1x64xf32>
    %352 = vector.broadcast %351 : vector<1x64xf32> to vector<8x64xf32>
    %353 = arith.addf %349, %352 : vector<8x64xf32>
    %cst_131 = arith.constant 5.000000e-01 : f32
    %354 = vector.broadcast %cst_131 : f32 to vector<8x64xf32>
    %355 = arith.mulf %354, %353 : vector<8x64xf32>
    %cst_132 = arith.constant 4.471500e-02 : f32
    %356 = vector.broadcast %cst_132 : f32 to vector<8x64xf32>
    %357 = arith.mulf %356, %353 : vector<8x64xf32>
    %358 = arith.mulf %357, %353 : vector<8x64xf32>
    %359 = arith.mulf %358, %353 : vector<8x64xf32>
    %360 = arith.addf %353, %359 : vector<8x64xf32>
    %cst_133 = arith.constant 0.797884583 : f32
    %361 = vector.broadcast %cst_133 : f32 to vector<8x64xf32>
    %362 = arith.mulf %361, %360 : vector<8x64xf32>
    %363 = math.tanh %362 : vector<8x64xf32>
    %cst_134 = arith.constant 1.000000e+00 : f32
    %364 = vector.broadcast %cst_134 : f32 to vector<8x64xf32>
    %365 = arith.addf %364, %363 : vector<8x64xf32>
    %366 = arith.mulf %355, %365 : vector<8x64xf32>
    %c354 = arith.constant 354 : index
    %c0_135 = arith.constant 0 : index
    %367 = vector.load %arg3[%c354, %c0_135] : memref<488x128xf32, #tpu.memory_space<vmem>>, vector<64x128xf32>
    %368 = vector.extract_strided_slice %367 {offsets = [0, 0], sizes = [64, 32], strides = [1, 1]} : vector<64x128xf32> to vector<64x32xf32>
    %cst_136 = arith.constant dense<0.000000e+00> : vector<8x32xf32>
    %369 = tpu.matmul %366, %368, %cst_136 {dimension_numbers = #tpu.dot_dimension_numbers<[1], [0], [0], [1], [0, 0, 1, 1], [], []>} : vector<8x64xf32>, vector<64x32xf32>, vector<8x32xf32> -> vector<8x32xf32>
    %c418 = arith.constant 418 : index
    %c0_137 = arith.constant 0 : index
    %370 = vector.load %arg3[%c418, %c0_137] : memref<488x128xf32, #tpu.memory_space<vmem>>, vector<1x128xf32>
    %371 = vector.extract_strided_slice %370 {offsets = [0, 0], sizes = [1, 32], strides = [1, 1]} : vector<1x128xf32> to vector<1x32xf32>
    %372 = vector.broadcast %371 : vector<1x32xf32> to vector<8x32xf32>
    %373 = arith.addf %369, %372 : vector<8x32xf32>
    %374 = arith.addf %346, %373 : vector<8x32xf32>
    %c419 = arith.constant 419 : index
    %c0_138 = arith.constant 0 : index
    %375 = vector.load %arg3[%c419, %c0_138] : memref<488x128xf32, #tpu.memory_space<vmem>>, vector<1x128xf32>
    %376 = vector.extract_strided_slice %375 {offsets = [0, 0], sizes = [1, 32], strides = [1, 1]} : vector<1x128xf32> to vector<1x32xf32>
    %c420 = arith.constant 420 : index
    %c0_139 = arith.constant 0 : index
    %377 = vector.load %arg3[%c420, %c0_139] : memref<488x128xf32, #tpu.memory_space<vmem>>, vector<1x128xf32>
    %378 = vector.extract_strided_slice %377 {offsets = [0, 0], sizes = [1, 32], strides = [1, 1]} : vector<1x128xf32> to vector<1x32xf32>
    %cst_140 = arith.constant dense<0.000000e+00> : vector<8xf32>
    %379 = vector.multi_reduction <add>, %374, %cst_140 [1] : vector<8x32xf32> to vector<8xf32>
    %380 = vector.shape_cast %379 : vector<8xf32> to vector<8x1xf32>
    %cst_141 = arith.constant 3.200000e+01 : f32
    %381 = vector.broadcast %cst_141 : f32 to vector<8x1xf32>
    %382 = arith.divf %380, %381 : vector<8x1xf32>
    %383 = vector.broadcast %382 : vector<8x1xf32> to vector<8x32xf32>
    %384 = arith.subf %374, %383 : vector<8x32xf32>
    %385 = arith.mulf %384, %384 : vector<8x32xf32>
    %cst_142 = arith.constant dense<0.000000e+00> : vector<8xf32>
    %386 = vector.multi_reduction <add>, %385, %cst_142 [1] : vector<8x32xf32> to vector<8xf32>
    %387 = vector.shape_cast %386 : vector<8xf32> to vector<8x1xf32>
    %cst_143 = arith.constant 3.200000e+01 : f32
    %388 = vector.broadcast %cst_143 : f32 to vector<8x1xf32>
    %389 = arith.divf %387, %388 : vector<8x1xf32>
    %390 = vector.broadcast %382 : vector<8x1xf32> to vector<8x32xf32>
    %391 = arith.subf %374, %390 : vector<8x32xf32>
    %cst_144 = arith.constant 9.99999996E-13 : f32
    %392 = vector.broadcast %cst_144 : f32 to vector<8x1xf32>
    %393 = arith.addf %389, %392 : vector<8x1xf32>
    %394 = math.rsqrt %393 : vector<8x1xf32>
    %395 = vector.broadcast %394 : vector<8x1xf32> to vector<8x32xf32>
    %396 = arith.mulf %391, %395 : vector<8x32xf32>
    %397 = vector.broadcast %376 : vector<1x32xf32> to vector<8x32xf32>
    %398 = arith.mulf %396, %397 : vector<8x32xf32>
    %399 = vector.broadcast %378 : vector<1x32xf32> to vector<8x32xf32>
    %400 = arith.addf %398, %399 : vector<8x32xf32>
    %401 = vector.extract_strided_slice %400 {offsets = [0, 0], sizes = [1, 32], strides = [1, 1]} : vector<8x32xf32> to vector<1x32xf32>
    %c421 = arith.constant 421 : index
    %c0_145 = arith.constant 0 : index
    %402 = vector.load %arg3[%c421, %c0_145] : memref<488x128xf32, #tpu.memory_space<vmem>>, vector<32x128xf32>
    %403 = vector.extract_strided_slice %402 {offsets = [0, 0], sizes = [32, 32], strides = [1, 1]} : vector<32x128xf32> to vector<32x32xf32>
    %cst_146 = arith.constant dense<0.000000e+00> : vector<1x32xf32>
    %404 = tpu.matmul %401, %403, %cst_146 {dimension_numbers = #tpu.dot_dimension_numbers<[1], [0], [0], [1], [0, 0, 1, 1], [], []>} : vector<1x32xf32>, vector<32x32xf32>, vector<1x32xf32> -> vector<1x32xf32>
    %c453 = arith.constant 453 : index
    %c0_147 = arith.constant 0 : index
    %405 = vector.load %arg3[%c453, %c0_147] : memref<488x128xf32, #tpu.memory_space<vmem>>, vector<1x128xf32>
    %406 = vector.extract_strided_slice %405 {offsets = [0, 0], sizes = [1, 32], strides = [1, 1]} : vector<1x128xf32> to vector<1x32xf32>
    %407 = arith.addf %404, %406 : vector<1x32xf32>
    %408 = math.tanh %407 : vector<1x32xf32>
    %c454 = arith.constant 454 : index
    %c0_148 = arith.constant 0 : index
    %409 = vector.load %arg3[%c454, %c0_148] : memref<488x128xf32, #tpu.memory_space<vmem>>, vector<32x128xf32>
    %cst_149 = arith.constant dense<0.000000e+00> : vector<1x128xf32>
    %410 = tpu.matmul %408, %409, %cst_149 {dimension_numbers = #tpu.dot_dimension_numbers<[1], [0], [0], [1], [0, 0, 1, 1], [], []>} : vector<1x32xf32>, vector<32x128xf32>, vector<1x128xf32> -> vector<1x128xf32>
    %c486 = arith.constant 486 : index
    %c0_150 = arith.constant 0 : index
    %411 = vector.load %arg3[%c486, %c0_150] : memref<488x128xf32, #tpu.memory_space<vmem>>, vector<1x128xf32>
    %412 = arith.addf %410, %411 : vector<1x128xf32>
    %c0_151 = arith.constant 0 : index
    %c0_152 = arith.constant 0 : index
    %413 = vector.load %arg4[%c0_151, %c0_152] : memref<2x128xf32, #tpu.memory_space<vmem>>, vector<1x128xf32>
    tpu.vector_store %arg4[%c0_151, %c0_152], %412 {strides = array<i32>} : memref<2x128xf32, #tpu.memory_space<vmem>>, vector<1x128xf32>,
    %c1_153 = arith.constant 1 : index
    %c0_154 = arith.constant 0 : index
    %414 = memref.load %arg1[%c1_153, %c0_154] : memref<2x8xi32, #tpu.memory_space<smem>>
    %c0_i32_155 = arith.constant 0 : i32
    %415 = arith.addi %c0_i32_155, %414 : i32
    %416 = arith.index_cast %415 : i32 to index
    %c0_156 = arith.constant 0 : index
    %417 = vector.load %arg3[%416, %c0_156] : memref<488x128xf32, #tpu.memory_space<vmem>>, vector<1x128xf32>
    %c1_157 = arith.constant 1 : index
    %c1_158 = arith.constant 1 : index
    %418 = memref.load %arg1[%c1_157, %c1_158] : memref<2x8xi32, #tpu.memory_space<smem>>
    %c0_i32_159 = arith.constant 0 : i32
    %419 = arith.addi %c0_i32_159, %418 : i32
    %420 = arith.index_cast %419 : i32 to index
    %c0_160 = arith.constant 0 : index
    %421 = vector.load %arg3[%420, %c0_160] : memref<488x128xf32, #tpu.memory_space<vmem>>, vector<1x128xf32>
    %c1_161 = arith.constant 1 : index
    %c2_162 = arith.constant 2 : index
    %422 = memref.load %arg1[%c1_161, %c2_162] : memref<2x8xi32, #tpu.memory_space<smem>>
    %c0_i32_163 = arith.constant 0 : i32
    %423 = arith.addi %c0_i32_163, %422 : i32
    %424 = arith.index_cast %423 : i32 to index
    %c0_164 = arith.constant 0 : index
    %425 = vector.load %arg3[%424, %c0_164] : memref<488x128xf32, #tpu.memory_space<vmem>>, vector<1x128xf32>
    %c1_165 = arith.constant 1 : index
    %c3_166 = arith.constant 3 : index
    %426 = memref.load %arg1[%c1_165, %c3_166] : memref<2x8xi32, #tpu.memory_space<smem>>
    %c0_i32_167 = arith.constant 0 : i32
    %427 = arith.addi %c0_i32_167, %426 : i32
    %428 = arith.index_cast %427 : i32 to index
    %c0_168 = arith.constant 0 : index
    %429 = vector.load %arg3[%428, %c0_168] : memref<488x128xf32, #tpu.memory_space<vmem>>, vector<1x128xf32>
    %c1_169 = arith.constant 1 : index
    %c4_170 = arith.constant 4 : index
    %430 = memref.load %arg1[%c1_169, %c4_170] : memref<2x8xi32, #tpu.memory_space<smem>>
    %c0_i32_171 = arith.constant 0 : i32
    %431 = arith.addi %c0_i32_171, %430 : i32
    %432 = arith.index_cast %431 : i32 to index
    %c0_172 = arith.constant 0 : index
    %433 = vector.load %arg3[%432, %c0_172] : memref<488x128xf32, #tpu.memory_space<vmem>>, vector<1x128xf32>
    %c1_173 = arith.constant 1 : index
    %c5_174 = arith.constant 5 : index
    %434 = memref.load %arg1[%c1_173, %c5_174] : memref<2x8xi32, #tpu.memory_space<smem>>
    %c0_i32_175 = arith.constant 0 : i32
    %435 = arith.addi %c0_i32_175, %434 : i32
    %436 = arith.index_cast %435 : i32 to index
    %c0_176 = arith.constant 0 : index
    %437 = vector.load %arg3[%436, %c0_176] : memref<488x128xf32, #tpu.memory_space<vmem>>, vector<1x128xf32>
    %c1_177 = arith.constant 1 : index
    %c6_178 = arith.constant 6 : index
    %438 = memref.load %arg1[%c1_177, %c6_178] : memref<2x8xi32, #tpu.memory_space<smem>>
    %c0_i32_179 = arith.constant 0 : i32
    %439 = arith.addi %c0_i32_179, %438 : i32
    %440 = arith.index_cast %439 : i32 to index
    %c0_180 = arith.constant 0 : index
    %441 = vector.load %arg3[%440, %c0_180] : memref<488x128xf32, #tpu.memory_space<vmem>>, vector<1x128xf32>
    %c1_181 = arith.constant 1 : index
    %c7_182 = arith.constant 7 : index
    %442 = memref.load %arg1[%c1_181, %c7_182] : memref<2x8xi32, #tpu.memory_space<smem>>
    %c0_i32_183 = arith.constant 0 : i32
    %443 = arith.addi %c0_i32_183, %442 : i32
    %444 = arith.index_cast %443 : i32 to index
    %c0_184 = arith.constant 0 : index
    %445 = vector.load %arg3[%444, %c0_184] : memref<488x128xf32, #tpu.memory_space<vmem>>, vector<1x128xf32>
    %446 = tpu.concatenate %417, %421, %425, %429, %433, %437, %441, %445 in 0 : vector<1x128xf32>, vector<1x128xf32>, vector<1x128xf32>, vector<1x128xf32>, vector<1x128xf32>, vector<1x128xf32>, vector<1x128xf32>, vector<1x128xf32> -> vector<8x128xf32>
    %447 = vector.extract_strided_slice %446 {offsets = [0, 0], sizes = [8, 32], strides = [1, 1]} : vector<8x128xf32> to vector<8x32xf32>
    %448 = arith.addf %447, %5 : vector<8x32xf32>
    %449 = vector.broadcast %7 : vector<1x32xf32> to vector<8x32xf32>
    %450 = arith.addf %448, %449 : vector<8x32xf32>
    %cst_185 = arith.constant dense<0.000000e+00> : vector<8xf32>
    %451 = vector.multi_reduction <add>, %450, %cst_185 [1] : vector<8x32xf32> to vector<8xf32>
    %452 = vector.shape_cast %451 : vector<8xf32> to vector<8x1xf32>
    %cst_186 = arith.constant 3.200000e+01 : f32
    %453 = vector.broadcast %cst_186 : f32 to vector<8x1xf32>
    %454 = arith.divf %452, %453 : vector<8x1xf32>
    %455 = vector.broadcast %454 : vector<8x1xf32> to vector<8x32xf32>
    %456 = arith.subf %450, %455 : vector<8x32xf32>
    %457 = arith.mulf %456, %456 : vector<8x32xf32>
    %cst_187 = arith.constant dense<0.000000e+00> : vector<8xf32>
    %458 = vector.multi_reduction <add>, %457, %cst_187 [1] : vector<8x32xf32> to vector<8xf32>
    %459 = vector.shape_cast %458 : vector<8xf32> to vector<8x1xf32>
    %cst_188 = arith.constant 3.200000e+01 : f32
    %460 = vector.broadcast %cst_188 : f32 to vector<8x1xf32>
    %461 = arith.divf %459, %460 : vector<8x1xf32>
    %462 = vector.broadcast %454 : vector<8x1xf32> to vector<8x32xf32>
    %463 = arith.subf %450, %462 : vector<8x32xf32>
    %cst_189 = arith.constant 9.99999996E-13 : f32
    %464 = vector.broadcast %cst_189 : f32 to vector<8x1xf32>
    %465 = arith.addf %461, %464 : vector<8x1xf32>
    %466 = math.rsqrt %465 : vector<8x1xf32>
    %467 = vector.broadcast %466 : vector<8x1xf32> to vector<8x32xf32>
    %468 = arith.mulf %463, %467 : vector<8x32xf32>
    %469 = vector.broadcast %1 : vector<1x32xf32> to vector<8x32xf32>
    %470 = arith.mulf %468, %469 : vector<8x32xf32>
    %471 = vector.broadcast %3 : vector<1x32xf32> to vector<8x32xf32>
    %472 = arith.addf %470, %471 : vector<8x32xf32>
    %cst_190 = arith.constant 0.000000e+00 : f32
    %473 = vector.broadcast %cst_190 : f32 to vector<1x8xf32>
    %c1_191 = arith.constant 1 : index
    %c0_192 = arith.constant 0 : index
    %474 = memref.load %arg2[%c1_191, %c0_192] : memref<2x8xi32, #tpu.memory_space<smem>>
    %c0_i32_193 = arith.constant 0 : i32
    %475 = arith.cmpi eq, %474, %c0_i32_193 : i32
    %c0_i32_194 = arith.constant 0 : i32
    %476 = vector.broadcast %c0_i32_194 : i32 to vector<1x8xi32>
    %477 = arith.cmpi eq, %8, %476 : vector<1x8xi32>
    %478 = vector.broadcast %475 : i1 to vector<1x8xi1>
    %479 = arith.andi %477, %478 : vector<1x8xi1>
    %cst_195 = arith.constant -1.000000e+04 : f32
    %480 = vector.broadcast %cst_195 : f32 to vector<1x8xf32>
    %481 = arith.select %479, %480, %473 : vector<1x8xi1>, vector<1x8xf32>
    %c1_196 = arith.constant 1 : index
    %c1_197 = arith.constant 1 : index
    %482 = memref.load %arg2[%c1_196, %c1_197] : memref<2x8xi32, #tpu.memory_space<smem>>
    %c0_i32_198 = arith.constant 0 : i32
    %483 = arith.cmpi eq, %482, %c0_i32_198 : i32
    %c1_i32_199 = arith.constant 1 : i32
    %484 = vector.broadcast %c1_i32_199 : i32 to vector<1x8xi32>
    %485 = arith.cmpi eq, %8, %484 : vector<1x8xi32>
    %486 = vector.broadcast %483 : i1 to vector<1x8xi1>
    %487 = arith.andi %485, %486 : vector<1x8xi1>
    %cst_200 = arith.constant -1.000000e+04 : f32
    %488 = vector.broadcast %cst_200 : f32 to vector<1x8xf32>
    %489 = arith.select %487, %488, %481 : vector<1x8xi1>, vector<1x8xf32>
    %c1_201 = arith.constant 1 : index
    %c2_202 = arith.constant 2 : index
    %490 = memref.load %arg2[%c1_201, %c2_202] : memref<2x8xi32, #tpu.memory_space<smem>>
    %c0_i32_203 = arith.constant 0 : i32
    %491 = arith.cmpi eq, %490, %c0_i32_203 : i32
    %c2_i32_204 = arith.constant 2 : i32
    %492 = vector.broadcast %c2_i32_204 : i32 to vector<1x8xi32>
    %493 = arith.cmpi eq, %8, %492 : vector<1x8xi32>
    %494 = vector.broadcast %491 : i1 to vector<1x8xi1>
    %495 = arith.andi %493, %494 : vector<1x8xi1>
    %cst_205 = arith.constant -1.000000e+04 : f32
    %496 = vector.broadcast %cst_205 : f32 to vector<1x8xf32>
    %497 = arith.select %495, %496, %489 : vector<1x8xi1>, vector<1x8xf32>
    %c1_206 = arith.constant 1 : index
    %c3_207 = arith.constant 3 : index
    %498 = memref.load %arg2[%c1_206, %c3_207] : memref<2x8xi32, #tpu.memory_space<smem>>
    %c0_i32_208 = arith.constant 0 : i32
    %499 = arith.cmpi eq, %498, %c0_i32_208 : i32
    %c3_i32_209 = arith.constant 3 : i32
    %500 = vector.broadcast %c3_i32_209 : i32 to vector<1x8xi32>
    %501 = arith.cmpi eq, %8, %500 : vector<1x8xi32>
    %502 = vector.broadcast %499 : i1 to vector<1x8xi1>
    %503 = arith.andi %501, %502 : vector<1x8xi1>
    %cst_210 = arith.constant -1.000000e+04 : f32
    %504 = vector.broadcast %cst_210 : f32 to vector<1x8xf32>
    %505 = arith.select %503, %504, %497 : vector<1x8xi1>, vector<1x8xf32>
    %c1_211 = arith.constant 1 : index
    %c4_212 = arith.constant 4 : index
    %506 = memref.load %arg2[%c1_211, %c4_212] : memref<2x8xi32, #tpu.memory_space<smem>>
    %c0_i32_213 = arith.constant 0 : i32
    %507 = arith.cmpi eq, %506, %c0_i32_213 : i32
    %c4_i32_214 = arith.constant 4 : i32
    %508 = vector.broadcast %c4_i32_214 : i32 to vector<1x8xi32>
    %509 = arith.cmpi eq, %8, %508 : vector<1x8xi32>
    %510 = vector.broadcast %507 : i1 to vector<1x8xi1>
    %511 = arith.andi %509, %510 : vector<1x8xi1>
    %cst_215 = arith.constant -1.000000e+04 : f32
    %512 = vector.broadcast %cst_215 : f32 to vector<1x8xf32>
    %513 = arith.select %511, %512, %505 : vector<1x8xi1>, vector<1x8xf32>
    %c1_216 = arith.constant 1 : index
    %c5_217 = arith.constant 5 : index
    %514 = memref.load %arg2[%c1_216, %c5_217] : memref<2x8xi32, #tpu.memory_space<smem>>
    %c0_i32_218 = arith.constant 0 : i32
    %515 = arith.cmpi eq, %514, %c0_i32_218 : i32
    %c5_i32_219 = arith.constant 5 : i32
    %516 = vector.broadcast %c5_i32_219 : i32 to vector<1x8xi32>
    %517 = arith.cmpi eq, %8, %516 : vector<1x8xi32>
    %518 = vector.broadcast %515 : i1 to vector<1x8xi1>
    %519 = arith.andi %517, %518 : vector<1x8xi1>
    %cst_220 = arith.constant -1.000000e+04 : f32
    %520 = vector.broadcast %cst_220 : f32 to vector<1x8xf32>
    %521 = arith.select %519, %520, %513 : vector<1x8xi1>, vector<1x8xf32>
    %c1_221 = arith.constant 1 : index
    %c6_222 = arith.constant 6 : index
    %522 = memref.load %arg2[%c1_221, %c6_222] : memref<2x8xi32, #tpu.memory_space<smem>>
    %c0_i32_223 = arith.constant 0 : i32
    %523 = arith.cmpi eq, %522, %c0_i32_223 : i32
    %c6_i32_224 = arith.constant 6 : i32
    %524 = vector.broadcast %c6_i32_224 : i32 to vector<1x8xi32>
    %525 = arith.cmpi eq, %8, %524 : vector<1x8xi32>
    %526 = vector.broadcast %523 : i1 to vector<1x8xi1>
    %527 = arith.andi %525, %526 : vector<1x8xi1>
    %cst_225 = arith.constant -1.000000e+04 : f32
    %528 = vector.broadcast %cst_225 : f32 to vector<1x8xf32>
    %529 = arith.select %527, %528, %521 : vector<1x8xi1>, vector<1x8xf32>
    %c1_226 = arith.constant 1 : index
    %c7_227 = arith.constant 7 : index
    %530 = memref.load %arg2[%c1_226, %c7_227] : memref<2x8xi32, #tpu.memory_space<smem>>
    %c0_i32_228 = arith.constant 0 : i32
    %531 = arith.cmpi eq, %530, %c0_i32_228 : i32
    %c7_i32_229 = arith.constant 7 : i32
    %532 = vector.broadcast %c7_i32_229 : i32 to vector<1x8xi32>
    %533 = arith.cmpi eq, %8, %532 : vector<1x8xi32>
    %534 = vector.broadcast %531 : i1 to vector<1x8xi1>
    %535 = arith.andi %533, %534 : vector<1x8xi1>
    %cst_230 = arith.constant -1.000000e+04 : f32
    %536 = vector.broadcast %cst_230 : f32 to vector<1x8xf32>
    %537 = arith.select %535, %536, %529 : vector<1x8xi1>, vector<1x8xf32>
    %c85_231 = arith.constant 85 : index
    %c0_232 = arith.constant 0 : index
    %538 = vector.load %arg3[%c85_231, %c0_232] : memref<488x128xf32, #tpu.memory_space<vmem>>, vector<32x128xf32>
    %539 = vector.extract_strided_slice %538 {offsets = [0, 0], sizes = [32, 96], strides = [1, 1]} : vector<32x128xf32> to vector<32x96xf32>
    %cst_233 = arith.constant dense<0.000000e+00> : vector<8x96xf32>
    %540 = tpu.matmul %472, %539, %cst_233 {dimension_numbers = #tpu.dot_dimension_numbers<[1], [0], [0], [1], [0, 0, 1, 1], [], []>} : vector<8x32xf32>, vector<32x96xf32>, vector<8x96xf32> -> vector<8x96xf32>
    %c117_234 = arith.constant 117 : index
    %c0_235 = arith.constant 0 : index
    %541 = vector.load %arg3[%c117_234, %c0_235] : memref<488x128xf32, #tpu.memory_space<vmem>>, vector<1x128xf32>
    %542 = vector.extract_strided_slice %541 {offsets = [0, 0], sizes = [1, 96], strides = [1, 1]} : vector<1x128xf32> to vector<1x96xf32>
    %543 = vector.broadcast %542 : vector<1x96xf32> to vector<8x96xf32>
    %544 = arith.addf %540, %543 : vector<8x96xf32>
    %545 = vector.extract_strided_slice %544 {offsets = [0, 0], sizes = [8, 16], strides = [1, 1]} : vector<8x96xf32> to vector<8x16xf32>
    %546 = vector.extract_strided_slice %544 {offsets = [0, 32], sizes = [8, 16], strides = [1, 1]} : vector<8x96xf32> to vector<8x16xf32>
    %547 = vector.extract_strided_slice %544 {offsets = [0, 64], sizes = [8, 16], strides = [1, 1]} : vector<8x96xf32> to vector<8x16xf32>
    %cst_236 = arith.constant dense<0.000000e+00> : vector<8x8xf32>
    %548 = tpu.matmul %545, %546, %cst_236 {dimension_numbers = #tpu.dot_dimension_numbers<[1], [1], [0], [0], [0, 0, 1, 0], [], []>} : vector<8x16xf32>, vector<8x16xf32>, vector<8x8xf32> -> vector<8x8xf32>
    %cst_237 = arith.constant 2.500000e-01 : f32
    %549 = vector.broadcast %cst_237 : f32 to vector<8x8xf32>
    %550 = arith.mulf %548, %549 : vector<8x8xf32>
    %551 = vector.broadcast %537 : vector<1x8xf32> to vector<8x8xf32>
    %552 = arith.addf %550, %551 : vector<8x8xf32>
    %cst_238 = arith.constant dense<0xFF800000> : vector<8xf32>
    %553 = vector.multi_reduction <maximumf>, %552, %cst_238 [1] : vector<8x8xf32> to vector<8xf32>
    %554 = vector.shape_cast %553 : vector<8xf32> to vector<8x1xf32>
    %555 = vector.broadcast %554 : vector<8x1xf32> to vector<8x8xf32>
    %556 = arith.subf %552, %555 : vector<8x8xf32>
    %557 = math.exp %556 : vector<8x8xf32>
    %cst_239 = arith.constant dense<0.000000e+00> : vector<8xf32>
    %558 = vector.multi_reduction <add>, %557, %cst_239 [1] : vector<8x8xf32> to vector<8xf32>
    %559 = vector.shape_cast %558 : vector<8xf32> to vector<8x1xf32>
    %560 = tpu.reciprocal %559 {approx = true} : vector<8x1xf32> -> vector<8x1xf32>
    %561 = vector.broadcast %560 : vector<8x1xf32> to vector<8x8xf32>
    %562 = arith.mulf %557, %561 : vector<8x8xf32>
    %cst_240 = arith.constant dense<0.000000e+00> : vector<8x16xf32>
    %563 = tpu.matmul %562, %547, %cst_240 {dimension_numbers = #tpu.dot_dimension_numbers<[1], [0], [0], [1], [0, 0, 1, 1], [], []>} : vector<8x8xf32>, vector<8x16xf32>, vector<8x16xf32> -> vector<8x16xf32>
    %564 = vector.extract_strided_slice %544 {offsets = [0, 16], sizes = [8, 16], strides = [1, 1]} : vector<8x96xf32> to vector<8x16xf32>
    %565 = vector.extract_strided_slice %544 {offsets = [0, 48], sizes = [8, 16], strides = [1, 1]} : vector<8x96xf32> to vector<8x16xf32>
    %566 = vector.extract_strided_slice %544 {offsets = [0, 80], sizes = [8, 16], strides = [1, 1]} : vector<8x96xf32> to vector<8x16xf32>
    %cst_241 = arith.constant dense<0.000000e+00> : vector<8x8xf32>
    %567 = tpu.matmul %564, %565, %cst_241 {dimension_numbers = #tpu.dot_dimension_numbers<[1], [1], [0], [0], [0, 0, 1, 0], [], []>} : vector<8x16xf32>, vector<8x16xf32>, vector<8x8xf32> -> vector<8x8xf32>
    %cst_242 = arith.constant 2.500000e-01 : f32
    %568 = vector.broadcast %cst_242 : f32 to vector<8x8xf32>
    %569 = arith.mulf %567, %568 : vector<8x8xf32>
    %570 = vector.broadcast %537 : vector<1x8xf32> to vector<8x8xf32>
    %571 = arith.addf %569, %570 : vector<8x8xf32>
    %cst_243 = arith.constant dense<0xFF800000> : vector<8xf32>
    %572 = vector.multi_reduction <maximumf>, %571, %cst_243 [1] : vector<8x8xf32> to vector<8xf32>
    %573 = vector.shape_cast %572 : vector<8xf32> to vector<8x1xf32>
    %574 = vector.broadcast %573 : vector<8x1xf32> to vector<8x8xf32>
    %575 = arith.subf %571, %574 : vector<8x8xf32>
    %576 = math.exp %575 : vector<8x8xf32>
    %cst_244 = arith.constant dense<0.000000e+00> : vector<8xf32>
    %577 = vector.multi_reduction <add>, %576, %cst_244 [1] : vector<8x8xf32> to vector<8xf32>
    %578 = vector.shape_cast %577 : vector<8xf32> to vector<8x1xf32>
    %579 = tpu.reciprocal %578 {approx = true} : vector<8x1xf32> -> vector<8x1xf32>
    %580 = vector.broadcast %579 : vector<8x1xf32> to vector<8x8xf32>
    %581 = arith.mulf %576, %580 : vector<8x8xf32>
    %cst_245 = arith.constant dense<0.000000e+00> : vector<8x16xf32>
    %582 = tpu.matmul %581, %566, %cst_245 {dimension_numbers = #tpu.dot_dimension_numbers<[1], [0], [0], [1], [0, 0, 1, 1], [], []>} : vector<8x8xf32>, vector<8x16xf32>, vector<8x16xf32> -> vector<8x16xf32>
    %583 = tpu.concatenate %563, %582 in 1 : vector<8x16xf32>, vector<8x16xf32> -> vector<8x32xf32>
    %c118_246 = arith.constant 118 : index
    %c0_247 = arith.constant 0 : index
    %584 = vector.load %arg3[%c118_246, %c0_247] : memref<488x128xf32, #tpu.memory_space<vmem>>, vector<32x128xf32>
    %585 = vector.extract_strided_slice %584 {offsets = [0, 0], sizes = [32, 32], strides = [1, 1]} : vector<32x128xf32> to vector<32x32xf32>
    %cst_248 = arith.constant dense<0.000000e+00> : vector<8x32xf32>
    %586 = tpu.matmul %583, %585, %cst_248 {dimension_numbers = #tpu.dot_dimension_numbers<[1], [0], [0], [1], [0, 0, 1, 1], [], []>} : vector<8x32xf32>, vector<32x32xf32>, vector<8x32xf32> -> vector<8x32xf32>
    %c150_249 = arith.constant 150 : index
    %c0_250 = arith.constant 0 : index
    %587 = vector.load %arg3[%c150_249, %c0_250] : memref<488x128xf32, #tpu.memory_space<vmem>>, vector<1x128xf32>
    %588 = vector.extract_strided_slice %587 {offsets = [0, 0], sizes = [1, 32], strides = [1, 1]} : vector<1x128xf32> to vector<1x32xf32>
    %589 = vector.broadcast %588 : vector<1x32xf32> to vector<8x32xf32>
    %590 = arith.addf %586, %589 : vector<8x32xf32>
    %591 = arith.addf %472, %590 : vector<8x32xf32>
    %c151_251 = arith.constant 151 : index
    %c0_252 = arith.constant 0 : index
    %592 = vector.load %arg3[%c151_251, %c0_252] : memref<488x128xf32, #tpu.memory_space<vmem>>, vector<1x128xf32>
    %593 = vector.extract_strided_slice %592 {offsets = [0, 0], sizes = [1, 32], strides = [1, 1]} : vector<1x128xf32> to vector<1x32xf32>
    %c152_253 = arith.constant 152 : index
    %c0_254 = arith.constant 0 : index
    %594 = vector.load %arg3[%c152_253, %c0_254] : memref<488x128xf32, #tpu.memory_space<vmem>>, vector<1x128xf32>
    %595 = vector.extract_strided_slice %594 {offsets = [0, 0], sizes = [1, 32], strides = [1, 1]} : vector<1x128xf32> to vector<1x32xf32>
    %cst_255 = arith.constant dense<0.000000e+00> : vector<8xf32>
    %596 = vector.multi_reduction <add>, %591, %cst_255 [1] : vector<8x32xf32> to vector<8xf32>
    %597 = vector.shape_cast %596 : vector<8xf32> to vector<8x1xf32>
    %cst_256 = arith.constant 3.200000e+01 : f32
    %598 = vector.broadcast %cst_256 : f32 to vector<8x1xf32>
    %599 = arith.divf %597, %598 : vector<8x1xf32>
    %600 = vector.broadcast %599 : vector<8x1xf32> to vector<8x32xf32>
    %601 = arith.subf %591, %600 : vector<8x32xf32>
    %602 = arith.mulf %601, %601 : vector<8x32xf32>
    %cst_257 = arith.constant dense<0.000000e+00> : vector<8xf32>
    %603 = vector.multi_reduction <add>, %602, %cst_257 [1] : vector<8x32xf32> to vector<8xf32>
    %604 = vector.shape_cast %603 : vector<8xf32> to vector<8x1xf32>
    %cst_258 = arith.constant 3.200000e+01 : f32
    %605 = vector.broadcast %cst_258 : f32 to vector<8x1xf32>
    %606 = arith.divf %604, %605 : vector<8x1xf32>
    %607 = vector.broadcast %599 : vector<8x1xf32> to vector<8x32xf32>
    %608 = arith.subf %591, %607 : vector<8x32xf32>
    %cst_259 = arith.constant 9.99999996E-13 : f32
    %609 = vector.broadcast %cst_259 : f32 to vector<8x1xf32>
    %610 = arith.addf %606, %609 : vector<8x1xf32>
    %611 = math.rsqrt %610 : vector<8x1xf32>
    %612 = vector.broadcast %611 : vector<8x1xf32> to vector<8x32xf32>
    %613 = arith.mulf %608, %612 : vector<8x32xf32>
    %614 = vector.broadcast %593 : vector<1x32xf32> to vector<8x32xf32>
    %615 = arith.mulf %613, %614 : vector<8x32xf32>
    %616 = vector.broadcast %595 : vector<1x32xf32> to vector<8x32xf32>
    %617 = arith.addf %615, %616 : vector<8x32xf32>
    %c153_260 = arith.constant 153 : index
    %c0_261 = arith.constant 0 : index
    %618 = vector.load %arg3[%c153_260, %c0_261] : memref<488x128xf32, #tpu.memory_space<vmem>>, vector<32x128xf32>
    %619 = vector.extract_strided_slice %618 {offsets = [0, 0], sizes = [32, 64], strides = [1, 1]} : vector<32x128xf32> to vector<32x64xf32>
    %cst_262 = arith.constant dense<0.000000e+00> : vector<8x64xf32>
    %620 = tpu.matmul %617, %619, %cst_262 {dimension_numbers = #tpu.dot_dimension_numbers<[1], [0], [0], [1], [0, 0, 1, 1], [], []>} : vector<8x32xf32>, vector<32x64xf32>, vector<8x64xf32> -> vector<8x64xf32>
    %c185_263 = arith.constant 185 : index
    %c0_264 = arith.constant 0 : index
    %621 = vector.load %arg3[%c185_263, %c0_264] : memref<488x128xf32, #tpu.memory_space<vmem>>, vector<1x128xf32>
    %622 = vector.extract_strided_slice %621 {offsets = [0, 0], sizes = [1, 64], strides = [1, 1]} : vector<1x128xf32> to vector<1x64xf32>
    %623 = vector.broadcast %622 : vector<1x64xf32> to vector<8x64xf32>
    %624 = arith.addf %620, %623 : vector<8x64xf32>
    %cst_265 = arith.constant 5.000000e-01 : f32
    %625 = vector.broadcast %cst_265 : f32 to vector<8x64xf32>
    %626 = arith.mulf %625, %624 : vector<8x64xf32>
    %cst_266 = arith.constant 4.471500e-02 : f32
    %627 = vector.broadcast %cst_266 : f32 to vector<8x64xf32>
    %628 = arith.mulf %627, %624 : vector<8x64xf32>
    %629 = arith.mulf %628, %624 : vector<8x64xf32>
    %630 = arith.mulf %629, %624 : vector<8x64xf32>
    %631 = arith.addf %624, %630 : vector<8x64xf32>
    %cst_267 = arith.constant 0.797884583 : f32
    %632 = vector.broadcast %cst_267 : f32 to vector<8x64xf32>
    %633 = arith.mulf %632, %631 : vector<8x64xf32>
    %634 = math.tanh %633 : vector<8x64xf32>
    %cst_268 = arith.constant 1.000000e+00 : f32
    %635 = vector.broadcast %cst_268 : f32 to vector<8x64xf32>
    %636 = arith.addf %635, %634 : vector<8x64xf32>
    %637 = arith.mulf %626, %636 : vector<8x64xf32>
    %c186_269 = arith.constant 186 : index
    %c0_270 = arith.constant 0 : index
    %638 = vector.load %arg3[%c186_269, %c0_270] : memref<488x128xf32, #tpu.memory_space<vmem>>, vector<64x128xf32>
    %639 = vector.extract_strided_slice %638 {offsets = [0, 0], sizes = [64, 32], strides = [1, 1]} : vector<64x128xf32> to vector<64x32xf32>
    %cst_271 = arith.constant dense<0.000000e+00> : vector<8x32xf32>
    %640 = tpu.matmul %637, %639, %cst_271 {dimension_numbers = #tpu.dot_dimension_numbers<[1], [0], [0], [1], [0, 0, 1, 1], [], []>} : vector<8x64xf32>, vector<64x32xf32>, vector<8x32xf32> -> vector<8x32xf32>
    %c250_272 = arith.constant 250 : index
    %c0_273 = arith.constant 0 : index
    %641 = vector.load %arg3[%c250_272, %c0_273] : memref<488x128xf32, #tpu.memory_space<vmem>>, vector<1x128xf32>
    %642 = vector.extract_strided_slice %641 {offsets = [0, 0], sizes = [1, 32], strides = [1, 1]} : vector<1x128xf32> to vector<1x32xf32>
    %643 = vector.broadcast %642 : vector<1x32xf32> to vector<8x32xf32>
    %644 = arith.addf %640, %643 : vector<8x32xf32>
    %645 = arith.addf %617, %644 : vector<8x32xf32>
    %c251_274 = arith.constant 251 : index
    %c0_275 = arith.constant 0 : index
    %646 = vector.load %arg3[%c251_274, %c0_275] : memref<488x128xf32, #tpu.memory_space<vmem>>, vector<1x128xf32>
    %647 = vector.extract_strided_slice %646 {offsets = [0, 0], sizes = [1, 32], strides = [1, 1]} : vector<1x128xf32> to vector<1x32xf32>
    %c252_276 = arith.constant 252 : index
    %c0_277 = arith.constant 0 : index
    %648 = vector.load %arg3[%c252_276, %c0_277] : memref<488x128xf32, #tpu.memory_space<vmem>>, vector<1x128xf32>
    %649 = vector.extract_strided_slice %648 {offsets = [0, 0], sizes = [1, 32], strides = [1, 1]} : vector<1x128xf32> to vector<1x32xf32>
    %cst_278 = arith.constant dense<0.000000e+00> : vector<8xf32>
    %650 = vector.multi_reduction <add>, %645, %cst_278 [1] : vector<8x32xf32> to vector<8xf32>
    %651 = vector.shape_cast %650 : vector<8xf32> to vector<8x1xf32>
    %cst_279 = arith.constant 3.200000e+01 : f32
    %652 = vector.broadcast %cst_279 : f32 to vector<8x1xf32>
    %653 = arith.divf %651, %652 : vector<8x1xf32>
    %654 = vector.broadcast %653 : vector<8x1xf32> to vector<8x32xf32>
    %655 = arith.subf %645, %654 : vector<8x32xf32>
    %656 = arith.mulf %655, %655 : vector<8x32xf32>
    %cst_280 = arith.constant dense<0.000000e+00> : vector<8xf32>
    %657 = vector.multi_reduction <add>, %656, %cst_280 [1] : vector<8x32xf32> to vector<8xf32>
    %658 = vector.shape_cast %657 : vector<8xf32> to vector<8x1xf32>
    %cst_281 = arith.constant 3.200000e+01 : f32
    %659 = vector.broadcast %cst_281 : f32 to vector<8x1xf32>
    %660 = arith.divf %658, %659 : vector<8x1xf32>
    %661 = vector.broadcast %653 : vector<8x1xf32> to vector<8x32xf32>
    %662 = arith.subf %645, %661 : vector<8x32xf32>
    %cst_282 = arith.constant 9.99999996E-13 : f32
    %663 = vector.broadcast %cst_282 : f32 to vector<8x1xf32>
    %664 = arith.addf %660, %663 : vector<8x1xf32>
    %665 = math.rsqrt %664 : vector<8x1xf32>
    %666 = vector.broadcast %665 : vector<8x1xf32> to vector<8x32xf32>
    %667 = arith.mulf %662, %666 : vector<8x32xf32>
    %668 = vector.broadcast %647 : vector<1x32xf32> to vector<8x32xf32>
    %669 = arith.mulf %667, %668 : vector<8x32xf32>
    %670 = vector.broadcast %649 : vector<1x32xf32> to vector<8x32xf32>
    %671 = arith.addf %669, %670 : vector<8x32xf32>
    %c253_283 = arith.constant 253 : index
    %c0_284 = arith.constant 0 : index
    %672 = vector.load %arg3[%c253_283, %c0_284] : memref<488x128xf32, #tpu.memory_space<vmem>>, vector<32x128xf32>
    %673 = vector.extract_strided_slice %672 {offsets = [0, 0], sizes = [32, 96], strides = [1, 1]} : vector<32x128xf32> to vector<32x96xf32>
    %cst_285 = arith.constant dense<0.000000e+00> : vector<8x96xf32>
    %674 = tpu.matmul %671, %673, %cst_285 {dimension_numbers = #tpu.dot_dimension_numbers<[1], [0], [0], [1], [0, 0, 1, 1], [], []>} : vector<8x32xf32>, vector<32x96xf32>, vector<8x96xf32> -> vector<8x96xf32>
    %c285_286 = arith.constant 285 : index
    %c0_287 = arith.constant 0 : index
    %675 = vector.load %arg3[%c285_286, %c0_287] : memref<488x128xf32, #tpu.memory_space<vmem>>, vector<1x128xf32>
    %676 = vector.extract_strided_slice %675 {offsets = [0, 0], sizes = [1, 96], strides = [1, 1]} : vector<1x128xf32> to vector<1x96xf32>
    %677 = vector.broadcast %676 : vector<1x96xf32> to vector<8x96xf32>
    %678 = arith.addf %674, %677 : vector<8x96xf32>
    %679 = vector.extract_strided_slice %678 {offsets = [0, 0], sizes = [8, 16], strides = [1, 1]} : vector<8x96xf32> to vector<8x16xf32>
    %680 = vector.extract_strided_slice %678 {offsets = [0, 32], sizes = [8, 16], strides = [1, 1]} : vector<8x96xf32> to vector<8x16xf32>
    %681 = vector.extract_strided_slice %678 {offsets = [0, 64], sizes = [8, 16], strides = [1, 1]} : vector<8x96xf32> to vector<8x16xf32>
    %cst_288 = arith.constant dense<0.000000e+00> : vector<8x8xf32>
    %682 = tpu.matmul %679, %680, %cst_288 {dimension_numbers = #tpu.dot_dimension_numbers<[1], [1], [0], [0], [0, 0, 1, 0], [], []>} : vector<8x16xf32>, vector<8x16xf32>, vector<8x8xf32> -> vector<8x8xf32>
    %cst_289 = arith.constant 2.500000e-01 : f32
    %683 = vector.broadcast %cst_289 : f32 to vector<8x8xf32>
    %684 = arith.mulf %682, %683 : vector<8x8xf32>
    %685 = vector.broadcast %537 : vector<1x8xf32> to vector<8x8xf32>
    %686 = arith.addf %684, %685 : vector<8x8xf32>
    %cst_290 = arith.constant dense<0xFF800000> : vector<8xf32>
    %687 = vector.multi_reduction <maximumf>, %686, %cst_290 [1] : vector<8x8xf32> to vector<8xf32>
    %688 = vector.shape_cast %687 : vector<8xf32> to vector<8x1xf32>
    %689 = vector.broadcast %688 : vector<8x1xf32> to vector<8x8xf32>
    %690 = arith.subf %686, %689 : vector<8x8xf32>
    %691 = math.exp %690 : vector<8x8xf32>
    %cst_291 = arith.constant dense<0.000000e+00> : vector<8xf32>
    %692 = vector.multi_reduction <add>, %691, %cst_291 [1] : vector<8x8xf32> to vector<8xf32>
    %693 = vector.shape_cast %692 : vector<8xf32> to vector<8x1xf32>
    %694 = tpu.reciprocal %693 {approx = true} : vector<8x1xf32> -> vector<8x1xf32>
    %695 = vector.broadcast %694 : vector<8x1xf32> to vector<8x8xf32>
    %696 = arith.mulf %691, %695 : vector<8x8xf32>
    %cst_292 = arith.constant dense<0.000000e+00> : vector<8x16xf32>
    %697 = tpu.matmul %696, %681, %cst_292 {dimension_numbers = #tpu.dot_dimension_numbers<[1], [0], [0], [1], [0, 0, 1, 1], [], []>} : vector<8x8xf32>, vector<8x16xf32>, vector<8x16xf32> -> vector<8x16xf32>
    %698 = vector.extract_strided_slice %678 {offsets = [0, 16], sizes = [8, 16], strides = [1, 1]} : vector<8x96xf32> to vector<8x16xf32>
    %699 = vector.extract_strided_slice %678 {offsets = [0, 48], sizes = [8, 16], strides = [1, 1]} : vector<8x96xf32> to vector<8x16xf32>
    %700 = vector.extract_strided_slice %678 {offsets = [0, 80], sizes = [8, 16], strides = [1, 1]} : vector<8x96xf32> to vector<8x16xf32>
    %cst_293 = arith.constant dense<0.000000e+00> : vector<8x8xf32>
    %701 = tpu.matmul %698, %699, %cst_293 {dimension_numbers = #tpu.dot_dimension_numbers<[1], [1], [0], [0], [0, 0, 1, 0], [], []>} : vector<8x16xf32>, vector<8x16xf32>, vector<8x8xf32> -> vector<8x8xf32>
    %cst_294 = arith.constant 2.500000e-01 : f32
    %702 = vector.broadcast %cst_294 : f32 to vector<8x8xf32>
    %703 = arith.mulf %701, %702 : vector<8x8xf32>
    %704 = vector.broadcast %537 : vector<1x8xf32> to vector<8x8xf32>
    %705 = arith.addf %703, %704 : vector<8x8xf32>
    %cst_295 = arith.constant dense<0xFF800000> : vector<8xf32>
    %706 = vector.multi_reduction <maximumf>, %705, %cst_295 [1] : vector<8x8xf32> to vector<8xf32>
    %707 = vector.shape_cast %706 : vector<8xf32> to vector<8x1xf32>
    %708 = vector.broadcast %707 : vector<8x1xf32> to vector<8x8xf32>
    %709 = arith.subf %705, %708 : vector<8x8xf32>
    %710 = math.exp %709 : vector<8x8xf32>
    %cst_296 = arith.constant dense<0.000000e+00> : vector<8xf32>
    %711 = vector.multi_reduction <add>, %710, %cst_296 [1] : vector<8x8xf32> to vector<8xf32>
    %712 = vector.shape_cast %711 : vector<8xf32> to vector<8x1xf32>
    %713 = tpu.reciprocal %712 {approx = true} : vector<8x1xf32> -> vector<8x1xf32>
    %714 = vector.broadcast %713 : vector<8x1xf32> to vector<8x8xf32>
    %715 = arith.mulf %710, %714 : vector<8x8xf32>
    %cst_297 = arith.constant dense<0.000000e+00> : vector<8x16xf32>
    %716 = tpu.matmul %715, %700, %cst_297 {dimension_numbers = #tpu.dot_dimension_numbers<[1], [0], [0], [1], [0, 0, 1, 1], [], []>} : vector<8x8xf32>, vector<8x16xf32>, vector<8x16xf32> -> vector<8x16xf32>
    %717 = tpu.concatenate %697, %716 in 1 : vector<8x16xf32>, vector<8x16xf32> -> vector<8x32xf32>
    %c286_298 = arith.constant 286 : index
    %c0_299 = arith.constant 0 : index
    %718 = vector.load %arg3[%c286_298, %c0_299] : memref<488x128xf32, #tpu.memory_space<vmem>>, vector<32x128xf32>
    %719 = vector.extract_strided_slice %718 {offsets = [0, 0], sizes = [32, 32], strides = [1, 1]} : vector<32x128xf32> to vector<32x32xf32>
    %cst_300 = arith.constant dense<0.000000e+00> : vector<8x32xf32>
    %720 = tpu.matmul %717, %719, %cst_300 {dimension_numbers = #tpu.dot_dimension_numbers<[1], [0], [0], [1], [0, 0, 1, 1], [], []>} : vector<8x32xf32>, vector<32x32xf32>, vector<8x32xf32> -> vector<8x32xf32>
    %c318_301 = arith.constant 318 : index
    %c0_302 = arith.constant 0 : index
    %721 = vector.load %arg3[%c318_301, %c0_302] : memref<488x128xf32, #tpu.memory_space<vmem>>, vector<1x128xf32>
    %722 = vector.extract_strided_slice %721 {offsets = [0, 0], sizes = [1, 32], strides = [1, 1]} : vector<1x128xf32> to vector<1x32xf32>
    %723 = vector.broadcast %722 : vector<1x32xf32> to vector<8x32xf32>
    %724 = arith.addf %720, %723 : vector<8x32xf32>
    %725 = arith.addf %671, %724 : vector<8x32xf32>
    %c319_303 = arith.constant 319 : index
    %c0_304 = arith.constant 0 : index
    %726 = vector.load %arg3[%c319_303, %c0_304] : memref<488x128xf32, #tpu.memory_space<vmem>>, vector<1x128xf32>
    %727 = vector.extract_strided_slice %726 {offsets = [0, 0], sizes = [1, 32], strides = [1, 1]} : vector<1x128xf32> to vector<1x32xf32>
    %c320_305 = arith.constant 320 : index
    %c0_306 = arith.constant 0 : index
    %728 = vector.load %arg3[%c320_305, %c0_306] : memref<488x128xf32, #tpu.memory_space<vmem>>, vector<1x128xf32>
    %729 = vector.extract_strided_slice %728 {offsets = [0, 0], sizes = [1, 32], strides = [1, 1]} : vector<1x128xf32> to vector<1x32xf32>
    %cst_307 = arith.constant dense<0.000000e+00> : vector<8xf32>
    %730 = vector.multi_reduction <add>, %725, %cst_307 [1] : vector<8x32xf32> to vector<8xf32>
    %731 = vector.shape_cast %730 : vector<8xf32> to vector<8x1xf32>
    %cst_308 = arith.constant 3.200000e+01 : f32
    %732 = vector.broadcast %cst_308 : f32 to vector<8x1xf32>
    %733 = arith.divf %731, %732 : vector<8x1xf32>
    %734 = vector.broadcast %733 : vector<8x1xf32> to vector<8x32xf32>
    %735 = arith.subf %725, %734 : vector<8x32xf32>
    %736 = arith.mulf %735, %735 : vector<8x32xf32>
    %cst_309 = arith.constant dense<0.000000e+00> : vector<8xf32>
    %737 = vector.multi_reduction <add>, %736, %cst_309 [1] : vector<8x32xf32> to vector<8xf32>
    %738 = vector.shape_cast %737 : vector<8xf32> to vector<8x1xf32>
    %cst_310 = arith.constant 3.200000e+01 : f32
    %739 = vector.broadcast %cst_310 : f32 to vector<8x1xf32>
    %740 = arith.divf %738, %739 : vector<8x1xf32>
    %741 = vector.broadcast %733 : vector<8x1xf32> to vector<8x32xf32>
    %742 = arith.subf %725, %741 : vector<8x32xf32>
    %cst_311 = arith.constant 9.99999996E-13 : f32
    %743 = vector.broadcast %cst_311 : f32 to vector<8x1xf32>
    %744 = arith.addf %740, %743 : vector<8x1xf32>
    %745 = math.rsqrt %744 : vector<8x1xf32>
    %746 = vector.broadcast %745 : vector<8x1xf32> to vector<8x32xf32>
    %747 = arith.mulf %742, %746 : vector<8x32xf32>
    %748 = vector.broadcast %727 : vector<1x32xf32> to vector<8x32xf32>
    %749 = arith.mulf %747, %748 : vector<8x32xf32>
    %750 = vector.broadcast %729 : vector<1x32xf32> to vector<8x32xf32>
    %751 = arith.addf %749, %750 : vector<8x32xf32>
    %c321_312 = arith.constant 321 : index
    %c0_313 = arith.constant 0 : index
    %752 = vector.load %arg3[%c321_312, %c0_313] : memref<488x128xf32, #tpu.memory_space<vmem>>, vector<32x128xf32>
    %753 = vector.extract_strided_slice %752 {offsets = [0, 0], sizes = [32, 64], strides = [1, 1]} : vector<32x128xf32> to vector<32x64xf32>
    %cst_314 = arith.constant dense<0.000000e+00> : vector<8x64xf32>
    %754 = tpu.matmul %751, %753, %cst_314 {dimension_numbers = #tpu.dot_dimension_numbers<[1], [0], [0], [1], [0, 0, 1, 1], [], []>} : vector<8x32xf32>, vector<32x64xf32>, vector<8x64xf32> -> vector<8x64xf32>
    %c353_315 = arith.constant 353 : index
    %c0_316 = arith.constant 0 : index
    %755 = vector.load %arg3[%c353_315, %c0_316] : memref<488x128xf32, #tpu.memory_space<vmem>>, vector<1x128xf32>
    %756 = vector.extract_strided_slice %755 {offsets = [0, 0], sizes = [1, 64], strides = [1, 1]} : vector<1x128xf32> to vector<1x64xf32>
    %757 = vector.broadcast %756 : vector<1x64xf32> to vector<8x64xf32>
    %758 = arith.addf %754, %757 : vector<8x64xf32>
    %cst_317 = arith.constant 5.000000e-01 : f32
    %759 = vector.broadcast %cst_317 : f32 to vector<8x64xf32>
    %760 = arith.mulf %759, %758 : vector<8x64xf32>
    %cst_318 = arith.constant 4.471500e-02 : f32
    %761 = vector.broadcast %cst_318 : f32 to vector<8x64xf32>
    %762 = arith.mulf %761, %758 : vector<8x64xf32>
    %763 = arith.mulf %762, %758 : vector<8x64xf32>
    %764 = arith.mulf %763, %758 : vector<8x64xf32>
    %765 = arith.addf %758, %764 : vector<8x64xf32>
    %cst_319 = arith.constant 0.797884583 : f32
    %766 = vector.broadcast %cst_319 : f32 to vector<8x64xf32>
    %767 = arith.mulf %766, %765 : vector<8x64xf32>
    %768 = math.tanh %767 : vector<8x64xf32>
    %cst_320 = arith.constant 1.000000e+00 : f32
    %769 = vector.broadcast %cst_320 : f32 to vector<8x64xf32>
    %770 = arith.addf %769, %768 : vector<8x64xf32>
    %771 = arith.mulf %760, %770 : vector<8x64xf32>
    %c354_321 = arith.constant 354 : index
    %c0_322 = arith.constant 0 : index
    %772 = vector.load %arg3[%c354_321, %c0_322] : memref<488x128xf32, #tpu.memory_space<vmem>>, vector<64x128xf32>
    %773 = vector.extract_strided_slice %772 {offsets = [0, 0], sizes = [64, 32], strides = [1, 1]} : vector<64x128xf32> to vector<64x32xf32>
    %cst_323 = arith.constant dense<0.000000e+00> : vector<8x32xf32>
    %774 = tpu.matmul %771, %773, %cst_323 {dimension_numbers = #tpu.dot_dimension_numbers<[1], [0], [0], [1], [0, 0, 1, 1], [], []>} : vector<8x64xf32>, vector<64x32xf32>, vector<8x32xf32> -> vector<8x32xf32>
    %c418_324 = arith.constant 418 : index
    %c0_325 = arith.constant 0 : index
    %775 = vector.load %arg3[%c418_324, %c0_325] : memref<488x128xf32, #tpu.memory_space<vmem>>, vector<1x128xf32>
    %776 = vector.extract_strided_slice %775 {offsets = [0, 0], sizes = [1, 32], strides = [1, 1]} : vector<1x128xf32> to vector<1x32xf32>
    %777 = vector.broadcast %776 : vector<1x32xf32> to vector<8x32xf32>
    %778 = arith.addf %774, %777 : vector<8x32xf32>
    %779 = arith.addf %751, %778 : vector<8x32xf32>
    %c419_326 = arith.constant 419 : index
    %c0_327 = arith.constant 0 : index
    %780 = vector.load %arg3[%c419_326, %c0_327] : memref<488x128xf32, #tpu.memory_space<vmem>>, vector<1x128xf32>
    %781 = vector.extract_strided_slice %780 {offsets = [0, 0], sizes = [1, 32], strides = [1, 1]} : vector<1x128xf32> to vector<1x32xf32>
    %c420_328 = arith.constant 420 : index
    %c0_329 = arith.constant 0 : index
    %782 = vector.load %arg3[%c420_328, %c0_329] : memref<488x128xf32, #tpu.memory_space<vmem>>, vector<1x128xf32>
    %783 = vector.extract_strided_slice %782 {offsets = [0, 0], sizes = [1, 32], strides = [1, 1]} : vector<1x128xf32> to vector<1x32xf32>
    %cst_330 = arith.constant dense<0.000000e+00> : vector<8xf32>
    %784 = vector.multi_reduction <add>, %779, %cst_330 [1] : vector<8x32xf32> to vector<8xf32>
    %785 = vector.shape_cast %784 : vector<8xf32> to vector<8x1xf32>
    %cst_331 = arith.constant 3.200000e+01 : f32
    %786 = vector.broadcast %cst_331 : f32 to vector<8x1xf32>
    %787 = arith.divf %785, %786 : vector<8x1xf32>
    %788 = vector.broadcast %787 : vector<8x1xf32> to vector<8x32xf32>
    %789 = arith.subf %779, %788 : vector<8x32xf32>
    %790 = arith.mulf %789, %789 : vector<8x32xf32>
    %cst_332 = arith.constant dense<0.000000e+00> : vector<8xf32>
    %791 = vector.multi_reduction <add>, %790, %cst_332 [1] : vector<8x32xf32> to vector<8xf32>
    %792 = vector.shape_cast %791 : vector<8xf32> to vector<8x1xf32>
    %cst_333 = arith.constant 3.200000e+01 : f32
    %793 = vector.broadcast %cst_333 : f32 to vector<8x1xf32>
    %794 = arith.divf %792, %793 : vector<8x1xf32>
    %795 = vector.broadcast %787 : vector<8x1xf32> to vector<8x32xf32>
    %796 = arith.subf %779, %795 : vector<8x32xf32>
    %cst_334 = arith.constant 9.99999996E-13 : f32
    %797 = vector.broadcast %cst_334 : f32 to vector<8x1xf32>
    %798 = arith.addf %794, %797 : vector<8x1xf32>
    %799 = math.rsqrt %798 : vector<8x1xf32>
    %800 = vector.broadcast %799 : vector<8x1xf32> to vector<8x32xf32>
    %801 = arith.mulf %796, %800 : vector<8x32xf32>
    %802 = vector.broadcast %781 : vector<1x32xf32> to vector<8x32xf32>
    %803 = arith.mulf %801, %802 : vector<8x32xf32>
    %804 = vector.broadcast %783 : vector<1x32xf32> to vector<8x32xf32>
    %805 = arith.addf %803, %804 : vector<8x32xf32>
    %806 = vector.extract_strided_slice %805 {offsets = [0, 0], sizes = [1, 32], strides = [1, 1]} : vector<8x32xf32> to vector<1x32xf32>
    %c421_335 = arith.constant 421 : index
    %c0_336 = arith.constant 0 : index
    %807 = vector.load %arg3[%c421_335, %c0_336] : memref<488x128xf32, #tpu.memory_space<vmem>>, vector<32x128xf32>
    %808 = vector.extract_strided_slice %807 {offsets = [0, 0], sizes = [32, 32], strides = [1, 1]} : vector<32x128xf32> to vector<32x32xf32>
    %cst_337 = arith.constant dense<0.000000e+00> : vector<1x32xf32>
    %809 = tpu.matmul %806, %808, %cst_337 {dimension_numbers = #tpu.dot_dimension_numbers<[1], [0], [0], [1], [0, 0, 1, 1], [], []>} : vector<1x32xf32>, vector<32x32xf32>, vector<1x32xf32> -> vector<1x32xf32>
    %c453_338 = arith.constant 453 : index
    %c0_339 = arith.constant 0 : index
    %810 = vector.load %arg3[%c453_338, %c0_339] : memref<488x128xf32, #tpu.memory_space<vmem>>, vector<1x128xf32>
    %811 = vector.extract_strided_slice %810 {offsets = [0, 0], sizes = [1, 32], strides = [1, 1]} : vector<1x128xf32> to vector<1x32xf32>
    %812 = arith.addf %809, %811 : vector<1x32xf32>
    %813 = math.tanh %812 : vector<1x32xf32>
    %c454_340 = arith.constant 454 : index
    %c0_341 = arith.constant 0 : index
    %814 = vector.load %arg3[%c454_340, %c0_341] : memref<488x128xf32, #tpu.memory_space<vmem>>, vector<32x128xf32>
    %cst_342 = arith.constant dense<0.000000e+00> : vector<1x128xf32>
    %815 = tpu.matmul %813, %814, %cst_342 {dimension_numbers = #tpu.dot_dimension_numbers<[1], [0], [0], [1], [0, 0, 1, 1], [], []>} : vector<1x32xf32>, vector<32x128xf32>, vector<1x128xf32> -> vector<1x128xf32>
    %c486_343 = arith.constant 486 : index
    %c0_344 = arith.constant 0 : index
    %816 = vector.load %arg3[%c486_343, %c0_344] : memref<488x128xf32, #tpu.memory_space<vmem>>, vector<1x128xf32>
    %817 = arith.addf %815, %816 : vector<1x128xf32>
    %c1_345 = arith.constant 1 : index
    %c0_346 = arith.constant 0 : index
    %818 = vector.load %arg4[%c1_345, %c0_346] : memref<2x128xf32, #tpu.memory_space<vmem>>, vector<1x128xf32>
    tpu.vector_store %arg4[%c1_345, %c0_346], %817 {strides = array<i32>} : memref<2x128xf32, #tpu.memory_space<vmem>>, vector<1x128xf32>,
    return
  }
  func.func @transform_0(%arg0: i32, %arg1: memref<2x8xi32, #tpu.memory_space<smem>>, %arg2: memref<2x8xi32, #tpu.memory_space<smem>>) -> (i32, i32) {
    %c0_i32 = arith.constant 0 : i32
    %c0_i32_0 = arith.constant 0 : i32
    %c0_i32_1 = arith.constant 0 : i32
    return %c0_i32, %c0_i32_0 : i32, i32
  }
  func.func @transform_1(%arg0: i32, %arg1: memref<2x8xi32, #tpu.memory_space<smem>>, %arg2: memref<2x8xi32, #tpu.memory_space<smem>>) -> (i32, i32) {
    %c0_i32 = arith.constant 0 : i32
    %c0_i32_0 = arith.constant 0 : i32
    %c0_i32_1 = arith.constant 0 : i32
    return %c0_i32, %c0_i32_0 : i32, i32
  }
}

</mosaic_0001>

<llo_original>
// kernel: _lambda_.1
$region0: #{_lambda_.1}
  #allocation0 [shape = 'u32[]', space=smem, size = 0x4, offset = 0x4, fixed_abs, tag = 'smem constant byte address 0x4 - core index']
  #allocation1 [shape = 'u32[72,128]{1,0:T(1,128)}', space=vmem, size = 0x9000, scoped, tag = 'internal scratch']
  #allocation2 [shape = 's32[1]{0}', space=sflag, size = 0x4, scoped, tag = 'scoped memory for _lambda_.1']
  #allocation3 [shape = 'u8[1024]{0}', space=smem, size = 0x400, scoped, tag = 'prefetched SMEM operand 0']
  #allocation4 [shape = 'u8[1024]{0}', space=smem, size = 0x400, scoped, tag = 'prefetched SMEM operand 1']
  %s0 = inlined_call_operand.hbm [shape: s32[2,8], index: 0, kind: input, shape index: {}]
  %s1 = inlined_call_operand.hbm [shape: s32[2,8], index: 1, kind: input, shape index: {}]
  %s2 = inlined_call_operand.hbm [shape: f32[488,128], index: 2, kind: input, shape index: {}]
  %s3 = inlined_call_operand.hbm [shape: f32[2,128], index: 3, kind: output, shape index: {}]
  %s4 = sld [smem:[#allocation0]]
  $region18: #{_lambda_.1} parent=0
    _
  %s6 = ssub.s32 1, %s4
  %s7 = scalar_select 0, %s6, %s4
  %s9 = sshll.u32 %s0, 4
  %s10 = int_to_ptr.hbm [resolvable:$true] %s9
  %12 = dma.hbm_to_smem %s10, 32, [#allocation3], [#allocation2]
  %s14 = sshll.u32 %s1, 4
  %s15 = int_to_ptr.hbm [resolvable:$true] %s14
  %17 = dma.hbm_to_smem %s15, 32, [#allocation4], [#allocation2]
  %19 = dma.done [#allocation2], 64
  %20 = sfence
  $region1: #{_lambda_.1} parent=0
    #allocation5 [shape = 'u8[249856]{0}', space=vmem, size = 0x3d000, scoped, tag = 'input window, operand 2, single buffered']
    #allocation6 [shape = 's32[1]{0}', space=sflag, size = 0x4, scoped, tag = 'scoped memory for _lambda_.1']
    #allocation7 [shape = 's32[1]{0}', space=sflag, size = 0x4, scoped, tag = 'scoped memory for _lambda_.1']
    #allocation8 [shape = 'u8[1024]{0}', space=vmem, size = 0x400, scoped, tag = 'output window, operand 0, single buffered']
    %21 = vsyncpa [#allocation6], 0
    %22 = vsyncpa [#allocation7], 0
    // Predicated region
    $region2: #{_lambda_.1} parent=1 // pred_check
      _
    $region3: #{_lambda_.1} parent=1 // pred_check_branch
      %24 = sbr.rel (0) target = $region5
    $region4: #{_lambda_.1} parent=1 // pred_region
      %26 = vsyncadd [#allocation6], 0
      %s27 = sshll.u32 %s2, 4
      %s28 = int_to_ptr.hbm [resolvable:$true] %s27
      %s29 = sshll.u32 [#allocation5], 4
      %s30 = int_to_ptr.vmem [resolvable:$true] %s29
      %35 = dma.hbm_to_vmem [thread:$0]  %s28, 7808, %s30, [#allocation6], 128, 128, 8
    $region5: #{_lambda_.1} parent=1 // pred_fallthru
      _
    // Predicated region
    $region6: #{_lambda_.1} parent=1 // pred_check
      _
    $region7: #{_lambda_.1} parent=1 // pred_check_branch
      %37 = sbr.rel (0) target = $region9
    $region8: #{_lambda_.1} parent=1 // pred_region
      %39 = dma.done [#allocation6], 7808
    $region9: #{_lambda_.1} parent=1 // pred_fallthru
      _
    %v40 = vld [vmem:[#allocation5 + $0x53] sm:$0x1]
    %v41 = vld [vmem:[#allocation5 + $0x54] sm:$0x1]
    %v42 = vld [vmem:[#allocation5 + $0x32] sm:$0xff]
    %v43 = vld [vmem:[#allocation5 + $0x52] sm:$0x1]
    %v44 = vlaneseq
    %v45 = vand.u32 %v44, 127
    %s46 = sld [smem:[#allocation3]]
    %s47 = scalar_lea.vmem [#allocation5], %s46
    %v48 = vld [vmem:[%s47] sm:$0x1]
    %s49 = sld [smem:[#allocation3 + $0x1]]
    %s50 = scalar_lea.vmem [#allocation5], %s49
    %v51 = vld [vmem:[%s50] sm:$0x1]
    %s52 = sld [smem:[#allocation3 + $0x2]]
    %s53 = scalar_lea.vmem [#allocation5], %s52
    %v54 = vld [vmem:[%s53] sm:$0x1]
    %s55 = sld [smem:[#allocation3 + $0x3]]
    %s56 = scalar_lea.vmem [#allocation5], %s55
    %v57 = vld [vmem:[%s56] sm:$0x1]
    %s58 = sld [smem:[#allocation3 + $0x4]]
    %s59 = scalar_lea.vmem [#allocation5], %s58
    %v60 = vld [vmem:[%s59] sm:$0x1]
    %s61 = sld [smem:[#allocation3 + $0x5]]
    %s62 = scalar_lea.vmem [#allocation5], %s61
    %v63 = vld [vmem:[%s62] sm:$0x1]
    %s64 = sld [smem:[#allocation3 + $0x6]]
    %s65 = scalar_lea.vmem [#allocation5], %s64
    %v66 = vld [vmem:[%s65] sm:$0x1]
    %s67 = sld [smem:[#allocation3 + $0x7]]
    %s68 = scalar_lea.vmem [#allocation5], %s67
    %v69 = vld [vmem:[%s68] sm:$0x1]
    %v71 = vrot.slane %v51, 7
    %v74 = vrot.slane %v54, 6
    %v77 = vrot.slane %v57, 5
    %v80 = vrot.slane %v60, 4
    %v83 = vrot.slane %v63, 3
    %v86 = vrot.slane %v66, 2
    %v89 = vrot.slane %v69, 1
    %vm91 = vcmask 1040384
    %v92 = vsel %vm91, %v48, %v71
    %vm93 = vcmask 1041408
    %v94 = vsel %vm93, %v92, %v74
    %vm95 = vcmask 1042432
    %v96 = vsel %vm95, %v94, %v77
    %vm97 = vcmask 1043456
    %v98 = vsel %vm97, %v96, %v80
    %vm99 = vcmask 1044480
    %v100 = vsel %vm99, %v98, %v83
    %vm101 = vcmask 1045504
    %v102 = vsel %vm101, %v100, %v86
    %vm103 = vcmask 1046528
    %v104 = vsel %vm103, %v102, %v89
    %v105 = vadd.f32 %v104, %v42
    %v106 = vperm.slane %v43, 0
    %v107 = vadd.f32 %v105, %v106
    %vm108 = vcmask 261120
    %v109 = vsel %vm108, %v107, 0.0
    %110 = vadd.xlane.f32.xlu0 %v109
    %v111 = vpop.xlane.xlu0 %110
    %v112 = vrcp.pop 32.0
    %v113 = vmul.f32 32.0, %v112
    %v114 = vsub.f32 1.0, %v113
    %v115 = vmul.f32 %v112, %v114
    %v116 = vadd.f32 %v112, %v115
    %vm117 = vweird.f32 %v112
    %v118 = vsel %vm117, %v112, %v116
    %v119 = vmul.f32 %v111, %v118
    %v120 = vsub.f32 %v107, %v119
    %v121 = vmul.f32 %v120, %v120
    %v122 = vsel %vm108, %v121, 0.0
    %123 = vadd.xlane.f32.xlu0 %v122
    %v124 = vpop.xlane.xlu0 %123
    %v125 = vmul.f32 %v124, %v118
    %v126 = vadd.f32 %v125, 1e-12
    %v127 = vrsqrt.pop %v126
    %v128 = vmul.f32 %v127, %v126
    %v129 = vmul.f32 %v128, %v127
    %v130 = vmul.f32 0.5, %v129
    %v131 = vsub.f32 1.5, %v130
    %v132 = vmul.f32 %v127, %v131
    %vm133 = vweird.f32 %v126
    %vm134 = vweird.f32 %v127
    %vm135 = vmor %vm133, %vm134
    %v136 = vsel %vm135, %v127, %v132
    %v137 = vmul.f32 %v120, %v136
    %v138 = vperm.slane %v40, 0
    %v139 = vmul.f32 %v137, %v138
    %v140 = vperm.slane %v41, 0
    %v141 = vadd.f32 %v139, %v140
    %s142 = sld [smem:[#allocation4]]
    %p143 = scmp.eq.s32.totalorder %s142, 0
    %vm144 = vcmp.eq.s32.totalorder %v45, 0
    %s145 = scalar_select %p143, 1, 0
    %v146 = vstv %s145
    %vm147 = vcmp.eq.s32.totalorder %v146, 1
    %vm148 = vmand %vm144, %vm147
    %v149 = vsel %vm148, -10000.0, 0.0
    %s150 = sld [smem:[#allocation4 + $0x1]]
    %p151 = scmp.eq.s32.totalorder %s150, 0
    %vm152 = vcmp.eq.s32.totalorder %v45, 1
    %s153 = scalar_select %p151, 1, 0
    %v154 = vstv %s153
    %vm155 = vcmp.eq.s32.totalorder %v154, 1
    %vm156 = vmand %vm152, %vm155
    %v157 = vsel %vm156, -10000.0, %v149
    %s158 = sld [smem:[#allocation4 + $0x2]]
    %p159 = scmp.eq.s32.totalorder %s158, 0
    %vm160 = vcmp.eq.s32.totalorder %v45, 2
    %s161 = scalar_select %p159, 1, 0
    %v162 = vstv %s161
    %vm163 = vcmp.eq.s32.totalorder %v162, 1
    %vm164 = vmand %vm160, %vm163
    %v165 = vsel %vm164, -10000.0, %v157
    %s166 = sld [smem:[#allocation4 + $0x3]]
    %p167 = scmp.eq.s32.totalorder %s166, 0
    %vm168 = vcmp.eq.s32.totalorder %v45, 3
    %s169 = scalar_select %p167, 1, 0
    %v170 = vstv %s169
    %vm171 = vcmp.eq.s32.totalorder %v170, 1
    %vm172 = vmand %vm168, %vm171
    %v173 = vsel %vm172, -10000.0, %v165
    %s174 = sld [smem:[#allocation4 + $0x4]]
    %p175 = scmp.eq.s32.totalorder %s174, 0
    %vm176 = vcmp.eq.s32.totalorder %v45, 4
    %s177 = scalar_select %p175, 1, 0
    %v178 = vstv %s177
    %vm179 = vcmp.eq.s32.totalorder %v178, 1
    %vm180 = vmand %vm176, %vm179
    %v181 = vsel %vm180, -10000.0, %v173
    %s182 = sld [smem:[#allocation4 + $0x5]]
    %p183 = scmp.eq.s32.totalorder %s182, 0
    %vm184 = vcmp.eq.s32.totalorder %v45, 5
    %s185 = scalar_select %p183, 1, 0
    %v186 = vstv %s185
    %vm187 = vcmp.eq.s32.totalorder %v186, 1
    %vm188 = vmand %vm184, %vm187
    %v189 = vsel %vm188, -10000.0, %v181
    %s190 = sld [smem:[#allocation4 + $0x6]]
    %p191 = scmp.eq.s32.totalorder %s190, 0
    %vm192 = vcmp.eq.s32.totalorder %v45, 6
    %s193 = scalar_select %p191, 1, 0
    %v194 = vstv %s193
    %vm195 = vcmp.eq.s32.totalorder %v194, 1
    %vm196 = vmand %vm192, %vm195
    %v197 = vsel %vm196, -10000.0, %v189
    %s198 = sld [smem:[#allocation4 + $0x7]]
    %p199 = scmp.eq.s32.totalorder %s198, 0
    %vm200 = vcmp.eq.s32.totalorder %v45, 7
    %s201 = scalar_select %p199, 1, 0
    %v202 = vstv %s201
    %vm203 = vcmp.eq.s32.totalorder %v202, 1
    %vm204 = vmand %vm200, %vm203
    %v205 = vsel %vm204, -10000.0, %v197
    %v206 = vld [vmem:[#allocation5 + $0x55] sm:$0xff]
    %v207 = vld [vmem:[#allocation5 + $0x5d] sm:$0xff]
    %v208 = vld [vmem:[#allocation5 + $0x65] sm:$0xff]
    %v209 = vld [vmem:[#allocation5 + $0x6d] sm:$0xff]
    %v210 = vld [vmem:[#allocation5 + $0x75] sm:$0x1]
    %v211 = vperm.slane %v210, 0
    %v213 = vsel %vm108, %v141, 0
    %215 = vmatpush.msra.mxu0 0.0
    %216 = vmatpush.msra.mxu0 0.0
    %217 = vmatpush.msra.mxu0 0.0
    %218 = vmatpush.msra.mxu0 0.0
    %219 = vmatpush.msra.mxu0 0.0
    %220 = vmatpush.msra.mxu0 0.0
    %221 = vmatpush.msra.mxu0 0.0
    %222 = vmatpush.msra.mxu0 0.0
    %223 = vmatpush.msra.mxu0 0.0
    %224 = vmatpush.msra.mxu0 0.0
    %225 = vmatpush.msra.mxu0 0.0
    %226 = vmatpush.msra.mxu0 0.0
    %227 = vmatpush.msra.mxu0 %v209
    %228 = vmatpush.msra.mxu0 %v208
    %229 = vmatpush.msra.mxu0 %v207
    %230 = vmatpush.msra.mxu0 %v206
    %231 = vmatmul.f32.gmra.mxu0 %v213
    %v232 = vpop.f32.mrf.mxu0
    %v233 = vadd.f32 %v211, %v232
    %234 = vdwg.mxu0
    %236 = vrot.lane.b32.xlu0 %v233, 96
    %v237 = vpop.permute.xlu0 %236
    %vm238 = vcmask 130048
    %v239 = vsel %vm238, %v233, 0
    %v241 = vsel %vm238, %v237, 0
    %243 = vmatpush.xpose.msra.mxu0 0.0
    %244 = vmatpush.xpose.msra.mxu0 0.0
    %245 = vmatpush.xpose.msra.mxu0 0.0
    %246 = vmatpush.xpose.msra.mxu0 0.0
    %247 = vmatpush.xpose.msra.mxu0 0.0
    %248 = vmatpush.xpose.msra.mxu0 0.0
    %249 = vmatpush.xpose.msra.mxu0 0.0
    %250 = vmatpush.xpose.msra.mxu0 0.0
    %251 = vmatpush.xpose.msra.mxu0 0.0
    %252 = vmatpush.xpose.msra.mxu0 0.0
    %253 = vmatpush.xpose.msra.mxu0 0.0
    %254 = vmatpush.xpose.msra.mxu0 0.0
    %255 = vmatpush.xpose.msra.mxu0 0.0
    %256 = vmatpush.xpose.msra.mxu0 0.0
    %257 = vmatpush.xpose.msra.mxu0 0.0
    %258 = vmatpush.xpose.msra.mxu0 %v241
    %259 = vmatmul.f32.gmra.mxu0 %v239
    %v260 = vpop.f32.mrf.mxu0
    %v261 = vadd.f32 0.0, %v260
    %262 = vdwg.mxu0
    %v263 = vmul.f32 %v261, 0.25
    %v264 = vadd.f32 %v263, %v205
    %vm265 = vcmask 64512
    %v266 = vsel %vm265, %v264, -inf
    %267 = vmax.xlane.f32.xlu0 %v266
    %v268 = vpop.xlane.xlu0 %267
    %v269 = vsub.f32 %v264, %v268
    %v270 = vmul.f32 %v269, 1.442695
    %v271 = vpow.pop %v270
    %v272 = vsel %vm265, %v271, 0.0
    %273 = vadd.xlane.f32.xlu0 %v272
    %v274 = vpop.xlane.xlu0 %273
    %v275 = vrcp.pop %v274
    %v276 = vmul.f32 %v271, %v275
    %277 = vrot.lane.b32.xlu0 %v233, 64
    %v278 = vpop.permute.xlu0 %277
    %v281 = vsel %vm265, %v276, 0
    %283 = vmatpush.msra.mxu0 0.0
    %284 = vmatpush.msra.mxu0 0.0
    %285 = vmatpush.msra.mxu0 0.0
    %286 = vmatpush.msra.mxu0 0.0
    %287 = vmatpush.msra.mxu0 0.0
    %288 = vmatpush.msra.mxu0 0.0
    %289 = vmatpush.msra.mxu0 0.0
    %290 = vmatpush.msra.mxu0 0.0
    %291 = vmatpush.msra.mxu0 0.0
    %292 = vmatpush.msra.mxu0 0.0
    %293 = vmatpush.msra.mxu0 0.0
    %294 = vmatpush.msra.mxu0 0.0
    %295 = vmatpush.msra.mxu0 0.0
    %296 = vmatpush.msra.mxu0 0.0
    %297 = vmatpush.msra.mxu0 0.0
    %298 = vmatpush.msra.mxu0 %v278
    %299 = vmatmul.f32.gmra.mxu0 %v281
    %v300 = vpop.f32.mrf.mxu0
    %v301 = vadd.f32 0.0, %v300
    %302 = vdwg.mxu0
    %303 = vrot.lane.b32.xlu0 %v233, 112
    %v304 = vpop.permute.xlu0 %303
    %305 = vrot.lane.b32.xlu0 %v233, 80
    %v306 = vpop.permute.xlu0 %305
    %v307 = vsel %vm238, %v304, 0
    %v309 = vsel %vm238, %v306, 0
    %311 = vmatpush.xpose.msra.mxu0 0.0
    %312 = vmatpush.xpose.msra.mxu0 0.0
    %313 = vmatpush.xpose.msra.mxu0 0.0
    %314 = vmatpush.xpose.msra.mxu0 0.0
    %315 = vmatpush.xpose.msra.mxu0 0.0
    %316 = vmatpush.xpose.msra.mxu0 0.0
    %317 = vmatpush.xpose.msra.mxu0 0.0
    %318 = vmatpush.xpose.msra.mxu0 0.0
    %319 = vmatpush.xpose.msra.mxu0 0.0
    %320 = vmatpush.xpose.msra.mxu0 0.0
    %321 = vmatpush.xpose.msra.mxu0 0.0
    %322 = vmatpush.xpose.msra.mxu0 0.0
    %323 = vmatpush.xpose.msra.mxu0 0.0
    %324 = vmatpush.xpose.msra.mxu0 0.0
    %325 = vmatpush.xpose.msra.mxu0 0.0
    %326 = vmatpush.xpose.msra.mxu0 %v309
    %327 = vmatmul.f32.gmra.mxu0 %v307
    %v328 = vpop.f32.mrf.mxu0
    %v329 = vadd.f32 0.0, %v328
    %330 = vdwg.mxu0
    %v331 = vmul.f32 %v329, 0.25
    %v332 = vadd.f32 %v331, %v205
    %v333 = vsel %vm265, %v332, -inf
    %334 = vmax.xlane.f32.xlu0 %v333
    %v335 = vpop.xlane.xlu0 %334
    %v336 = vsub.f32 %v332, %v335
    %v337 = vmul.f32 %v336, 1.442695
    %v338 = vpow.pop %v337
    %v339 = vsel %vm265, %v338, 0.0
    %340 = vadd.xlane.f32.xlu0 %v339
    %v341 = vpop.xlane.xlu0 %340
    %v342 = vrcp.pop %v341
    %v343 = vmul.f32 %v338, %v342
    %344 = vrot.lane.b32.xlu0 %v233, 48
    %v345 = vpop.permute.xlu0 %344
    %v348 = vsel %vm265, %v343, 0
    %350 = vmatpush.msra.mxu0 0.0
    %351 = vmatpush.msra.mxu0 0.0
    %352 = vmatpush.msra.mxu0 0.0
    %353 = vmatpush.msra.mxu0 0.0
    %354 = vmatpush.msra.mxu0 0.0
    %355 = vmatpush.msra.mxu0 0.0
    %356 = vmatpush.msra.mxu0 0.0
    %357 = vmatpush.msra.mxu0 0.0
    %358 = vmatpush.msra.mxu0 0.0
    %359 = vmatpush.msra.mxu0 0.0
    %360 = vmatpush.msra.mxu0 0.0
    %361 = vmatpush.msra.mxu0 0.0
    %362 = vmatpush.msra.mxu0 0.0
    %363 = vmatpush.msra.mxu0 0.0
    %364 = vmatpush.msra.mxu0 0.0
    %365 = vmatpush.msra.mxu0 %v345
    %366 = vmatmul.f32.gmra.mxu0 %v348
    %v367 = vpop.f32.mrf.mxu0
    %v368 = vadd.f32 0.0, %v367
    %369 = vdwg.mxu0
    %371 = vrot.lane.b32.xlu0 %v368, 16
    %v372 = vpop.permute.xlu0 %371
    %v374 = vsel %vm238, %v301, %v372
    %v375 = vld [vmem:[#allocation5 + $0x76] sm:$0xff]
    %v376 = vld [vmem:[#allocation5 + $0x7e] sm:$0xff]
    %v377 = vld [vmem:[#allocation5 + $0x86] sm:$0xff]
    %v378 = vld [vmem:[#allocation5 + $0x8e] sm:$0xff]
    %v379 = vld [vmem:[#allocation5 + $0x96] sm:$0x1]
    %v380 = vperm.slane %v379, 0
    %v382 = vsel %vm108, %v374, 0
    %384 = vmatpush.msra.mxu0 0.0
    %385 = vmatpush.msra.mxu0 0.0
    %386 = vmatpush.msra.mxu0 0.0
    %387 = vmatpush.msra.mxu0 0.0
    %388 = vmatpush.msra.mxu0 0.0
    %389 = vmatpush.msra.mxu0 0.0
    %390 = vmatpush.msra.mxu0 0.0
    %391 = vmatpush.msra.mxu0 0.0
    %392 = vmatpush.msra.mxu0 0.0
    %393 = vmatpush.msra.mxu0 0.0
    %394 = vmatpush.msra.mxu0 0.0
    %395 = vmatpush.msra.mxu0 0.0
    %396 = vmatpush.msra.mxu0 %v378
    %397 = vmatpush.msra.mxu0 %v377
    %398 = vmatpush.msra.mxu0 %v376
    %399 = vmatpush.msra.mxu0 %v375
    %400 = vmatmul.f32.gmra.mxu0 %v382
    %v401 = vpop.f32.mrf.mxu0
    %v402 = vadd.f32 %v380, %v401
    %403 = vdwg.mxu0
    %v404 = vadd.f32 %v141, %v402
    %v405 = vld [vmem:[#allocation5 + $0x97] sm:$0x1]
    %v406 = vld [vmem:[#allocation5 + $0x98] sm:$0x1]
    %v407 = vsel %vm108, %v404, 0.0
    %408 = vadd.xlane.f32.xlu0 %v407
    %v409 = vpop.xlane.xlu0 %408
    %v410 = vmul.f32 %v409, %v118
    %v411 = vsub.f32 %v404, %v410
    %v412 = vmul.f32 %v411, %v411
    %v413 = vsel %vm108, %v412, 0.0
    %414 = vadd.xlane.f32.xlu0 %v413
    %v415 = vpop.xlane.xlu0 %414
    %v416 = vmul.f32 %v415, %v118
    %v417 = vadd.f32 %v416, 1e-12
    %v418 = vrsqrt.pop %v417
    %v419 = vmul.f32 %v418, %v417
    %v420 = vmul.f32 %v419, %v418
    %v421 = vmul.f32 0.5, %v420
    %v422 = vsub.f32 1.5, %v421
    %v423 = vmul.f32 %v418, %v422
    %vm424 = vweird.f32 %v417
    %vm425 = vweird.f32 %v418
    %vm426 = vmor %vm424, %vm425
    %v427 = vsel %vm426, %v418, %v423
    %v428 = vmul.f32 %v411, %v427
    %v429 = vperm.slane %v405, 0
    %v430 = vmul.f32 %v428, %v429
    %v431 = vperm.slane %v406, 0
    %v432 = vadd.f32 %v430, %v431
    %v433 = vld [vmem:[#allocation5 + $0x99] sm:$0xff]
    %v434 = vld [vmem:[#allocation5 + $0xa1] sm:$0xff]
    %v435 = vld [vmem:[#allocation5 + $0xa9] sm:$0xff]
    %v436 = vld [vmem:[#allocation5 + $0xb1] sm:$0xff]
    %v437 = vld [vmem:[#allocation5 + $0xb9] sm:$0x1]
    %v438 = vperm.slane %v437, 0
    %v440 = vsel %vm108, %v432, 0
    %442 = vmatpush.msra.mxu0 0.0
    %443 = vmatpush.msra.mxu0 0.0
    %444 = vmatpush.msra.mxu0 0.0
    %445 = vmatpush.msra.mxu0 0.0
    %446 = vmatpush.msra.mxu0 0.0
    %447 = vmatpush.msra.mxu0 0.0
    %448 = vmatpush.msra.mxu0 0.0
    %449 = vmatpush.msra.mxu0 0.0
    %450 = vmatpush.msra.mxu0 0.0
    %451 = vmatpush.msra.mxu0 0.0
    %452 = vmatpush.msra.mxu0 0.0
    %453 = vmatpush.msra.mxu0 0.0
    %454 = vmatpush.msra.mxu0 %v436
    %455 = vmatpush.msra.mxu0 %v435
    %456 = vmatpush.msra.mxu0 %v434
    %457 = vmatpush.msra.mxu0 %v433
    %458 = vmatmul.f32.gmra.mxu0 %v440
    %v459 = vpop.f32.mrf.mxu0
    %v460 = vadd.f32 %v438, %v459
    %461 = vdwg.mxu0
    %v462 = vmul.f32 %v460, 0.5
    %v463 = vmul.f32 %v460, 0.044715
    %v464 = vmul.f32 %v463, %v460
    %v465 = vmul.f32 %v464, %v460
    %v466 = vadd.f32 %v460, %v465
    %v467 = vmul.f32 %v466, 0.7978846
    %v468 = vtanh.pop %v467
    %v469 = vadd.f32 %v468, 1.0
    %v470 = vmul.f32 %v462, %v469
    %v471 = vld [vmem:[#allocation5 + $0xba] sm:$0xff]
    %v472 = vld [vmem:[#allocation5 + $0xc2] sm:$0xff]
    %v473 = vld [vmem:[#allocation5 + $0xca] sm:$0xff]
    %v474 = vld [vmem:[#allocation5 + $0xd2] sm:$0xff]
    %v475 = vld [vmem:[#allocation5 + $0xda] sm:$0xff]
    %v476 = vld [vmem:[#allocation5 + $0xe2] sm:$0xff]
    %v477 = vld [vmem:[#allocation5 + $0xea] sm:$0xff]
    %v478 = vld [vmem:[#allocation5 + $0xf2] sm:$0xff]
    %v479 = vld [vmem:[#allocation5 + $0xfa] sm:$0x1]
    %v480 = vperm.slane %v479, 0
    %vm481 = vcmask 523264
    %v483 = vsel %vm481, %v470, 0
    %485 = vmatpush.msra.mxu0 0.0
    %486 = vmatpush.msra.mxu0 0.0
    %487 = vmatpush.msra.mxu0 0.0
    %488 = vmatpush.msra.mxu0 0.0
    %489 = vmatpush.msra.mxu0 0.0
    %490 = vmatpush.msra.mxu0 0.0
    %491 = vmatpush.msra.mxu0 0.0
    %492 = vmatpush.msra.mxu0 0.0
    %493 = vmatpush.msra.mxu0 %v478
    %494 = vmatpush.msra.mxu0 %v477
    %495 = vmatpush.msra.mxu0 %v476
    %496 = vmatpush.msra.mxu0 %v475
    %497 = vmatpush.msra.mxu0 %v474
    %498 = vmatpush.msra.mxu0 %v473
    %499 = vmatpush.msra.mxu0 %v472
    %500 = vmatpush.msra.mxu0 %v471
    %501 = vmatmul.f32.gmra.mxu0 %v483
    %v502 = vpop.f32.mrf.mxu0
    %v503 = vadd.f32 %v480, %v502
    %504 = vdwg.mxu0
    %v505 = vadd.f32 %v432, %v503
    %v506 = vld [vmem:[#allocation5 + $0xfb] sm:$0x1]
    %v507 = vld [vmem:[#allocation5 + $0xfc] sm:$0x1]
    %v508 = vsel %vm108, %v505, 0.0
    %509 = vadd.xlane.f32.xlu0 %v508
    %v510 = vpop.xlane.xlu0 %509
    %v511 = vmul.f32 %v510, %v118
    %v512 = vsub.f32 %v505, %v511
    %v513 = vmul.f32 %v512, %v512
    %v514 = vsel %vm108, %v513, 0.0
    %515 = vadd.xlane.f32.xlu0 %v514
    %v516 = vpop.xlane.xlu0 %515
    %v517 = vmul.f32 %v516, %v118
    %v518 = vadd.f32 %v517, 1e-12
    %v519 = vrsqrt.pop %v518
    %v520 = vmul.f32 %v519, %v518
    %v521 = vmul.f32 %v520, %v519
    %v522 = vmul.f32 0.5, %v521
    %v523 = vsub.f32 1.5, %v522
    %v524 = vmul.f32 %v519, %v523
    %vm525 = vweird.f32 %v518
    %vm526 = vweird.f32 %v519
    %vm527 = vmor %vm525, %vm526
    %v528 = vsel %vm527, %v519, %v524
    %v529 = vmul.f32 %v512, %v528
    %v530 = vperm.slane %v506, 0
    %v531 = vmul.f32 %v529, %v530
    %v532 = vperm.slane %v507, 0
    %v533 = vadd.f32 %v531, %v532
    %v534 = vld [vmem:[#allocation5 + $0xfd] sm:$0xff]
    %v535 = vld [vmem:[#allocation5 + $0x105] sm:$0xff]
    %v536 = vld [vmem:[#allocation5 + $0x10d] sm:$0xff]
    %v537 = vld [vmem:[#allocation5 + $0x115] sm:$0xff]
    %v538 = vld [vmem:[#allocation5 + $0x11d] sm:$0x1]
    %v539 = vperm.slane %v538, 0
    %v541 = vsel %vm108, %v533, 0
    %543 = vmatpush.msra.mxu0 0.0
    %544 = vmatpush.msra.mxu0 0.0
    %545 = vmatpush.msra.mxu0 0.0
    %546 = vmatpush.msra.mxu0 0.0
    %547 = vmatpush.msra.mxu0 0.0
    %548 = vmatpush.msra.mxu0 0.0
    %549 = vmatpush.msra.mxu0 0.0
    %550 = vmatpush.msra.mxu0 0.0
    %551 = vmatpush.msra.mxu0 0.0
    %552 = vmatpush.msra.mxu0 0.0
    %553 = vmatpush.msra.mxu0 0.0
    %554 = vmatpush.msra.mxu0 0.0
    %555 = vmatpush.msra.mxu0 %v537
    %556 = vmatpush.msra.mxu0 %v536
    %557 = vmatpush.msra.mxu0 %v535
    %558 = vmatpush.msra.mxu0 %v534
    %559 = vmatmul.f32.gmra.mxu0 %v541
    %v560 = vpop.f32.mrf.mxu0
    %v561 = vadd.f32 %v539, %v560
    %562 = vdwg.mxu0
    %564 = vrot.lane.b32.xlu0 %v561, 96
    %v565 = vpop.permute.xlu0 %564
    %v566 = vsel %vm238, %v561, 0
    %v568 = vsel %vm238, %v565, 0
    %570 = vmatpush.xpose.msra.mxu0 0.0
    %571 = vmatpush.xpose.msra.mxu0 0.0
    %572 = vmatpush.xpose.msra.mxu0 0.0
    %573 = vmatpush.xpose.msra.mxu0 0.0
    %574 = vmatpush.xpose.msra.mxu0 0.0
    %575 = vmatpush.xpose.msra.mxu0 0.0
    %576 = vmatpush.xpose.msra.mxu0 0.0
    %577 = vmatpush.xpose.msra.mxu0 0.0
    %578 = vmatpush.xpose.msra.mxu0 0.0
    %579 = vmatpush.xpose.msra.mxu0 0.0
    %580 = vmatpush.xpose.msra.mxu0 0.0
    %581 = vmatpush.xpose.msra.mxu0 0.0
    %582 = vmatpush.xpose.msra.mxu0 0.0
    %583 = vmatpush.xpose.msra.mxu0 0.0
    %584 = vmatpush.xpose.msra.mxu0 0.0
    %585 = vmatpush.xpose.msra.mxu0 %v568
    %586 = vmatmul.f32.gmra.mxu0 %v566
    %v587 = vpop.f32.mrf.mxu0
    %v588 = vadd.f32 0.0, %v587
    %589 = vdwg.mxu0
    %v590 = vmul.f32 %v588, 0.25
    %v591 = vadd.f32 %v590, %v205
    %v592 = vsel %vm265, %v591, -inf
    %593 = vmax.xlane.f32.xlu0 %v592
    %v594 = vpop.xlane.xlu0 %593
    %v595 = vsub.f32 %v591, %v594
    %v596 = vmul.f32 %v595, 1.442695
    %v597 = vpow.pop %v596
    %v598 = vsel %vm265, %v597, 0.0
    %599 = vadd.xlane.f32.xlu0 %v598
    %v600 = vpop.xlane.xlu0 %599
    %v601 = vrcp.pop %v600
    %v602 = vmul.f32 %v597, %v601
    %603 = vrot.lane.b32.xlu0 %v561, 64
    %v604 = vpop.permute.xlu0 %603
    %v607 = vsel %vm265, %v602, 0
    %609 = vmatpush.msra.mxu0 0.0
    %610 = vmatpush.msra.mxu0 0.0
    %611 = vmatpush.msra.mxu0 0.0
    %612 = vmatpush.msra.mxu0 0.0
    %613 = vmatpush.msra.mxu0 0.0
    %614 = vmatpush.msra.mxu0 0.0
    %615 = vmatpush.msra.mxu0 0.0
    %616 = vmatpush.msra.mxu0 0.0
    %617 = vmatpush.msra.mxu0 0.0
    %618 = vmatpush.msra.mxu0 0.0
    %619 = vmatpush.msra.mxu0 0.0
    %620 = vmatpush.msra.mxu0 0.0
    %621 = vmatpush.msra.mxu0 0.0
    %622 = vmatpush.msra.mxu0 0.0
    %623 = vmatpush.msra.mxu0 0.0
    %624 = vmatpush.msra.mxu0 %v604
    %625 = vmatmul.f32.gmra.mxu0 %v607
    %v626 = vpop.f32.mrf.mxu0
    %v627 = vadd.f32 0.0, %v626
    %628 = vdwg.mxu0
    %629 = vrot.lane.b32.xlu0 %v561, 112
    %v630 = vpop.permute.xlu0 %629
    %631 = vrot.lane.b32.xlu0 %v561, 80
    %v632 = vpop.permute.xlu0 %631
    %v633 = vsel %vm238, %v630, 0
    %v635 = vsel %vm238, %v632, 0
    %637 = vmatpush.xpose.msra.mxu0 0.0
    %638 = vmatpush.xpose.msra.mxu0 0.0
    %639 = vmatpush.xpose.msra.mxu0 0.0
    %640 = vmatpush.xpose.msra.mxu0 0.0
    %641 = vmatpush.xpose.msra.mxu0 0.0
    %642 = vmatpush.xpose.msra.mxu0 0.0
    %643 = vmatpush.xpose.msra.mxu0 0.0
    %644 = vmatpush.xpose.msra.mxu0 0.0
    %645 = vmatpush.xpose.msra.mxu0 0.0
    %646 = vmatpush.xpose.msra.mxu0 0.0
    %647 = vmatpush.xpose.msra.mxu0 0.0
    %648 = vmatpush.xpose.msra.mxu0 0.0
    %649 = vmatpush.xpose.msra.mxu0 0.0
    %650 = vmatpush.xpose.msra.mxu0 0.0
    %651 = vmatpush.xpose.msra.mxu0 0.0
    %652 = vmatpush.xpose.msra.mxu0 %v635
    %653 = vmatmul.f32.gmra.mxu0 %v633
    %v654 = vpop.f32.mrf.mxu0
    %v655 = vadd.f32 0.0, %v654
    %656 = vdwg.mxu0
    %v657 = vmul.f32 %v655, 0.25
    %v658 = vadd.f32 %v657, %v205
    %v659 = vsel %vm265, %v658, -inf
    %660 = vmax.xlane.f32.xlu0 %v659
    %v661 = vpop.xlane.xlu0 %660
    %v662 = vsub.f32 %v658, %v661
    %v663 = vmul.f32 %v662, 1.442695
    %v664 = vpow.pop %v663
    %v665 = vsel %vm265, %v664, 0.0
    %666 = vadd.xlane.f32.xlu0 %v665
    %v667 = vpop.xlane.xlu0 %666
    %v668 = vrcp.pop %v667
    %v669 = vmul.f32 %v664, %v668
    %670 = vrot.lane.b32.xlu0 %v561, 48
    %v671 = vpop.permute.xlu0 %670
    %v674 = vsel %vm265, %v669, 0
    %676 = vmatpush.msra.mxu0 0.0
    %677 = vmatpush.msra.mxu0 0.0
    %678 = vmatpush.msra.mxu0 0.0
    %679 = vmatpush.msra.mxu0 0.0
    %680 = vmatpush.msra.mxu0 0.0
    %681 = vmatpush.msra.mxu0 0.0
    %682 = vmatpush.msra.mxu0 0.0
    %683 = vmatpush.msra.mxu0 0.0
    %684 = vmatpush.msra.mxu0 0.0
    %685 = vmatpush.msra.mxu0 0.0
    %686 = vmatpush.msra.mxu0 0.0
    %687 = vmatpush.msra.mxu0 0.0
    %688 = vmatpush.msra.mxu0 0.0
    %689 = vmatpush.msra.mxu0 0.0
    %690 = vmatpush.msra.mxu0 0.0
    %691 = vmatpush.msra.mxu0 %v671
    %692 = vmatmul.f32.gmra.mxu0 %v674
    %v693 = vpop.f32.mrf.mxu0
    %v694 = vadd.f32 0.0, %v693
    %695 = vdwg.mxu0
    %697 = vrot.lane.b32.xlu0 %v694, 16
    %v698 = vpop.permute.xlu0 %697
    %v700 = vsel %vm238, %v627, %v698
    %v701 = vld [vmem:[#allocation5 + $0x11e] sm:$0xff]
    %v702 = vld [vmem:[#allocation5 + $0x126] sm:$0xff]
    %v703 = vld [vmem:[#allocation5 + $0x12e] sm:$0xff]
    %v704 = vld [vmem:[#allocation5 + $0x136] sm:$0xff]
    %v705 = vld [vmem:[#allocation5 + $0x13e] sm:$0x1]
    %v706 = vperm.slane %v705, 0
    %v708 = vsel %vm108, %v700, 0
    %710 = vmatpush.msra.mxu0 0.0
    %711 = vmatpush.msra.mxu0 0.0
    %712 = vmatpush.msra.mxu0 0.0
    %713 = vmatpush.msra.mxu0 0.0
    %714 = vmatpush.msra.mxu0 0.0
    %715 = vmatpush.msra.mxu0 0.0
    %716 = vmatpush.msra.mxu0 0.0
    %717 = vmatpush.msra.mxu0 0.0
    %718 = vmatpush.msra.mxu0 0.0
    %719 = vmatpush.msra.mxu0 0.0
    %720 = vmatpush.msra.mxu0 0.0
    %721 = vmatpush.msra.mxu0 0.0
    %722 = vmatpush.msra.mxu0 %v704
    %723 = vmatpush.msra.mxu0 %v703
    %724 = vmatpush.msra.mxu0 %v702
    %725 = vmatpush.msra.mxu0 %v701
    %726 = vmatmul.f32.gmra.mxu0 %v708
    %v727 = vpop.f32.mrf.mxu0
    %v728 = vadd.f32 %v706, %v727
    %729 = vdwg.mxu0
    %v730 = vadd.f32 %v533, %v728
    %v731 = vld [vmem:[#allocation5 + $0x13f] sm:$0x1]
    %v732 = vld [vmem:[#allocation5 + $0x140] sm:$0x1]
    %v733 = vsel %vm108, %v730, 0.0
    %734 = vadd.xlane.f32.xlu0 %v733
    %v735 = vpop.xlane.xlu0 %734
    %v736 = vmul.f32 %v735, %v118
    %v737 = vsub.f32 %v730, %v736
    %v738 = vmul.f32 %v737, %v737
    %v739 = vsel %vm108, %v738, 0.0
    %740 = vadd.xlane.f32.xlu0 %v739
    %v741 = vpop.xlane.xlu0 %740
    %v742 = vmul.f32 %v741, %v118
    %v743 = vadd.f32 %v742, 1e-12
    %v744 = vrsqrt.pop %v743
    %v745 = vmul.f32 %v744, %v743
    %v746 = vmul.f32 %v745, %v744
    %v747 = vmul.f32 0.5, %v746
    %v748 = vsub.f32 1.5, %v747
    %v749 = vmul.f32 %v744, %v748
    %vm750 = vweird.f32 %v743
    %vm751 = vweird.f32 %v744
    %vm752 = vmor %vm750, %vm751
    %v753 = vsel %vm752, %v744, %v749
    %v754 = vmul.f32 %v737, %v753
    %v755 = vperm.slane %v731, 0
    %v756 = vmul.f32 %v754, %v755
    %v757 = vperm.slane %v732, 0
    %v758 = vadd.f32 %v756, %v757
    %v759 = vld [vmem:[#allocation5 + $0x141] sm:$0xff]
    %v760 = vld [vmem:[#allocation5 + $0x149] sm:$0xff]
    %v761 = vld [vmem:[#allocation5 + $0x151] sm:$0xff]
    %v762 = vld [vmem:[#allocation5 + $0x159] sm:$0xff]
    %v763 = vld [vmem:[#allocation5 + $0x161] sm:$0x1]
    %v764 = vperm.slane %v763, 0
    %v766 = vsel %vm108, %v758, 0
    %768 = vmatpush.msra.mxu0 0.0
    %769 = vmatpush.msra.mxu0 0.0
    %770 = vmatpush.msra.mxu0 0.0
    %771 = vmatpush.msra.mxu0 0.0
    %772 = vmatpush.msra.mxu0 0.0
    %773 = vmatpush.msra.mxu0 0.0
    %774 = vmatpush.msra.mxu0 0.0
    %775 = vmatpush.msra.mxu0 0.0
    %776 = vmatpush.msra.mxu0 0.0
    %777 = vmatpush.msra.mxu0 0.0
    %778 = vmatpush.msra.mxu0 0.0
    %779 = vmatpush.msra.mxu0 0.0
    %780 = vmatpush.msra.mxu0 %v762
    %781 = vmatpush.msra.mxu0 %v761
    %782 = vmatpush.msra.mxu0 %v760
    %783 = vmatpush.msra.mxu0 %v759
    %784 = vmatmul.f32.gmra.mxu0 %v766
    %v785 = vpop.f32.mrf.mxu0
    %v786 = vadd.f32 %v764, %v785
    %787 = vdwg.mxu0
    %v788 = vmul.f32 %v786, 0.5
    %v789 = vmul.f32 %v786, 0.044715
    %v790 = vmul.f32 %v789, %v786
    %v791 = vmul.f32 %v790, %v786
    %v792 = vadd.f32 %v786, %v791
    %v793 = vmul.f32 %v792, 0.7978846
    %v794 = vtanh.pop %v793
    %v795 = vadd.f32 %v794, 1.0
    %v796 = vmul.f32 %v788, %v795
    %v797 = vld [vmem:[#allocation5 + $0x162] sm:$0xff]
    %v798 = vld [vmem:[#allocation5 + $0x16a] sm:$0xff]
    %v799 = vld [vmem:[#allocation5 + $0x172] sm:$0xff]
    %v800 = vld [vmem:[#allocation5 + $0x17a] sm:$0xff]
    %v801 = vld [vmem:[#allocation5 + $0x182] sm:$0xff]
    %v802 = vld [vmem:[#allocation5 + $0x18a] sm:$0xff]
    %v803 = vld [vmem:[#allocation5 + $0x192] sm:$0xff]
    %v804 = vld [vmem:[#allocation5 + $0x19a] sm:$0xff]
    %v805 = vld [vmem:[#allocation5 + $0x1a2] sm:$0x1]
    %v806 = vperm.slane %v805, 0
    %v808 = vsel %vm481, %v796, 0
    %810 = vmatpush.msra.mxu0 0.0
    %811 = vmatpush.msra.mxu0 0.0
    %812 = vmatpush.msra.mxu0 0.0
    %813 = vmatpush.msra.mxu0 0.0
    %814 = vmatpush.msra.mxu0 0.0
    %815 = vmatpush.msra.mxu0 0.0
    %816 = vmatpush.msra.mxu0 0.0
    %817 = vmatpush.msra.mxu0 0.0
    %818 = vmatpush.msra.mxu0 %v804
    %819 = vmatpush.msra.mxu0 %v803
    %820 = vmatpush.msra.mxu0 %v802
    %821 = vmatpush.msra.mxu0 %v801
    %822 = vmatpush.msra.mxu0 %v800
    %823 = vmatpush.msra.mxu0 %v799
    %824 = vmatpush.msra.mxu0 %v798
    %825 = vmatpush.msra.mxu0 %v797
    %826 = vmatmul.f32.gmra.mxu0 %v808
    %v827 = vpop.f32.mrf.mxu0
    %v828 = vadd.f32 %v806, %v827
    %829 = vdwg.mxu0
    %v830 = vadd.f32 %v758, %v828
    %v831 = vld [vmem:[#allocation5 + $0x1a3] sm:$0x1]
    %v832 = vld [vmem:[#allocation5 + $0x1a4] sm:$0x1]
    %v833 = vsel %vm108, %v830, 0.0
    %834 = vadd.xlane.f32.xlu0 %v833
    %v835 = vpop.xlane.xlu0 %834
    %v836 = vmul.f32 %v835, %v118
    %v837 = vsub.f32 %v830, %v836
    %v838 = vmul.f32 %v837, %v837
    %v839 = vsel %vm108, %v838, 0.0
    %840 = vadd.xlane.f32.xlu0 %v839
    %v841 = vpop.xlane.xlu0 %840
    %v842 = vmul.f32 %v841, %v118
    %v843 = vadd.f32 %v842, 1e-12
    %v844 = vrsqrt.pop %v843
    %v845 = vmul.f32 %v844, %v843
    %v846 = vmul.f32 %v845, %v844
    %v847 = vmul.f32 0.5, %v846
    %v848 = vsub.f32 1.5, %v847
    %v849 = vmul.f32 %v844, %v848
    %vm850 = vweird.f32 %v843
    %vm851 = vweird.f32 %v844
    %vm852 = vmor %vm850, %vm851
    %v853 = vsel %vm852, %v844, %v849
    %v854 = vmul.f32 %v837, %v853
    %v855 = vperm.slane %v831, 0
    %v856 = vmul.f32 %v854, %v855
    %v857 = vperm.slane %v832, 0
    %v858 = vadd.f32 %v856, %v857
    %v859 = vld [vmem:[#allocation5 + $0x1a5] sm:$0xff]
    %v860 = vld [vmem:[#allocation5 + $0x1ad] sm:$0xff]
    %v861 = vld [vmem:[#allocation5 + $0x1b5] sm:$0xff]
    %v862 = vld [vmem:[#allocation5 + $0x1bd] sm:$0xff]
    %v863 = vld [vmem:[#allocation5 + $0x1c5] sm:$0x1]
    %v865 = vsel %vm108, %v858, 0
    %867 = vmatpush.msra.mxu0 0.0
    %868 = vmatpush.msra.mxu0 0.0
    %869 = vmatpush.msra.mxu0 0.0
    %870 = vmatpush.msra.mxu0 0.0
    %871 = vmatpush.msra.mxu0 0.0
    %872 = vmatpush.msra.mxu0 0.0
    %873 = vmatpush.msra.mxu0 0.0
    %874 = vmatpush.msra.mxu0 0.0
    %875 = vmatpush.msra.mxu0 0.0
    %876 = vmatpush.msra.mxu0 0.0
    %877 = vmatpush.msra.mxu0 0.0
    %878 = vmatpush.msra.mxu0 0.0
    %879 = vmatpush.msra.mxu0 %v862
    %880 = vmatpush.msra.mxu0 %v861
    %881 = vmatpush.msra.mxu0 %v860
    %882 = vmatpush.msra.mxu0 %v859
    %883 = vmatmul.f32.gmra.mxu0 %v865
    %v884 = vpop.f32.mrf.mxu0
    %v885 = vadd.f32 %v863, %v884
    %886 = vdwg.mxu0
    %v887 = vtanh.pop %v885
    %v888 = vld [vmem:[#allocation5 + $0x1c6] sm:$0xff]
    %v889 = vld [vmem:[#allocation5 + $0x1ce] sm:$0xff]
    %v890 = vld [vmem:[#allocation5 + $0x1d6] sm:$0xff]
    %v891 = vld [vmem:[#allocation5 + $0x1de] sm:$0xff]
    %v892 = vld [vmem:[#allocation5 + $0x1e6] sm:$0x1]
    %v894 = vsel %vm108, %v887, 0
    %896 = vmatpush.msra.mxu0 0.0
    %897 = vmatpush.msra.mxu0 0.0
    %898 = vmatpush.msra.mxu0 0.0
    %899 = vmatpush.msra.mxu0 0.0
    %900 = vmatpush.msra.mxu0 0.0
    %901 = vmatpush.msra.mxu0 0.0
    %902 = vmatpush.msra.mxu0 0.0
    %903 = vmatpush.msra.mxu0 0.0
    %904 = vmatpush.msra.mxu0 0.0
    %905 = vmatpush.msra.mxu0 0.0
    %906 = vmatpush.msra.mxu0 0.0
    %907 = vmatpush.msra.mxu0 0.0
    %908 = vmatpush.msra.mxu0 %v891
    %909 = vmatpush.msra.mxu0 %v890
    %910 = vmatpush.msra.mxu0 %v889
    %911 = vmatpush.msra.mxu0 %v888
    %912 = vmatmul.f32.gmra.mxu0 %v894
    %v913 = vpop.f32.mrf.mxu0
    %v914 = vadd.f32 %v892, %v913
    %915 = vdwg.mxu0
    %916 = vst [vmem:[#allocation8] sm:$0x1] %v914
    %s917 = sld [smem:[#allocation3 + $0x80]]
    %s918 = scalar_lea.vmem [#allocation5], %s917
    %v919 = vld [vmem:[%s918] sm:$0x1]
    %s920 = sld [smem:[#allocation3 + $0x81]]
    %s921 = scalar_lea.vmem [#allocation5], %s920
    %v922 = vld [vmem:[%s921] sm:$0x1]
    %s923 = sld [smem:[#allocation3 + $0x82]]
    %s924 = scalar_lea.vmem [#allocation5], %s923
    %v925 = vld [vmem:[%s924] sm:$0x1]
    %s926 = sld [smem:[#allocation3 + $0x83]]
    %s927 = scalar_lea.vmem [#allocation5], %s926
    %v928 = vld [vmem:[%s927] sm:$0x1]
    %s929 = sld [smem:[#allocation3 + $0x84]]
    %s930 = scalar_lea.vmem [#allocation5], %s929
    %v931 = vld [vmem:[%s930] sm:$0x1]
    %s932 = sld [smem:[#allocation3 + $0x85]]
    %s933 = scalar_lea.vmem [#allocation5], %s932
    %v934 = vld [vmem:[%s933] sm:$0x1]
    %s935 = sld [smem:[#allocation3 + $0x86]]
    %s936 = scalar_lea.vmem [#allocation5], %s935
    %v937 = vld [vmem:[%s936] sm:$0x1]
    %s938 = sld [smem:[#allocation3 + $0x87]]
    %s939 = scalar_lea.vmem [#allocation5], %s938
    %v940 = vld [vmem:[%s939] sm:$0x1]
    %v942 = vrot.slane %v922, 7
    %v945 = vrot.slane %v925, 6
    %v948 = vrot.slane %v928, 5
    %v951 = vrot.slane %v931, 4
    %v954 = vrot.slane %v934, 3
    %v957 = vrot.slane %v937, 2
    %v960 = vrot.slane %v940, 1
    %v962 = vsel %vm91, %v919, %v942
    %v963 = vsel %vm93, %v962, %v945
    %v964 = vsel %vm95, %v963, %v948
    %v965 = vsel %vm97, %v964, %v951
    %v966 = vsel %vm99, %v965, %v954
    %v967 = vsel %vm101, %v966, %v957
    %v968 = vsel %vm103, %v967, %v960
    %v969 = vadd.f32 %v968, %v42
    %v970 = vadd.f32 %v969, %v106
    %v971 = vsel %vm108, %v970, 0.0
    %972 = vadd.xlane.f32.xlu0 %v971
    %v973 = vpop.xlane.xlu0 %972
    %v974 = vmul.f32 %v973, %v118
    %v975 = vsub.f32 %v970, %v974
    %v976 = vmul.f32 %v975, %v975
    %v977 = vsel %vm108, %v976, 0.0
    %978 = vadd.xlane.f32.xlu0 %v977
    %v979 = vpop.xlane.xlu0 %978
    %v980 = vmul.f32 %v979, %v118
    %v981 = vadd.f32 %v980, 1e-12
    %v982 = vrsqrt.pop %v981
    %v983 = vmul.f32 %v982, %v981
    %v984 = vmul.f32 %v983, %v982
    %v985 = vmul.f32 0.5, %v984
    %v986 = vsub.f32 1.5, %v985
    %v987 = vmul.f32 %v982, %v986
    %vm988 = vweird.f32 %v981
    %vm989 = vweird.f32 %v982
    %vm990 = vmor %vm988, %vm989
    %v991 = vsel %vm990, %v982, %v987
    %v992 = vmul.f32 %v975, %v991
    %v993 = vmul.f32 %v992, %v138
    %v994 = vadd.f32 %v993, %v140
    %s995 = sld [smem:[#allocation4 + $0x80]]
    %p996 = scmp.eq.s32.totalorder %s995, 0
    %s997 = scalar_select %p996, 1, 0
    %v998 = vstv %s997
    %vm999 = vcmp.eq.s32.totalorder %v998, 1
    %vm1000 = vmand %vm144, %vm999
    %v1001 = vsel %vm1000, -10000.0, 0.0
    %s1002 = sld [smem:[#allocation4 + $0x81]]
    %p1003 = scmp.eq.s32.totalorder %s1002, 0
    %s1004 = scalar_select %p1003, 1, 0
    %v1005 = vstv %s1004
    %vm1006 = vcmp.eq.s32.totalorder %v1005, 1
    %vm1007 = vmand %vm152, %vm1006
    %v1008 = vsel %vm1007, -10000.0, %v1001
    %s1009 = sld [smem:[#allocation4 + $0x82]]
    %p1010 = scmp.eq.s32.totalorder %s1009, 0
    %s1011 = scalar_select %p1010, 1, 0
    %v1012 = vstv %s1011
    %vm1013 = vcmp.eq.s32.totalorder %v1012, 1
    %vm1014 = vmand %vm160, %vm1013
    %v1015 = vsel %vm1014, -10000.0, %v1008
    %s1016 = sld [smem:[#allocation4 + $0x83]]
    %p1017 = scmp.eq.s32.totalorder %s1016, 0
    %s1018 = scalar_select %p1017, 1, 0
    %v1019 = vstv %s1018
    %vm1020 = vcmp.eq.s32.totalorder %v1019, 1
    %vm1021 = vmand %vm168, %vm1020
    %v1022 = vsel %vm1021, -10000.0, %v1015
    %s1023 = sld [smem:[#allocation4 + $0x84]]
    %p1024 = scmp.eq.s32.totalorder %s1023, 0
    %s1025 = scalar_select %p1024, 1, 0
    %v1026 = vstv %s1025
    %vm1027 = vcmp.eq.s32.totalorder %v1026, 1
    %vm1028 = vmand %vm176, %vm1027
    %v1029 = vsel %vm1028, -10000.0, %v1022
    %s1030 = sld [smem:[#allocation4 + $0x85]]
    %p1031 = scmp.eq.s32.totalorder %s1030, 0
    %s1032 = scalar_select %p1031, 1, 0
    %v1033 = vstv %s1032
    %vm1034 = vcmp.eq.s32.totalorder %v1033, 1
    %vm1035 = vmand %vm184, %vm1034
    %v1036 = vsel %vm1035, -10000.0, %v1029
    %s1037 = sld [smem:[#allocation4 + $0x86]]
    %p1038 = scmp.eq.s32.totalorder %s1037, 0
    %s1039 = scalar_select %p1038, 1, 0
    %v1040 = vstv %s1039
    %vm1041 = vcmp.eq.s32.totalorder %v1040, 1
    %vm1042 = vmand %vm192, %vm1041
    %v1043 = vsel %vm1042, -10000.0, %v1036
    %s1044 = sld [smem:[#allocation4 + $0x87]]
    %p1045 = scmp.eq.s32.totalorder %s1044, 0
    %s1046 = scalar_select %p1045, 1, 0
    %v1047 = vstv %s1046
    %vm1048 = vcmp.eq.s32.totalorder %v1047, 1
    %vm1049 = vmand %vm200, %vm1048
    %v1050 = vsel %vm1049, -10000.0, %v1043
    %v1051 = vld [vmem:[#allocation5 + $0x55] sm:$0xff]
    %v1052 = vld [vmem:[#allocation5 + $0x5d] sm:$0xff]
    %v1053 = vld [vmem:[#allocation5 + $0x65] sm:$0xff]
    %v1054 = vld [vmem:[#allocation5 + $0x6d] sm:$0xff]
    %v1055 = vld [vmem:[#allocation5 + $0x75] sm:$0x1]
    %v1056 = vperm.slane %v1055, 0
    %v1058 = vsel %vm108, %v994, 0
    %1060 = vmatpush.msra.mxu0 0.0
    %1061 = vmatpush.msra.mxu0 0.0
    %1062 = vmatpush.msra.mxu0 0.0
    %1063 = vmatpush.msra.mxu0 0.0
    %1064 = vmatpush.msra.mxu0 0.0
    %1065 = vmatpush.msra.mxu0 0.0
    %1066 = vmatpush.msra.mxu0 0.0
    %1067 = vmatpush.msra.mxu0 0.0
    %1068 = vmatpush.msra.mxu0 0.0
    %1069 = vmatpush.msra.mxu0 0.0
    %1070 = vmatpush.msra.mxu0 0.0
    %1071 = vmatpush.msra.mxu0 0.0
    %1072 = vmatpush.msra.mxu0 %v1054
    %1073 = vmatpush.msra.mxu0 %v1053
    %1074 = vmatpush.msra.mxu0 %v1052
    %1075 = vmatpush.msra.mxu0 %v1051
    %1076 = vmatmul.f32.gmra.mxu0 %v1058
    %v1077 = vpop.f32.mrf.mxu0
    %v1078 = vadd.f32 %v1056, %v1077
    %1079 = vdwg.mxu0
    %1081 = vrot.lane.b32.xlu0 %v1078, 96
    %v1082 = vpop.permute.xlu0 %1081
    %v1083 = vsel %vm238, %v1078, 0
    %v1085 = vsel %vm238, %v1082, 0
    %1087 = vmatpush.xpose.msra.mxu0 0.0
    %1088 = vmatpush.xpose.msra.mxu0 0.0
    %1089 = vmatpush.xpose.msra.mxu0 0.0
    %1090 = vmatpush.xpose.msra.mxu0 0.0
    %1091 = vmatpush.xpose.msra.mxu0 0.0
    %1092 = vmatpush.xpose.msra.mxu0 0.0
    %1093 = vmatpush.xpose.msra.mxu0 0.0
    %1094 = vmatpush.xpose.msra.mxu0 0.0
    %1095 = vmatpush.xpose.msra.mxu0 0.0
    %1096 = vmatpush.xpose.msra.mxu0 0.0
    %1097 = vmatpush.xpose.msra.mxu0 0.0
    %1098 = vmatpush.xpose.msra.mxu0 0.0
    %1099 = vmatpush.xpose.msra.mxu0 0.0
    %1100 = vmatpush.xpose.msra.mxu0 0.0
    %1101 = vmatpush.xpose.msra.mxu0 0.0
    %1102 = vmatpush.xpose.msra.mxu0 %v1085
    %1103 = vmatmul.f32.gmra.mxu0 %v1083
    %v1104 = vpop.f32.mrf.mxu0
    %v1105 = vadd.f32 0.0, %v1104
    %1106 = vdwg.mxu0
    %v1107 = vmul.f32 %v1105, 0.25
    %v1108 = vadd.f32 %v1107, %v1050
    %v1109 = vsel %vm265, %v1108, -inf
    %1110 = vmax.xlane.f32.xlu0 %v1109
    %v1111 = vpop.xlane.xlu0 %1110
    %v1112 = vsub.f32 %v1108, %v1111
    %v1113 = vmul.f32 %v1112, 1.442695
    %v1114 = vpow.pop %v1113
    %v1115 = vsel %vm265, %v1114, 0.0
    %1116 = vadd.xlane.f32.xlu0 %v1115
    %v1117 = vpop.xlane.xlu0 %1116
    %v1118 = vrcp.pop %v1117
    %v1119 = vmul.f32 %v1114, %v1118
    %1120 = vrot.lane.b32.xlu0 %v1078, 64
    %v1121 = vpop.permute.xlu0 %1120
    %v1124 = vsel %vm265, %v1119, 0
    %1126 = vmatpush.msra.mxu0 0.0
    %1127 = vmatpush.msra.mxu0 0.0
    %1128 = vmatpush.msra.mxu0 0.0
    %1129 = vmatpush.msra.mxu0 0.0
    %1130 = vmatpush.msra.mxu0 0.0
    %1131 = vmatpush.msra.mxu0 0.0
    %1132 = vmatpush.msra.mxu0 0.0
    %1133 = vmatpush.msra.mxu0 0.0
    %1134 = vmatpush.msra.mxu0 0.0
    %1135 = vmatpush.msra.mxu0 0.0
    %1136 = vmatpush.msra.mxu0 0.0
    %1137 = vmatpush.msra.mxu0 0.0
    %1138 = vmatpush.msra.mxu0 0.0
    %1139 = vmatpush.msra.mxu0 0.0
    %1140 = vmatpush.msra.mxu0 0.0
    %1141 = vmatpush.msra.mxu0 %v1121
    %1142 = vmatmul.f32.gmra.mxu0 %v1124
    %v1143 = vpop.f32.mrf.mxu0
    %v1144 = vadd.f32 0.0, %v1143
    %1145 = vdwg.mxu0
    %1146 = vrot.lane.b32.xlu0 %v1078, 112
    %v1147 = vpop.permute.xlu0 %1146
    %1148 = vrot.lane.b32.xlu0 %v1078, 80
    %v1149 = vpop.permute.xlu0 %1148
    %v1150 = vsel %vm238, %v1147, 0
    %v1152 = vsel %vm238, %v1149, 0
    %1154 = vmatpush.xpose.msra.mxu0 0.0
    %1155 = vmatpush.xpose.msra.mxu0 0.0
    %1156 = vmatpush.xpose.msra.mxu0 0.0
    %1157 = vmatpush.xpose.msra.mxu0 0.0
    %1158 = vmatpush.xpose.msra.mxu0 0.0
    %1159 = vmatpush.xpose.msra.mxu0 0.0
    %1160 = vmatpush.xpose.msra.mxu0 0.0
    %1161 = vmatpush.xpose.msra.mxu0 0.0
    %1162 = vmatpush.xpose.msra.mxu0 0.0
    %1163 = vmatpush.xpose.msra.mxu0 0.0
    %1164 = vmatpush.xpose.msra.mxu0 0.0
    %1165 = vmatpush.xpose.msra.mxu0 0.0
    %1166 = vmatpush.xpose.msra.mxu0 0.0
    %1167 = vmatpush.xpose.msra.mxu0 0.0
    %1168 = vmatpush.xpose.msra.mxu0 0.0
    %1169 = vmatpush.xpose.msra.mxu0 %v1152
    %1170 = vmatmul.f32.gmra.mxu0 %v1150
    %v1171 = vpop.f32.mrf.mxu0
    %v1172 = vadd.f32 0.0, %v1171
    %1173 = vdwg.mxu0
    %v1174 = vmul.f32 %v1172, 0.25
    %v1175 = vadd.f32 %v1174, %v1050
    %v1176 = vsel %vm265, %v1175, -inf
    %1177 = vmax.xlane.f32.xlu0 %v1176
    %v1178 = vpop.xlane.xlu0 %1177
    %v1179 = vsub.f32 %v1175, %v1178
    %v1180 = vmul.f32 %v1179, 1.442695
    %v1181 = vpow.pop %v1180
    %v1182 = vsel %vm265, %v1181, 0.0
    %1183 = vadd.xlane.f32.xlu0 %v1182
    %v1184 = vpop.xlane.xlu0 %1183
    %v1185 = vrcp.pop %v1184
    %v1186 = vmul.f32 %v1181, %v1185
    %1187 = vrot.lane.b32.xlu0 %v1078, 48
    %v1188 = vpop.permute.xlu0 %1187
    %v1191 = vsel %vm265, %v1186, 0
    %1193 = vmatpush.msra.mxu0 0.0
    %1194 = vmatpush.msra.mxu0 0.0
    %1195 = vmatpush.msra.mxu0 0.0
    %1196 = vmatpush.msra.mxu0 0.0
    %1197 = vmatpush.msra.mxu0 0.0
    %1198 = vmatpush.msra.mxu0 0.0
    %1199 = vmatpush.msra.mxu0 0.0
    %1200 = vmatpush.msra.mxu0 0.0
    %1201 = vmatpush.msra.mxu0 0.0
    %1202 = vmatpush.msra.mxu0 0.0
    %1203 = vmatpush.msra.mxu0 0.0
    %1204 = vmatpush.msra.mxu0 0.0
    %1205 = vmatpush.msra.mxu0 0.0
    %1206 = vmatpush.msra.mxu0 0.0
    %1207 = vmatpush.msra.mxu0 0.0
    %1208 = vmatpush.msra.mxu0 %v1188
    %1209 = vmatmul.f32.gmra.mxu0 %v1191
    %v1210 = vpop.f32.mrf.mxu0
    %v1211 = vadd.f32 0.0, %v1210
    %1212 = vdwg.mxu0
    %1214 = vrot.lane.b32.xlu0 %v1211, 16
    %v1215 = vpop.permute.xlu0 %1214
    %v1217 = vsel %vm238, %v1144, %v1215
    %v1218 = vld [vmem:[#allocation5 + $0x76] sm:$0xff]
    %v1219 = vld [vmem:[#allocation5 + $0x7e] sm:$0xff]
    %v1220 = vld [vmem:[#allocation5 + $0x86] sm:$0xff]
    %v1221 = vld [vmem:[#allocation5 + $0x8e] sm:$0xff]
    %v1222 = vld [vmem:[#allocation5 + $0x96] sm:$0x1]
    %v1223 = vperm.slane %v1222, 0
    %v1225 = vsel %vm108, %v1217, 0
    %1227 = vmatpush.msra.mxu0 0.0
    %1228 = vmatpush.msra.mxu0 0.0
    %1229 = vmatpush.msra.mxu0 0.0
    %1230 = vmatpush.msra.mxu0 0.0
    %1231 = vmatpush.msra.mxu0 0.0
    %1232 = vmatpush.msra.mxu0 0.0
    %1233 = vmatpush.msra.mxu0 0.0
    %1234 = vmatpush.msra.mxu0 0.0
    %1235 = vmatpush.msra.mxu0 0.0
    %1236 = vmatpush.msra.mxu0 0.0
    %1237 = vmatpush.msra.mxu0 0.0
    %1238 = vmatpush.msra.mxu0 0.0
    %1239 = vmatpush.msra.mxu0 %v1221
    %1240 = vmatpush.msra.mxu0 %v1220
    %1241 = vmatpush.msra.mxu0 %v1219
    %1242 = vmatpush.msra.mxu0 %v1218
    %1243 = vmatmul.f32.gmra.mxu0 %v1225
    %v1244 = vpop.f32.mrf.mxu0
    %v1245 = vadd.f32 %v1223, %v1244
    %1246 = vdwg.mxu0
    %v1247 = vadd.f32 %v994, %v1245
    %v1248 = vld [vmem:[#allocation5 + $0x97] sm:$0x1]
    %v1249 = vld [vmem:[#allocation5 + $0x98] sm:$0x1]
    %v1250 = vsel %vm108, %v1247, 0.0
    %1251 = vadd.xlane.f32.xlu0 %v1250
    %v1252 = vpop.xlane.xlu0 %1251
    %v1253 = vmul.f32 %v1252, %v118
    %v1254 = vsub.f32 %v1247, %v1253
    %v1255 = vmul.f32 %v1254, %v1254
    %v1256 = vsel %vm108, %v1255, 0.0
    %1257 = vadd.xlane.f32.xlu0 %v1256
    %v1258 = vpop.xlane.xlu0 %1257
    %v1259 = vmul.f32 %v1258, %v118
    %v1260 = vadd.f32 %v1259, 1e-12
    %v1261 = vrsqrt.pop %v1260
    %v1262 = vmul.f32 %v1261, %v1260
    %v1263 = vmul.f32 %v1262, %v1261
    %v1264 = vmul.f32 0.5, %v1263
    %v1265 = vsub.f32 1.5, %v1264
    %v1266 = vmul.f32 %v1261, %v1265
    %vm1267 = vweird.f32 %v1260
    %vm1268 = vweird.f32 %v1261
    %vm1269 = vmor %vm1267, %vm1268
    %v1270 = vsel %vm1269, %v1261, %v1266
    %v1271 = vmul.f32 %v1254, %v1270
    %v1272 = vperm.slane %v1248, 0
    %v1273 = vmul.f32 %v1271, %v1272
    %v1274 = vperm.slane %v1249, 0
    %v1275 = vadd.f32 %v1273, %v1274
    %v1276 = vld [vmem:[#allocation5 + $0x99] sm:$0xff]
    %v1277 = vld [vmem:[#allocation5 + $0xa1] sm:$0xff]
    %v1278 = vld [vmem:[#allocation5 + $0xa9] sm:$0xff]
    %v1279 = vld [vmem:[#allocation5 + $0xb1] sm:$0xff]
    %v1280 = vld [vmem:[#allocation5 + $0xb9] sm:$0x1]
    %v1281 = vperm.slane %v1280, 0
    %v1283 = vsel %vm108, %v1275, 0
    %1285 = vmatpush.msra.mxu0 0.0
    %1286 = vmatpush.msra.mxu0 0.0
    %1287 = vmatpush.msra.mxu0 0.0
    %1288 = vmatpush.msra.mxu0 0.0
    %1289 = vmatpush.msra.mxu0 0.0
    %1290 = vmatpush.msra.mxu0 0.0
    %1291 = vmatpush.msra.mxu0 0.0
    %1292 = vmatpush.msra.mxu0 0.0
    %1293 = vmatpush.msra.mxu0 0.0
    %1294 = vmatpush.msra.mxu0 0.0
    %1295 = vmatpush.msra.mxu0 0.0
    %1296 = vmatpush.msra.mxu0 0.0
    %1297 = vmatpush.msra.mxu0 %v1279
    %1298 = vmatpush.msra.mxu0 %v1278
    %1299 = vmatpush.msra.mxu0 %v1277
    %1300 = vmatpush.msra.mxu0 %v1276
    %1301 = vmatmul.f32.gmra.mxu0 %v1283
    %v1302 = vpop.f32.mrf.mxu0
    %v1303 = vadd.f32 %v1281, %v1302
    %1304 = vdwg.mxu0
    %v1305 = vmul.f32 %v1303, 0.5
    %v1306 = vmul.f32 %v1303, 0.044715
    %v1307 = vmul.f32 %v1306, %v1303
    %v1308 = vmul.f32 %v1307, %v1303
    %v1309 = vadd.f32 %v1303, %v1308
    %v1310 = vmul.f32 %v1309, 0.7978846
    %v1311 = vtanh.pop %v1310
    %v1312 = vadd.f32 %v1311, 1.0
    %v1313 = vmul.f32 %v1305, %v1312
    %v1314 = vld [vmem:[#allocation5 + $0xba] sm:$0xff]
    %v1315 = vld [vmem:[#allocation5 + $0xc2] sm:$0xff]
    %v1316 = vld [vmem:[#allocation5 + $0xca] sm:$0xff]
    %v1317 = vld [vmem:[#allocation5 + $0xd2] sm:$0xff]
    %v1318 = vld [vmem:[#allocation5 + $0xda] sm:$0xff]
    %v1319 = vld [vmem:[#allocation5 + $0xe2] sm:$0xff]
    %v1320 = vld [vmem:[#allocation5 + $0xea] sm:$0xff]
    %v1321 = vld [vmem:[#allocation5 + $0xf2] sm:$0xff]
    %v1322 = vld [vmem:[#allocation5 + $0xfa] sm:$0x1]
    %v1323 = vperm.slane %v1322, 0
    %v1325 = vsel %vm481, %v1313, 0
    %1327 = vmatpush.msra.mxu0 0.0
    %1328 = vmatpush.msra.mxu0 0.0
    %1329 = vmatpush.msra.mxu0 0.0
    %1330 = vmatpush.msra.mxu0 0.0
    %1331 = vmatpush.msra.mxu0 0.0
    %1332 = vmatpush.msra.mxu0 0.0
    %1333 = vmatpush.msra.mxu0 0.0
    %1334 = vmatpush.msra.mxu0 0.0
    %1335 = vmatpush.msra.mxu0 %v1321
    %1336 = vmatpush.msra.mxu0 %v1320
    %1337 = vmatpush.msra.mxu0 %v1319
    %1338 = vmatpush.msra.mxu0 %v1318
    %1339 = vmatpush.msra.mxu0 %v1317
    %1340 = vmatpush.msra.mxu0 %v1316
    %1341 = vmatpush.msra.mxu0 %v1315
    %1342 = vmatpush.msra.mxu0 %v1314
    %1343 = vmatmul.f32.gmra.mxu0 %v1325
    %v1344 = vpop.f32.mrf.mxu0
    %v1345 = vadd.f32 %v1323, %v1344
    %1346 = vdwg.mxu0
    %v1347 = vadd.f32 %v1275, %v1345
    %v1348 = vld [vmem:[#allocation5 + $0xfb] sm:$0x1]
    %v1349 = vld [vmem:[#allocation5 + $0xfc] sm:$0x1]
    %v1350 = vsel %vm108, %v1347, 0.0
    %1351 = vadd.xlane.f32.xlu0 %v1350
    %v1352 = vpop.xlane.xlu0 %1351
    %v1353 = vmul.f32 %v1352, %v118
    %v1354 = vsub.f32 %v1347, %v1353
    %v1355 = vmul.f32 %v1354, %v1354
    %v1356 = vsel %vm108, %v1355, 0.0
    %1357 = vadd.xlane.f32.xlu0 %v1356
    %v1358 = vpop.xlane.xlu0 %1357
    %v1359 = vmul.f32 %v1358, %v118
    %v1360 = vadd.f32 %v1359, 1e-12
    %v1361 = vrsqrt.pop %v1360
    %v1362 = vmul.f32 %v1361, %v1360
    %v1363 = vmul.f32 %v1362, %v1361
    %v1364 = vmul.f32 0.5, %v1363
    %v1365 = vsub.f32 1.5, %v1364
    %v1366 = vmul.f32 %v1361, %v1365
    %vm1367 = vweird.f32 %v1360
    %vm1368 = vweird.f32 %v1361
    %vm1369 = vmor %vm1367, %vm1368
    %v1370 = vsel %vm1369, %v1361, %v1366
    %v1371 = vmul.f32 %v1354, %v1370
    %v1372 = vperm.slane %v1348, 0
    %v1373 = vmul.f32 %v1371, %v1372
    %v1374 = vperm.slane %v1349, 0
    %v1375 = vadd.f32 %v1373, %v1374
    %v1376 = vld [vmem:[#allocation5 + $0xfd] sm:$0xff]
    %v1377 = vld [vmem:[#allocation5 + $0x105] sm:$0xff]
    %v1378 = vld [vmem:[#allocation5 + $0x10d] sm:$0xff]
    %v1379 = vld [vmem:[#allocation5 + $0x115] sm:$0xff]
    %v1380 = vld [vmem:[#allocation5 + $0x11d] sm:$0x1]
    %v1381 = vperm.slane %v1380, 0
    %v1383 = vsel %vm108, %v1375, 0
    %1385 = vmatpush.msra.mxu0 0.0
    %1386 = vmatpush.msra.mxu0 0.0
    %1387 = vmatpush.msra.mxu0 0.0
    %1388 = vmatpush.msra.mxu0 0.0
    %1389 = vmatpush.msra.mxu0 0.0
    %1390 = vmatpush.msra.mxu0 0.0
    %1391 = vmatpush.msra.mxu0 0.0
    %1392 = vmatpush.msra.mxu0 0.0
    %1393 = vmatpush.msra.mxu0 0.0
    %1394 = vmatpush.msra.mxu0 0.0
    %1395 = vmatpush.msra.mxu0 0.0
    %1396 = vmatpush.msra.mxu0 0.0
    %1397 = vmatpush.msra.mxu0 %v1379
    %1398 = vmatpush.msra.mxu0 %v1378
    %1399 = vmatpush.msra.mxu0 %v1377
    %1400 = vmatpush.msra.mxu0 %v1376
    %1401 = vmatmul.f32.gmra.mxu0 %v1383
    %v1402 = vpop.f32.mrf.mxu0
    %v1403 = vadd.f32 %v1381, %v1402
    %1404 = vdwg.mxu0
    %1406 = vrot.lane.b32.xlu0 %v1403, 96
    %v1407 = vpop.permute.xlu0 %1406
    %v1408 = vsel %vm238, %v1403, 0
    %v1410 = vsel %vm238, %v1407, 0
    %1412 = vmatpush.xpose.msra.mxu0 0.0
    %1413 = vmatpush.xpose.msra.mxu0 0.0
    %1414 = vmatpush.xpose.msra.mxu0 0.0
    %1415 = vmatpush.xpose.msra.mxu0 0.0
    %1416 = vmatpush.xpose.msra.mxu0 0.0
    %1417 = vmatpush.xpose.msra.mxu0 0.0
    %1418 = vmatpush.xpose.msra.mxu0 0.0
    %1419 = vmatpush.xpose.msra.mxu0 0.0
    %1420 = vmatpush.xpose.msra.mxu0 0.0
    %1421 = vmatpush.xpose.msra.mxu0 0.0
    %1422 = vmatpush.xpose.msra.mxu0 0.0
    %1423 = vmatpush.xpose.msra.mxu0 0.0
    %1424 = vmatpush.xpose.msra.mxu0 0.0
    %1425 = vmatpush.xpose.msra.mxu0 0.0
    %1426 = vmatpush.xpose.msra.mxu0 0.0
    %1427 = vmatpush.xpose.msra.mxu0 %v1410
    %1428 = vmatmul.f32.gmra.mxu0 %v1408
    %v1429 = vpop.f32.mrf.mxu0
    %v1430 = vadd.f32 0.0, %v1429
    %1431 = vdwg.mxu0
    %v1432 = vmul.f32 %v1430, 0.25
    %v1433 = vadd.f32 %v1432, %v1050
    %v1434 = vsel %vm265, %v1433, -inf
    %1435 = vmax.xlane.f32.xlu0 %v1434
    %v1436 = vpop.xlane.xlu0 %1435
    %v1437 = vsub.f32 %v1433, %v1436
    %v1438 = vmul.f32 %v1437, 1.442695
    %v1439 = vpow.pop %v1438
    %v1440 = vsel %vm265, %v1439, 0.0
    %1441 = vadd.xlane.f32.xlu0 %v1440
    %v1442 = vpop.xlane.xlu0 %1441
    %v1443 = vrcp.pop %v1442
    %v1444 = vmul.f32 %v1439, %v1443
    %1445 = vrot.lane.b32.xlu0 %v1403, 64
    %v1446 = vpop.permute.xlu0 %1445
    %v1449 = vsel %vm265, %v1444, 0
    %1451 = vmatpush.msra.mxu0 0.0
    %1452 = vmatpush.msra.mxu0 0.0
    %1453 = vmatpush.msra.mxu0 0.0
    %1454 = vmatpush.msra.mxu0 0.0
    %1455 = vmatpush.msra.mxu0 0.0
    %1456 = vmatpush.msra.mxu0 0.0
    %1457 = vmatpush.msra.mxu0 0.0
    %1458 = vmatpush.msra.mxu0 0.0
    %1459 = vmatpush.msra.mxu0 0.0
    %1460 = vmatpush.msra.mxu0 0.0
    %1461 = vmatpush.msra.mxu0 0.0
    %1462 = vmatpush.msra.mxu0 0.0
    %1463 = vmatpush.msra.mxu0 0.0
    %1464 = vmatpush.msra.mxu0 0.0
    %1465 = vmatpush.msra.mxu0 0.0
    %1466 = vmatpush.msra.mxu0 %v1446
    %1467 = vmatmul.f32.gmra.mxu0 %v1449
    %v1468 = vpop.f32.mrf.mxu0
    %v1469 = vadd.f32 0.0, %v1468
    %1470 = vdwg.mxu0
    %1471 = vrot.lane.b32.xlu0 %v1403, 112
    %v1472 = vpop.permute.xlu0 %1471
    %1473 = vrot.lane.b32.xlu0 %v1403, 80
    %v1474 = vpop.permute.xlu0 %1473
    %v1475 = vsel %vm238, %v1472, 0
    %v1477 = vsel %vm238, %v1474, 0
    %1479 = vmatpush.xpose.msra.mxu0 0.0
    %1480 = vmatpush.xpose.msra.mxu0 0.0
    %1481 = vmatpush.xpose.msra.mxu0 0.0
    %1482 = vmatpush.xpose.msra.mxu0 0.0
    %1483 = vmatpush.xpose.msra.mxu0 0.0
    %1484 = vmatpush.xpose.msra.mxu0 0.0
    %1485 = vmatpush.xpose.msra.mxu0 0.0
    %1486 = vmatpush.xpose.msra.mxu0 0.0
    %1487 = vmatpush.xpose.msra.mxu0 0.0
    %1488 = vmatpush.xpose.msra.mxu0 0.0
    %1489 = vmatpush.xpose.msra.mxu0 0.0
    %1490 = vmatpush.xpose.msra.mxu0 0.0
    %1491 = vmatpush.xpose.msra.mxu0 0.0
    %1492 = vmatpush.xpose.msra.mxu0 0.0
    %1493 = vmatpush.xpose.msra.mxu0 0.0
    %1494 = vmatpush.xpose.msra.mxu0 %v1477
    %1495 = vmatmul.f32.gmra.mxu0 %v1475
    %v1496 = vpop.f32.mrf.mxu0
    %v1497 = vadd.f32 0.0, %v1496
    %1498 = vdwg.mxu0
    %v1499 = vmul.f32 %v1497, 0.25
    %v1500 = vadd.f32 %v1499, %v1050
    %v1501 = vsel %vm265, %v1500, -inf
    %1502 = vmax.xlane.f32.xlu0 %v1501
    %v1503 = vpop.xlane.xlu0 %1502
    %v1504 = vsub.f32 %v1500, %v1503
    %v1505 = vmul.f32 %v1504, 1.442695
    %v1506 = vpow.pop %v1505
    %v1507 = vsel %vm265, %v1506, 0.0
    %1508 = vadd.xlane.f32.xlu0 %v1507
    %v1509 = vpop.xlane.xlu0 %1508
    %v1510 = vrcp.pop %v1509
    %v1511 = vmul.f32 %v1506, %v1510
    %1512 = vrot.lane.b32.xlu0 %v1403, 48
    %v1513 = vpop.permute.xlu0 %1512
    %v1516 = vsel %vm265, %v1511, 0
    %1518 = vmatpush.msra.mxu0 0.0
    %1519 = vmatpush.msra.mxu0 0.0
    %1520 = vmatpush.msra.mxu0 0.0
    %1521 = vmatpush.msra.mxu0 0.0
    %1522 = vmatpush.msra.mxu0 0.0
    %1523 = vmatpush.msra.mxu0 0.0
    %1524 = vmatpush.msra.mxu0 0.0
    %1525 = vmatpush.msra.mxu0 0.0
    %1526 = vmatpush.msra.mxu0 0.0
    %1527 = vmatpush.msra.mxu0 0.0
    %1528 = vmatpush.msra.mxu0 0.0
    %1529 = vmatpush.msra.mxu0 0.0
    %1530 = vmatpush.msra.mxu0 0.0
    %1531 = vmatpush.msra.mxu0 0.0
    %1532 = vmatpush.msra.mxu0 0.0
    %1533 = vmatpush.msra.mxu0 %v1513
    %1534 = vmatmul.f32.gmra.mxu0 %v1516
    %v1535 = vpop.f32.mrf.mxu0
    %v1536 = vadd.f32 0.0, %v1535
    %1537 = vdwg.mxu0
    %1539 = vrot.lane.b32.xlu0 %v1536, 16
    %v1540 = vpop.permute.xlu0 %1539
    %v1542 = vsel %vm238, %v1469, %v1540
    %v1543 = vld [vmem:[#allocation5 + $0x11e] sm:$0xff]
    %v1544 = vld [vmem:[#allocation5 + $0x126] sm:$0xff]
    %v1545 = vld [vmem:[#allocation5 + $0x12e] sm:$0xff]
    %v1546 = vld [vmem:[#allocation5 + $0x136] sm:$0xff]
    %v1547 = vld [vmem:[#allocation5 + $0x13e] sm:$0x1]
    %v1548 = vperm.slane %v1547, 0
    %v1550 = vsel %vm108, %v1542, 0
    %1552 = vmatpush.msra.mxu0 0.0
    %1553 = vmatpush.msra.mxu0 0.0
    %1554 = vmatpush.msra.mxu0 0.0
    %1555 = vmatpush.msra.mxu0 0.0
    %1556 = vmatpush.msra.mxu0 0.0
    %1557 = vmatpush.msra.mxu0 0.0
    %1558 = vmatpush.msra.mxu0 0.0
    %1559 = vmatpush.msra.mxu0 0.0
    %1560 = vmatpush.msra.mxu0 0.0
    %1561 = vmatpush.msra.mxu0 0.0
    %1562 = vmatpush.msra.mxu0 0.0
    %1563 = vmatpush.msra.mxu0 0.0
    %1564 = vmatpush.msra.mxu0 %v1546
    %1565 = vmatpush.msra.mxu0 %v1545
    %1566 = vmatpush.msra.mxu0 %v1544
    %1567 = vmatpush.msra.mxu0 %v1543
    %1568 = vmatmul.f32.gmra.mxu0 %v1550
    %v1569 = vpop.f32.mrf.mxu0
    %v1570 = vadd.f32 %v1548, %v1569
    %1571 = vdwg.mxu0
    %v1572 = vadd.f32 %v1375, %v1570
    %v1573 = vld [vmem:[#allocation5 + $0x13f] sm:$0x1]
    %v1574 = vld [vmem:[#allocation5 + $0x140] sm:$0x1]
    %v1575 = vsel %vm108, %v1572, 0.0
    %1576 = vadd.xlane.f32.xlu0 %v1575
    %v1577 = vpop.xlane.xlu0 %1576
    %v1578 = vmul.f32 %v1577, %v118
    %v1579 = vsub.f32 %v1572, %v1578
    %v1580 = vmul.f32 %v1579, %v1579
    %v1581 = vsel %vm108, %v1580, 0.0
    %1582 = vadd.xlane.f32.xlu0 %v1581
    %v1583 = vpop.xlane.xlu0 %1582
    %v1584 = vmul.f32 %v1583, %v118
    %v1585 = vadd.f32 %v1584, 1e-12
    %v1586 = vrsqrt.pop %v1585
    %v1587 = vmul.f32 %v1586, %v1585
    %v1588 = vmul.f32 %v1587, %v1586
    %v1589 = vmul.f32 0.5, %v1588
    %v1590 = vsub.f32 1.5, %v1589
    %v1591 = vmul.f32 %v1586, %v1590
    %vm1592 = vweird.f32 %v1585
    %vm1593 = vweird.f32 %v1586
    %vm1594 = vmor %vm1592, %vm1593
    %v1595 = vsel %vm1594, %v1586, %v1591
    %v1596 = vmul.f32 %v1579, %v1595
    %v1597 = vperm.slane %v1573, 0
    %v1598 = vmul.f32 %v1596, %v1597
    %v1599 = vperm.slane %v1574, 0
    %v1600 = vadd.f32 %v1598, %v1599
    %v1601 = vld [vmem:[#allocation5 + $0x141] sm:$0xff]
    %v1602 = vld [vmem:[#allocation5 + $0x149] sm:$0xff]
    %v1603 = vld [vmem:[#allocation5 + $0x151] sm:$0xff]
    %v1604 = vld [vmem:[#allocation5 + $0x159] sm:$0xff]
    %v1605 = vld [vmem:[#allocation5 + $0x161] sm:$0x1]
    %v1606 = vperm.slane %v1605, 0
    %v1608 = vsel %vm108, %v1600, 0
    %1610 = vmatpush.msra.mxu0 0.0
    %1611 = vmatpush.msra.mxu0 0.0
    %1612 = vmatpush.msra.mxu0 0.0
    %1613 = vmatpush.msra.mxu0 0.0
    %1614 = vmatpush.msra.mxu0 0.0
    %1615 = vmatpush.msra.mxu0 0.0
    %1616 = vmatpush.msra.mxu0 0.0
    %1617 = vmatpush.msra.mxu0 0.0
    %1618 = vmatpush.msra.mxu0 0.0
    %1619 = vmatpush.msra.mxu0 0.0
    %1620 = vmatpush.msra.mxu0 0.0
    %1621 = vmatpush.msra.mxu0 0.0
    %1622 = vmatpush.msra.mxu0 %v1604
    %1623 = vmatpush.msra.mxu0 %v1603
    %1624 = vmatpush.msra.mxu0 %v1602
    %1625 = vmatpush.msra.mxu0 %v1601
    %1626 = vmatmul.f32.gmra.mxu0 %v1608
    %v1627 = vpop.f32.mrf.mxu0
    %v1628 = vadd.f32 %v1606, %v1627
    %1629 = vdwg.mxu0
    %v1630 = vmul.f32 %v1628, 0.5
    %v1631 = vmul.f32 %v1628, 0.044715
    %v1632 = vmul.f32 %v1631, %v1628
    %v1633 = vmul.f32 %v1632, %v1628
    %v1634 = vadd.f32 %v1628, %v1633
    %v1635 = vmul.f32 %v1634, 0.7978846
    %v1636 = vtanh.pop %v1635
    %v1637 = vadd.f32 %v1636, 1.0
    %v1638 = vmul.f32 %v1630, %v1637
    %v1639 = vld [vmem:[#allocation5 + $0x162] sm:$0xff]
    %v1640 = vld [vmem:[#allocation5 + $0x16a] sm:$0xff]
    %v1641 = vld [vmem:[#allocation5 + $0x172] sm:$0xff]
    %v1642 = vld [vmem:[#allocation5 + $0x17a] sm:$0xff]
    %v1643 = vld [vmem:[#allocation5 + $0x182] sm:$0xff]
    %v1644 = vld [vmem:[#allocation5 + $0x18a] sm:$0xff]
    %v1645 = vld [vmem:[#allocation5 + $0x192] sm:$0xff]
    %v1646 = vld [vmem:[#allocation5 + $0x19a] sm:$0xff]
    %v1647 = vld [vmem:[#allocation5 + $0x1a2] sm:$0x1]
    %v1648 = vperm.slane %v1647, 0
    %v1650 = vsel %vm481, %v1638, 0
    %1652 = vmatpush.msra.mxu0 0.0
    %1653 = vmatpush.msra.mxu0 0.0
    %1654 = vmatpush.msra.mxu0 0.0
    %1655 = vmatpush.msra.mxu0 0.0
    %1656 = vmatpush.msra.mxu0 0.0
    %1657 = vmatpush.msra.mxu0 0.0
    %1658 = vmatpush.msra.mxu0 0.0
    %1659 = vmatpush.msra.mxu0 0.0
    %1660 = vmatpush.msra.mxu0 %v1646
    %1661 = vmatpush.msra.mxu0 %v1645
    %1662 = vmatpush.msra.mxu0 %v1644
    %1663 = vmatpush.msra.mxu0 %v1643
    %1664 = vmatpush.msra.mxu0 %v1642
    %1665 = vmatpush.msra.mxu0 %v1641
    %1666 = vmatpush.msra.mxu0 %v1640
    %1667 = vmatpush.msra.mxu0 %v1639
    %1668 = vmatmul.f32.gmra.mxu0 %v1650
    %v1669 = vpop.f32.mrf.mxu0
    %v1670 = vadd.f32 %v1648, %v1669
    %1671 = vdwg.mxu0
    %v1672 = vadd.f32 %v1600, %v1670
    %v1673 = vld [vmem:[#allocation5 + $0x1a3] sm:$0x1]
    %v1674 = vld [vmem:[#allocation5 + $0x1a4] sm:$0x1]
    %v1675 = vsel %vm108, %v1672, 0.0
    %1676 = vadd.xlane.f32.xlu0 %v1675
    %v1677 = vpop.xlane.xlu0 %1676
    %v1678 = vmul.f32 %v1677, %v118
    %v1679 = vsub.f32 %v1672, %v1678
    %v1680 = vmul.f32 %v1679, %v1679
    %v1681 = vsel %vm108, %v1680, 0.0
    %1682 = vadd.xlane.f32.xlu0 %v1681
    %v1683 = vpop.xlane.xlu0 %1682
    %v1684 = vmul.f32 %v1683, %v118
    %v1685 = vadd.f32 %v1684, 1e-12
    %v1686 = vrsqrt.pop %v1685
    %v1687 = vmul.f32 %v1686, %v1685
    %v1688 = vmul.f32 %v1687, %v1686
    %v1689 = vmul.f32 0.5, %v1688
    %v1690 = vsub.f32 1.5, %v1689
    %v1691 = vmul.f32 %v1686, %v1690
    %vm1692 = vweird.f32 %v1685
    %vm1693 = vweird.f32 %v1686
    %vm1694 = vmor %vm1692, %vm1693
    %v1695 = vsel %vm1694, %v1686, %v1691
    %v1696 = vmul.f32 %v1679, %v1695
    %v1697 = vperm.slane %v1673, 0
    %v1698 = vmul.f32 %v1696, %v1697
    %v1699 = vperm.slane %v1674, 0
    %v1700 = vadd.f32 %v1698, %v1699
    %v1701 = vld [vmem:[#allocation5 + $0x1a5] sm:$0xff]
    %v1702 = vld [vmem:[#allocation5 + $0x1ad] sm:$0xff]
    %v1703 = vld [vmem:[#allocation5 + $0x1b5] sm:$0xff]
    %v1704 = vld [vmem:[#allocation5 + $0x1bd] sm:$0xff]
    %v1705 = vld [vmem:[#allocation5 + $0x1c5] sm:$0x1]
    %v1707 = vsel %vm108, %v1700, 0
    %1709 = vmatpush.msra.mxu0 0.0
    %1710 = vmatpush.msra.mxu0 0.0
    %1711 = vmatpush.msra.mxu0 0.0
    %1712 = vmatpush.msra.mxu0 0.0
    %1713 = vmatpush.msra.mxu0 0.0
    %1714 = vmatpush.msra.mxu0 0.0
    %1715 = vmatpush.msra.mxu0 0.0
    %1716 = vmatpush.msra.mxu0 0.0
    %1717 = vmatpush.msra.mxu0 0.0
    %1718 = vmatpush.msra.mxu0 0.0
    %1719 = vmatpush.msra.mxu0 0.0
    %1720 = vmatpush.msra.mxu0 0.0
    %1721 = vmatpush.msra.mxu0 %v1704
    %1722 = vmatpush.msra.mxu0 %v1703
    %1723 = vmatpush.msra.mxu0 %v1702
    %1724 = vmatpush.msra.mxu0 %v1701
    %1725 = vmatmul.f32.gmra.mxu0 %v1707
    %v1726 = vpop.f32.mrf.mxu0
    %v1727 = vadd.f32 %v1705, %v1726
    %1728 = vdwg.mxu0
    %v1729 = vtanh.pop %v1727
    %v1730 = vld [vmem:[#allocation5 + $0x1c6] sm:$0xff]
    %v1731 = vld [vmem:[#allocation5 + $0x1ce] sm:$0xff]
    %v1732 = vld [vmem:[#allocation5 + $0x1d6] sm:$0xff]
    %v1733 = vld [vmem:[#allocation5 + $0x1de] sm:$0xff]
    %v1734 = vld [vmem:[#allocation5 + $0x1e6] sm:$0x1]
    %v1736 = vsel %vm108, %v1729, 0
    %1738 = vmatpush.msra.mxu0 0.0
    %1739 = vmatpush.msra.mxu0 0.0
    %1740 = vmatpush.msra.mxu0 0.0
    %1741 = vmatpush.msra.mxu0 0.0
    %1742 = vmatpush.msra.mxu0 0.0
    %1743 = vmatpush.msra.mxu0 0.0
    %1744 = vmatpush.msra.mxu0 0.0
    %1745 = vmatpush.msra.mxu0 0.0
    %1746 = vmatpush.msra.mxu0 0.0
    %1747 = vmatpush.msra.mxu0 0.0
    %1748 = vmatpush.msra.mxu0 0.0
    %1749 = vmatpush.msra.mxu0 0.0
    %1750 = vmatpush.msra.mxu0 %v1733
    %1751 = vmatpush.msra.mxu0 %v1732
    %1752 = vmatpush.msra.mxu0 %v1731
    %1753 = vmatpush.msra.mxu0 %v1730
    %1754 = vmatmul.f32.gmra.mxu0 %v1736
    %v1755 = vpop.f32.mrf.mxu0
    %v1756 = vadd.f32 %v1734, %v1755
    %1757 = vdwg.mxu0
    %1758 = vst [vmem:[#allocation8 + $0x1] sm:$0x1] %v1756
    // Predicated region
    $region10: #{_lambda_.1} parent=1 // pred_check
      _
    $region11: #{_lambda_.1} parent=1 // pred_check_branch
      %1760 = sbr.rel (0) target = $region13
    $region12: #{_lambda_.1} parent=1 // pred_region
      %1762 = vsyncadd [#allocation7], 0
      %s1764 = sshll.u32 [#allocation8], 4
      %s1765 = int_to_ptr.vmem [resolvable:$true] %s1764
      %s1766 = sshll.u32 %s3, 4
      %s1767 = int_to_ptr.hbm [resolvable:$true] %s1766
      %1769 = dma.vmem_to_hbm [thread:$0]  %s1765, 32, %s1767, [#allocation7]
    $region13: #{_lambda_.1} parent=1 // pred_fallthru
      _
    // Predicated region
    $region14: #{_lambda_.1} parent=1 // pred_check
      _
    $region15: #{_lambda_.1} parent=1 // pred_check_branch
      %1771 = sbr.rel (0) target = $region17
    $region16: #{_lambda_.1} parent=1 // pred_region
      %1773 = dma.done [#allocation7], 32
    $region17: #{_lambda_.1} parent=1 // pred_fallthru
      _
    %1774 = vsyncpa [#allocation6], 1
    %1775 = vsyncpa [#allocation7], 1

</llo_original>
